<compile_context>
chip_gen: v5e
topology: v5e:2x2
jax: 0.10.0
libtpu: 0.0.40
codegen_flags: <defaults>
</compile_context>

<pallas_src>
import functools

import jax
import jax.numpy as jnp
from jax.experimental import pallas as pl
from jax.experimental.pallas import tpu as pltpu

GP = 128   # per-gate lane padding (assumes hidden_size <= 128)
CP = 128   # fc output lane padding (assumes num_classes <= 128)


def _make_lstm_kernel(num_layers: int, hidden_size: int, batch_pad: int,
                      seq_len: int):
    H, Bp, S = hidden_size, batch_pad, seq_len

    def kernel(x_ref, w_ref, fc_ref, out_ref, seq_a, seq_b, proj_scr):
        # x_ref    : (S*Bp, GP)        time-major, feature-padded input
        # w_ref    : (L, GP+H+8, 4*GP) rows [0,GP)=W_ih^T, [GP,GP+H)=W_hh^T,
        #                              row GP+H = b_ih+b_hh (gate blocks padded)
        # fc_ref   : (GP+8, CP)        rows [0,H)=W_fc^T, row GP = b_fc
        # out_ref  : (S*Bp, CP)
        # seq_a/b  : (S*Bp, GP) VMEM ping-pong buffers for per-layer sequence out
        # proj_scr : (S*Bp, 4*GP) VMEM buffer for the batched input projection
        f32 = jnp.float32
        bufs = (seq_a, seq_b)

        for l in range(num_layers):
            src_ref = x_ref if l == 0 else bufs[(l - 1) % 2]
            dst_ref = bufs[l % 2]

            # --- batched input projection + bias, off the recurrence path ---
            wih = w_ref[l, 0:GP, :]                       # (GP, 4GP)
            bias = w_ref[l, GP + H:GP + H + 1, :]         # (1, 4GP)
            proj = jnp.dot(src_ref[...], wih, preferred_element_type=f32)
            proj_scr[...] = proj + jnp.broadcast_to(bias, (S * Bp, 4 * GP))

            # W_hh kept at its real H rows (16 vregs at H=32); see TODO for H>128.
            whh = w_ref[l, GP:GP + H, :]                  # (H, 4GP)

            h = jnp.zeros((Bp, GP), f32)
            c = jnp.zeros((Bp, GP), f32)

            # Fully unrolled time loop (S is small); only h @ W_hh + pointwise
            # gate math sits on the serial dependency chain.
            for t in range(S):
                gates = (proj_scr[pl.ds(t * Bp, Bp), :] +
                         jnp.dot(h[:, :H], whh, preferred_element_type=f32))
                # Gate blocks are 128-lane aligned -> free vreg views (i,f,g,o).
                i_g = jax.nn.sigmoid(gates[:, 0 * GP:1 * GP])
                f_g = jax.nn.sigmoid(gates[:, 1 * GP:2 * GP])
                g_g = jnp.tanh(gates[:, 2 * GP:3 * GP])
                o_g = jax.nn.sigmoid(gates[:, 3 * GP:4 * GP])
                c = f_g * c + i_g * g_g
                h = o_g * jnp.tanh(c)
                dst_ref[pl.ds(t * Bp, Bp), :] = h         # dense (8,128) store

        # --- fc head: one matmul + one lane-dense store for the whole sequence ---
        seq = bufs[(num_layers - 1) % 2][...]             # (S*Bp, GP)
        wfc = fc_ref[0:GP, :]                             # (GP, CP)
        bfc = fc_ref[GP:GP + 1, :]                        # (1, CP)
        out = jnp.dot(seq, wfc, preferred_element_type=f32)
        out_ref[...] = out + jnp.broadcast_to(bfc, (S * Bp, CP))

    return kernel


def deep_regression_lstm_forward(x, lstm_slab, fc_slab, *, num_layers,
                                 hidden_size, num_classes):
    """x: (batch, seq, input_size) float32 — same as PyTorch batch_first input."""
    B, S, I = x.shape
    H = hidden_size
    assert H <= GP and I <= GP and num_classes <= CP
    Bp = max(8, ((B + 7) // 8) * 8)                       # sublane-dense batch

    # Time-major, batch/feature zero-padded, lane-dense (S*Bp, GP) slab.
    xt = jnp.transpose(x, (1, 0, 2))                      # (S, B, I)
    xt = jnp.pad(xt, ((0, 0), (0, Bp - B), (0, GP - I)))
    x_flat = xt.reshape(S * Bp, GP)

    kernel = _make_lstm_kernel(num_layers, H, Bp, S)

    out_flat = pl.pallas_call(
        kernel,
        out_shape=jax.ShapeDtypeStruct((S * Bp, CP), jnp.float32),
        grid=(1,),                       # whole recurrence in one invocation
        in_specs=[
            pl.BlockSpec((S * Bp, GP), lambda i: (0, 0)),
            pl.BlockSpec(lstm_slab.shape, lambda i: (0, 0, 0)),
            pl.BlockSpec(fc_slab.shape, lambda i: (0, 0)),
        ],
        out_specs=pl.BlockSpec((S * Bp, CP), lambda i: (0, 0)),
        scratch_shapes=[
            pltpu.VMEM((S * Bp, GP), jnp.float32),        # seq ping
            pltpu.VMEM((S * Bp, GP), jnp.float32),        # seq pong
            pltpu.VMEM((S * Bp, 4 * GP), jnp.float32),    # batched projection
        ],
        compiler_params=pltpu.CompilerParams(
            dimension_semantics=("arbitrary",)),
    )(x_flat, lstm_slab, fc_slab)

    # Free XLA layout plumbing outside the kernel.
    out = out_flat.reshape(S, Bp, CP)[:, :B, :num_classes]
    return jnp.transpose(out, (1, 0, 2))                  # (B, S, C)


def init_raw_params(key, input_size, hidden_size, num_layers, num_classes):
    """Deterministic init mimicking PyTorch's U(-1/sqrt(H), 1/sqrt(H))."""
    H = hidden_size
    k = 1.0 / jnp.sqrt(jnp.float32(H))
    lstm = []
    for l in range(num_layers):
        in_l = input_size if l == 0 else H
        key, k1, k2, k3, k4 = jax.random.split(key, 5)
        w_ih = jax.random.uniform(k1, (4 * H, in_l), jnp.float32, -k, k)
        w_hh = jax.random.uniform(k2, (4 * H, H), jnp.float32, -k, k)
        b_ih = jax.random.uniform(k3, (4 * H,), jnp.float32, -k, k)
        b_hh = jax.random.uniform(k4, (4 * H,), jnp.float32, -k, k)
        lstm.append((w_ih, w_hh, b_ih, b_hh))
    key, k5, k6 = jax.random.split(key, 3)
    w_fc = jax.random.uniform(k5, (num_classes, H), jnp.float32, -k, k)
    b_fc = jax.random.uniform(k6, (num_classes,), jnp.float32, -k, k)
    return {"lstm": lstm, "fc": (w_fc, b_fc)}


def pack_params(raw, input_size, hidden_size, num_layers, num_classes):
    """Pack all weights into two padded slabs for the kernel (zero padding)."""
    H = hidden_size
    R = GP + H + 8                                        # sublane-aligned rows
    layers = []
    for l, (w_ih, w_hh, b_ih, b_hh) in enumerate(raw["lstm"]):
        in_l = input_size if l == 0 else H
        wihT, whhT, b = w_ih.T, w_hh.T, b_ih + b_hh       # (in_l,4H),(H,4H),(4H,)
        slab = jnp.zeros((R, 4 * GP), jnp.float32)
        for g in range(4):                                # i, f, g, o gate blocks
            slab = slab.at[:in_l, g * GP:g * GP + H].set(wihT[:, g * H:(g + 1) * H])
            slab = slab.at[GP:GP + H, g * GP:g * GP + H].set(whhT[:, g * H:(g + 1) * H])
            slab = slab.at[GP + H, g * GP:g * GP + H].set(b[g * H:(g + 1) * H])
        layers.append(slab)
    lstm_slab = jnp.stack(layers, axis=0)                 # (L, R, 4*GP)

    w_fc, b_fc = raw["fc"]                                # (C,H), (C,)
    fc_slab = jnp.zeros((GP + 8, CP), jnp.float32)
    fc_slab = fc_slab.at[:H, :num_classes].set(w_fc.T)
    fc_slab = fc_slab.at[GP, :num_classes].set(b_fc)
    return lstm_slab, fc_slab


def reference_forward(x, raw_params, *, num_layers, hidden_size):
    """Pure-JAX reference matching torch.nn.LSTM(batch_first=True) + Linear (eval)."""
    B, S, _ = x.shape
    H = hidden_size
    h = [jnp.zeros((B, H), jnp.float32) for _ in range(num_layers)]
    c = [jnp.zeros((B, H), jnp.float32) for _ in range(num_layers)]
    outs = []
    for t in range(S):
        inp = x[:, t, :]
        for l in range(num_layers):
            w_ih, w_hh, b_ih, b_hh = raw_params["lstm"][l]
            gates = inp @ w_ih.T + b_ih + h[l] @ w_hh.T + b_hh
            i_g = jax.nn.sigmoid(gates[:, 0 * H:1 * H])
            f_g = jax.nn.sigmoid(gates[:, 1 * H:2 * H])
            g_g = jnp.tanh(gates[:, 2 * H:3 * H])
            o_g = jax.nn.sigmoid(gates[:, 3 * H:4 * H])
            c[l] = f_g * c[l] + i_g * g_g
            h[l] = o_g * jnp.tanh(c[l])
            inp = h[l]
        outs.append(inp)
    lstm_out = jnp.stack(outs, axis=1)                    # (B, S, H)
    w_fc, b_fc = raw_params["fc"]
    return lstm_out @ w_fc.T + b_fc


if __name__ == "__main__":
    # Small shapes consistent with the module's forward:
    batch, seq_length = 2, 8
    input_size, hidden_size, num_layers, num_classes = 8, 32, 2, 18

    key = jax.random.PRNGKey(0)
    key, xkey = jax.random.split(key)
    x = jax.random.normal(xkey, (batch, seq_length, input_size), jnp.float32)

    raw_params = init_raw_params(key, input_size, hidden_size, num_layers,
                                 num_classes)
    lstm_slab, fc_slab = pack_params(raw_params, input_size, hidden_size,
                                     num_layers, num_classes)

    fwd = jax.jit(functools.partial(
        deep_regression_lstm_forward,
        num_layers=num_layers, hidden_size=hidden_size,
        num_classes=num_classes))

    out = jax.block_until_ready(fwd(x, lstm_slab, fc_slab))
    assert out.shape == (batch, seq_length, num_classes)

    ref = reference_forward(x, raw_params,
                            num_layers=num_layers, hidden_size=hidden_size)
    # Batched-projection / padded-matmul layout changes f32 summation order
    # slightly vs. the two-dot reference; allow a small tolerance.
    err = float(jnp.max(jnp.abs(out - ref)))
    assert jnp.allclose(out, ref, atol=1e-4, rtol=1e-4), err

    print("KERNEL_OK")
</pallas_src>

<mosaic_0001>
module attributes {stable_mosaic.version = 11 : i64} {
  func.func @kernel(%arg0: i32, %arg1: memref<64x128xf32, #tpu.memory_space<vmem>>, %arg2: memref<2x168x512xf32, #tpu.memory_space<vmem>>, %arg3: memref<136x128xf32, #tpu.memory_space<vmem>>, %arg4: memref<64x128xf32, #tpu.memory_space<vmem>>, %arg5: memref<64x128xf32, #tpu.memory_space<vmem>>, %arg6: memref<64x128xf32, #tpu.memory_space<vmem>>, %arg7: memref<64x512xf32, #tpu.memory_space<vmem>>) attributes {dimension_semantics = [#tpu.dimension_semantics<arbitrary>], iteration_bounds = array<i64: 1>, scalar_prefetch = 0 : i64, scratch_operands = 3 : i64, tpu.core_type = #tpu.core_type<tc>, window_params = [{pipeline_mode = #tpu.pipeline_mode<synchronous>, transform_indices = @transform_0, window_bounds = array<i64: 64, 128>}, {pipeline_mode = #tpu.pipeline_mode<synchronous>, transform_indices = @transform_1, window_bounds = array<i64: 2, 168, 512>}, {pipeline_mode = #tpu.pipeline_mode<synchronous>, transform_indices = @transform_2, window_bounds = array<i64: 136, 128>}, {pipeline_mode = #tpu.pipeline_mode<synchronous>, transform_indices = @transform_3, window_bounds = array<i64: 64, 128>}]} {
    %c0 = arith.constant 0 : index
    %c0_0 = arith.constant 0 : index
    %c0_1 = arith.constant 0 : index
    %0 = vector.load %arg2[%c0, %c0_0, %c0_1] : memref<2x168x512xf32, #tpu.memory_space<vmem>>, vector<1x128x512xf32>
    %1 = vector.shape_cast %0 : vector<1x128x512xf32> to vector<128x512xf32>
    %c0_2 = arith.constant 0 : index
    %c160 = arith.constant 160 : index
    %c0_3 = arith.constant 0 : index
    %2 = vector.load %arg2[%c0_2, %c160, %c0_3] : memref<2x168x512xf32, #tpu.memory_space<vmem>>, vector<1x1x512xf32>
    %3 = vector.shape_cast %2 : vector<1x1x512xf32> to vector<1x512xf32>
    %c0_4 = arith.constant 0 : index
    %c0_5 = arith.constant 0 : index
    %4 = vector.load %arg1[%c0_4, %c0_5] : memref<64x128xf32, #tpu.memory_space<vmem>>, vector<64x128xf32>
    %cst = arith.constant dense<0.000000e+00> : vector<64x512xf32>
    %5 = tpu.matmul %4, %1, %cst {dimension_numbers = #tpu.dot_dimension_numbers<[1], [0], [0], [1], [0, 0, 1, 1], [], []>} : vector<64x128xf32>, vector<128x512xf32>, vector<64x512xf32> -> vector<64x512xf32>
    %6 = vector.shape_cast %3 : vector<1x512xf32> to vector<1x512xf32>
    %7 = vector.broadcast %6 : vector<1x512xf32> to vector<64x512xf32>
    %8 = arith.addf %5, %7 : vector<64x512xf32>
    %c0_6 = arith.constant 0 : index
    %c0_7 = arith.constant 0 : index
    %9 = vector.load %arg7[%c0_6, %c0_7] : memref<64x512xf32, #tpu.memory_space<vmem>>, vector<64x512xf32>
    tpu.vector_store %arg7[%c0_6, %c0_7], %8 {strides = array<i32>} : memref<64x512xf32, #tpu.memory_space<vmem>>, vector<64x512xf32>,
    %c0_8 = arith.constant 0 : index
    %c128 = arith.constant 128 : index
    %c0_9 = arith.constant 0 : index
    %10 = vector.load %arg2[%c0_8, %c128, %c0_9] : memref<2x168x512xf32, #tpu.memory_space<vmem>>, vector<1x32x512xf32>
    %11 = vector.shape_cast %10 : vector<1x32x512xf32> to vector<32x512xf32>
    %cst_10 = arith.constant 0.000000e+00 : f32
    %12 = vector.broadcast %cst_10 : f32 to vector<8x128xf32>
    %cst_11 = arith.constant 0.000000e+00 : f32
    %13 = vector.broadcast %cst_11 : f32 to vector<8x128xf32>
    %c0_12 = arith.constant 0 : index
    %c0_13 = arith.constant 0 : index
    %14 = vector.load %arg7[%c0_12, %c0_13] : memref<64x512xf32, #tpu.memory_space<vmem>>, vector<8x512xf32>
    %15 = vector.extract_strided_slice %12 {offsets = [0, 0], sizes = [8, 32], strides = [1, 1]} : vector<8x128xf32> to vector<8x32xf32>
    %cst_14 = arith.constant dense<0.000000e+00> : vector<8x512xf32>
    %16 = tpu.matmul %15, %11, %cst_14 {dimension_numbers = #tpu.dot_dimension_numbers<[1], [0], [0], [1], [0, 0, 1, 1], [], []>} : vector<8x32xf32>, vector<32x512xf32>, vector<8x512xf32> -> vector<8x512xf32>
    %17 = arith.addf %14, %16 : vector<8x512xf32>
    %18 = vector.extract_strided_slice %17 {offsets = [0, 0], sizes = [8, 128], strides = [1, 1]} : vector<8x512xf32> to vector<8x128xf32>
    %19 = arith.negf %18 : vector<8x128xf32>
    %20 = math.exp %19 : vector<8x128xf32>
    %cst_15 = arith.constant 1.000000e+00 : f32
    %21 = vector.broadcast %cst_15 : f32 to vector<8x128xf32>
    %22 = arith.addf %21, %20 : vector<8x128xf32>
    %23 = arith.divf %21, %22 : vector<8x128xf32>
    %24 = vector.extract_strided_slice %17 {offsets = [0, 128], sizes = [8, 128], strides = [1, 1]} : vector<8x512xf32> to vector<8x128xf32>
    %25 = arith.negf %24 : vector<8x128xf32>
    %26 = math.exp %25 : vector<8x128xf32>
    %cst_16 = arith.constant 1.000000e+00 : f32
    %27 = vector.broadcast %cst_16 : f32 to vector<8x128xf32>
    %28 = arith.addf %27, %26 : vector<8x128xf32>
    %29 = arith.divf %27, %28 : vector<8x128xf32>
    %30 = vector.extract_strided_slice %17 {offsets = [0, 256], sizes = [8, 128], strides = [1, 1]} : vector<8x512xf32> to vector<8x128xf32>
    %31 = math.tanh %30 : vector<8x128xf32>
    %32 = vector.extract_strided_slice %17 {offsets = [0, 384], sizes = [8, 128], strides = [1, 1]} : vector<8x512xf32> to vector<8x128xf32>
    %33 = arith.negf %32 : vector<8x128xf32>
    %34 = math.exp %33 : vector<8x128xf32>
    %cst_17 = arith.constant 1.000000e+00 : f32
    %35 = vector.broadcast %cst_17 : f32 to vector<8x128xf32>
    %36 = arith.addf %35, %34 : vector<8x128xf32>
    %37 = arith.divf %35, %36 : vector<8x128xf32>
    %38 = arith.mulf %29, %13 : vector<8x128xf32>
    %39 = arith.mulf %23, %31 : vector<8x128xf32>
    %40 = arith.addf %38, %39 : vector<8x128xf32>
    %41 = math.tanh %40 : vector<8x128xf32>
    %42 = arith.mulf %37, %41 : vector<8x128xf32>
    %c0_18 = arith.constant 0 : index
    %c0_19 = arith.constant 0 : index
    %43 = vector.load %arg5[%c0_18, %c0_19] : memref<64x128xf32, #tpu.memory_space<vmem>>, vector<8x128xf32>
    tpu.vector_store %arg5[%c0_18, %c0_19], %42 {strides = array<i32>} : memref<64x128xf32, #tpu.memory_space<vmem>>, vector<8x128xf32>,
    %c8 = arith.constant 8 : index
    %c0_20 = arith.constant 0 : index
    %44 = vector.load %arg7[%c8, %c0_20] : memref<64x512xf32, #tpu.memory_space<vmem>>, vector<8x512xf32>
    %45 = vector.extract_strided_slice %42 {offsets = [0, 0], sizes = [8, 32], strides = [1, 1]} : vector<8x128xf32> to vector<8x32xf32>
    %cst_21 = arith.constant dense<0.000000e+00> : vector<8x512xf32>
    %46 = tpu.matmul %45, %11, %cst_21 {dimension_numbers = #tpu.dot_dimension_numbers<[1], [0], [0], [1], [0, 0, 1, 1], [], []>} : vector<8x32xf32>, vector<32x512xf32>, vector<8x512xf32> -> vector<8x512xf32>
    %47 = arith.addf %44, %46 : vector<8x512xf32>
    %48 = vector.extract_strided_slice %47 {offsets = [0, 0], sizes = [8, 128], strides = [1, 1]} : vector<8x512xf32> to vector<8x128xf32>
    %49 = arith.negf %48 : vector<8x128xf32>
    %50 = math.exp %49 : vector<8x128xf32>
    %cst_22 = arith.constant 1.000000e+00 : f32
    %51 = vector.broadcast %cst_22 : f32 to vector<8x128xf32>
    %52 = arith.addf %51, %50 : vector<8x128xf32>
    %53 = arith.divf %51, %52 : vector<8x128xf32>
    %54 = vector.extract_strided_slice %47 {offsets = [0, 128], sizes = [8, 128], strides = [1, 1]} : vector<8x512xf32> to vector<8x128xf32>
    %55 = arith.negf %54 : vector<8x128xf32>
    %56 = math.exp %55 : vector<8x128xf32>
    %cst_23 = arith.constant 1.000000e+00 : f32
    %57 = vector.broadcast %cst_23 : f32 to vector<8x128xf32>
    %58 = arith.addf %57, %56 : vector<8x128xf32>
    %59 = arith.divf %57, %58 : vector<8x128xf32>
    %60 = vector.extract_strided_slice %47 {offsets = [0, 256], sizes = [8, 128], strides = [1, 1]} : vector<8x512xf32> to vector<8x128xf32>
    %61 = math.tanh %60 : vector<8x128xf32>
    %62 = vector.extract_strided_slice %47 {offsets = [0, 384], sizes = [8, 128], strides = [1, 1]} : vector<8x512xf32> to vector<8x128xf32>
    %63 = arith.negf %62 : vector<8x128xf32>
    %64 = math.exp %63 : vector<8x128xf32>
    %cst_24 = arith.constant 1.000000e+00 : f32
    %65 = vector.broadcast %cst_24 : f32 to vector<8x128xf32>
    %66 = arith.addf %65, %64 : vector<8x128xf32>
    %67 = arith.divf %65, %66 : vector<8x128xf32>
    %68 = arith.mulf %59, %40 : vector<8x128xf32>
    %69 = arith.mulf %53, %61 : vector<8x128xf32>
    %70 = arith.addf %68, %69 : vector<8x128xf32>
    %71 = math.tanh %70 : vector<8x128xf32>
    %72 = arith.mulf %67, %71 : vector<8x128xf32>
    %c8_25 = arith.constant 8 : index
    %c0_26 = arith.constant 0 : index
    %73 = vector.load %arg5[%c8_25, %c0_26] : memref<64x128xf32, #tpu.memory_space<vmem>>, vector<8x128xf32>
    tpu.vector_store %arg5[%c8_25, %c0_26], %72 {strides = array<i32>} : memref<64x128xf32, #tpu.memory_space<vmem>>, vector<8x128xf32>,
    %c16 = arith.constant 16 : index
    %c0_27 = arith.constant 0 : index
    %74 = vector.load %arg7[%c16, %c0_27] : memref<64x512xf32, #tpu.memory_space<vmem>>, vector<8x512xf32>
    %75 = vector.extract_strided_slice %72 {offsets = [0, 0], sizes = [8, 32], strides = [1, 1]} : vector<8x128xf32> to vector<8x32xf32>
    %cst_28 = arith.constant dense<0.000000e+00> : vector<8x512xf32>
    %76 = tpu.matmul %75, %11, %cst_28 {dimension_numbers = #tpu.dot_dimension_numbers<[1], [0], [0], [1], [0, 0, 1, 1], [], []>} : vector<8x32xf32>, vector<32x512xf32>, vector<8x512xf32> -> vector<8x512xf32>
    %77 = arith.addf %74, %76 : vector<8x512xf32>
    %78 = vector.extract_strided_slice %77 {offsets = [0, 0], sizes = [8, 128], strides = [1, 1]} : vector<8x512xf32> to vector<8x128xf32>
    %79 = arith.negf %78 : vector<8x128xf32>
    %80 = math.exp %79 : vector<8x128xf32>
    %cst_29 = arith.constant 1.000000e+00 : f32
    %81 = vector.broadcast %cst_29 : f32 to vector<8x128xf32>
    %82 = arith.addf %81, %80 : vector<8x128xf32>
    %83 = arith.divf %81, %82 : vector<8x128xf32>
    %84 = vector.extract_strided_slice %77 {offsets = [0, 128], sizes = [8, 128], strides = [1, 1]} : vector<8x512xf32> to vector<8x128xf32>
    %85 = arith.negf %84 : vector<8x128xf32>
    %86 = math.exp %85 : vector<8x128xf32>
    %cst_30 = arith.constant 1.000000e+00 : f32
    %87 = vector.broadcast %cst_30 : f32 to vector<8x128xf32>
    %88 = arith.addf %87, %86 : vector<8x128xf32>
    %89 = arith.divf %87, %88 : vector<8x128xf32>
    %90 = vector.extract_strided_slice %77 {offsets = [0, 256], sizes = [8, 128], strides = [1, 1]} : vector<8x512xf32> to vector<8x128xf32>
    %91 = math.tanh %90 : vector<8x128xf32>
    %92 = vector.extract_strided_slice %77 {offsets = [0, 384], sizes = [8, 128], strides = [1, 1]} : vector<8x512xf32> to vector<8x128xf32>
    %93 = arith.negf %92 : vector<8x128xf32>
    %94 = math.exp %93 : vector<8x128xf32>
    %cst_31 = arith.constant 1.000000e+00 : f32
    %95 = vector.broadcast %cst_31 : f32 to vector<8x128xf32>
    %96 = arith.addf %95, %94 : vector<8x128xf32>
    %97 = arith.divf %95, %96 : vector<8x128xf32>
    %98 = arith.mulf %89, %70 : vector<8x128xf32>
    %99 = arith.mulf %83, %91 : vector<8x128xf32>
    %100 = arith.addf %98, %99 : vector<8x128xf32>
    %101 = math.tanh %100 : vector<8x128xf32>
    %102 = arith.mulf %97, %101 : vector<8x128xf32>
    %c16_32 = arith.constant 16 : index
    %c0_33 = arith.constant 0 : index
    %103 = vector.load %arg5[%c16_32, %c0_33] : memref<64x128xf32, #tpu.memory_space<vmem>>, vector<8x128xf32>
    tpu.vector_store %arg5[%c16_32, %c0_33], %102 {strides = array<i32>} : memref<64x128xf32, #tpu.memory_space<vmem>>, vector<8x128xf32>,
    %c24 = arith.constant 24 : index
    %c0_34 = arith.constant 0 : index
    %104 = vector.load %arg7[%c24, %c0_34] : memref<64x512xf32, #tpu.memory_space<vmem>>, vector<8x512xf32>
    %105 = vector.extract_strided_slice %102 {offsets = [0, 0], sizes = [8, 32], strides = [1, 1]} : vector<8x128xf32> to vector<8x32xf32>
    %cst_35 = arith.constant dense<0.000000e+00> : vector<8x512xf32>
    %106 = tpu.matmul %105, %11, %cst_35 {dimension_numbers = #tpu.dot_dimension_numbers<[1], [0], [0], [1], [0, 0, 1, 1], [], []>} : vector<8x32xf32>, vector<32x512xf32>, vector<8x512xf32> -> vector<8x512xf32>
    %107 = arith.addf %104, %106 : vector<8x512xf32>
    %108 = vector.extract_strided_slice %107 {offsets = [0, 0], sizes = [8, 128], strides = [1, 1]} : vector<8x512xf32> to vector<8x128xf32>
    %109 = arith.negf %108 : vector<8x128xf32>
    %110 = math.exp %109 : vector<8x128xf32>
    %cst_36 = arith.constant 1.000000e+00 : f32
    %111 = vector.broadcast %cst_36 : f32 to vector<8x128xf32>
    %112 = arith.addf %111, %110 : vector<8x128xf32>
    %113 = arith.divf %111, %112 : vector<8x128xf32>
    %114 = vector.extract_strided_slice %107 {offsets = [0, 128], sizes = [8, 128], strides = [1, 1]} : vector<8x512xf32> to vector<8x128xf32>
    %115 = arith.negf %114 : vector<8x128xf32>
    %116 = math.exp %115 : vector<8x128xf32>
    %cst_37 = arith.constant 1.000000e+00 : f32
    %117 = vector.broadcast %cst_37 : f32 to vector<8x128xf32>
    %118 = arith.addf %117, %116 : vector<8x128xf32>
    %119 = arith.divf %117, %118 : vector<8x128xf32>
    %120 = vector.extract_strided_slice %107 {offsets = [0, 256], sizes = [8, 128], strides = [1, 1]} : vector<8x512xf32> to vector<8x128xf32>
    %121 = math.tanh %120 : vector<8x128xf32>
    %122 = vector.extract_strided_slice %107 {offsets = [0, 384], sizes = [8, 128], strides = [1, 1]} : vector<8x512xf32> to vector<8x128xf32>
    %123 = arith.negf %122 : vector<8x128xf32>
    %124 = math.exp %123 : vector<8x128xf32>
    %cst_38 = arith.constant 1.000000e+00 : f32
    %125 = vector.broadcast %cst_38 : f32 to vector<8x128xf32>
    %126 = arith.addf %125, %124 : vector<8x128xf32>
    %127 = arith.divf %125, %126 : vector<8x128xf32>
    %128 = arith.mulf %119, %100 : vector<8x128xf32>
    %129 = arith.mulf %113, %121 : vector<8x128xf32>
    %130 = arith.addf %128, %129 : vector<8x128xf32>
    %131 = math.tanh %130 : vector<8x128xf32>
    %132 = arith.mulf %127, %131 : vector<8x128xf32>
    %c24_39 = arith.constant 24 : index
    %c0_40 = arith.constant 0 : index
    %133 = vector.load %arg5[%c24_39, %c0_40] : memref<64x128xf32, #tpu.memory_space<vmem>>, vector<8x128xf32>
    tpu.vector_store %arg5[%c24_39, %c0_40], %132 {strides = array<i32>} : memref<64x128xf32, #tpu.memory_space<vmem>>, vector<8x128xf32>,
    %c32 = arith.constant 32 : index
    %c0_41 = arith.constant 0 : index
    %134 = vector.load %arg7[%c32, %c0_41] : memref<64x512xf32, #tpu.memory_space<vmem>>, vector<8x512xf32>
    %135 = vector.extract_strided_slice %132 {offsets = [0, 0], sizes = [8, 32], strides = [1, 1]} : vector<8x128xf32> to vector<8x32xf32>
    %cst_42 = arith.constant dense<0.000000e+00> : vector<8x512xf32>
    %136 = tpu.matmul %135, %11, %cst_42 {dimension_numbers = #tpu.dot_dimension_numbers<[1], [0], [0], [1], [0, 0, 1, 1], [], []>} : vector<8x32xf32>, vector<32x512xf32>, vector<8x512xf32> -> vector<8x512xf32>
    %137 = arith.addf %134, %136 : vector<8x512xf32>
    %138 = vector.extract_strided_slice %137 {offsets = [0, 0], sizes = [8, 128], strides = [1, 1]} : vector<8x512xf32> to vector<8x128xf32>
    %139 = arith.negf %138 : vector<8x128xf32>
    %140 = math.exp %139 : vector<8x128xf32>
    %cst_43 = arith.constant 1.000000e+00 : f32
    %141 = vector.broadcast %cst_43 : f32 to vector<8x128xf32>
    %142 = arith.addf %141, %140 : vector<8x128xf32>
    %143 = arith.divf %141, %142 : vector<8x128xf32>
    %144 = vector.extract_strided_slice %137 {offsets = [0, 128], sizes = [8, 128], strides = [1, 1]} : vector<8x512xf32> to vector<8x128xf32>
    %145 = arith.negf %144 : vector<8x128xf32>
    %146 = math.exp %145 : vector<8x128xf32>
    %cst_44 = arith.constant 1.000000e+00 : f32
    %147 = vector.broadcast %cst_44 : f32 to vector<8x128xf32>
    %148 = arith.addf %147, %146 : vector<8x128xf32>
    %149 = arith.divf %147, %148 : vector<8x128xf32>
    %150 = vector.extract_strided_slice %137 {offsets = [0, 256], sizes = [8, 128], strides = [1, 1]} : vector<8x512xf32> to vector<8x128xf32>
    %151 = math.tanh %150 : vector<8x128xf32>
    %152 = vector.extract_strided_slice %137 {offsets = [0, 384], sizes = [8, 128], strides = [1, 1]} : vector<8x512xf32> to vector<8x128xf32>
    %153 = arith.negf %152 : vector<8x128xf32>
    %154 = math.exp %153 : vector<8x128xf32>
    %cst_45 = arith.constant 1.000000e+00 : f32
    %155 = vector.broadcast %cst_45 : f32 to vector<8x128xf32>
    %156 = arith.addf %155, %154 : vector<8x128xf32>
    %157 = arith.divf %155, %156 : vector<8x128xf32>
    %158 = arith.mulf %149, %130 : vector<8x128xf32>
    %159 = arith.mulf %143, %151 : vector<8x128xf32>
    %160 = arith.addf %158, %159 : vector<8x128xf32>
    %161 = math.tanh %160 : vector<8x128xf32>
    %162 = arith.mulf %157, %161 : vector<8x128xf32>
    %c32_46 = arith.constant 32 : index
    %c0_47 = arith.constant 0 : index
    %163 = vector.load %arg5[%c32_46, %c0_47] : memref<64x128xf32, #tpu.memory_space<vmem>>, vector<8x128xf32>
    tpu.vector_store %arg5[%c32_46, %c0_47], %162 {strides = array<i32>} : memref<64x128xf32, #tpu.memory_space<vmem>>, vector<8x128xf32>,
    %c40 = arith.constant 40 : index
    %c0_48 = arith.constant 0 : index
    %164 = vector.load %arg7[%c40, %c0_48] : memref<64x512xf32, #tpu.memory_space<vmem>>, vector<8x512xf32>
    %165 = vector.extract_strided_slice %162 {offsets = [0, 0], sizes = [8, 32], strides = [1, 1]} : vector<8x128xf32> to vector<8x32xf32>
    %cst_49 = arith.constant dense<0.000000e+00> : vector<8x512xf32>
    %166 = tpu.matmul %165, %11, %cst_49 {dimension_numbers = #tpu.dot_dimension_numbers<[1], [0], [0], [1], [0, 0, 1, 1], [], []>} : vector<8x32xf32>, vector<32x512xf32>, vector<8x512xf32> -> vector<8x512xf32>
    %167 = arith.addf %164, %166 : vector<8x512xf32>
    %168 = vector.extract_strided_slice %167 {offsets = [0, 0], sizes = [8, 128], strides = [1, 1]} : vector<8x512xf32> to vector<8x128xf32>
    %169 = arith.negf %168 : vector<8x128xf32>
    %170 = math.exp %169 : vector<8x128xf32>
    %cst_50 = arith.constant 1.000000e+00 : f32
    %171 = vector.broadcast %cst_50 : f32 to vector<8x128xf32>
    %172 = arith.addf %171, %170 : vector<8x128xf32>
    %173 = arith.divf %171, %172 : vector<8x128xf32>
    %174 = vector.extract_strided_slice %167 {offsets = [0, 128], sizes = [8, 128], strides = [1, 1]} : vector<8x512xf32> to vector<8x128xf32>
    %175 = arith.negf %174 : vector<8x128xf32>
    %176 = math.exp %175 : vector<8x128xf32>
    %cst_51 = arith.constant 1.000000e+00 : f32
    %177 = vector.broadcast %cst_51 : f32 to vector<8x128xf32>
    %178 = arith.addf %177, %176 : vector<8x128xf32>
    %179 = arith.divf %177, %178 : vector<8x128xf32>
    %180 = vector.extract_strided_slice %167 {offsets = [0, 256], sizes = [8, 128], strides = [1, 1]} : vector<8x512xf32> to vector<8x128xf32>
    %181 = math.tanh %180 : vector<8x128xf32>
    %182 = vector.extract_strided_slice %167 {offsets = [0, 384], sizes = [8, 128], strides = [1, 1]} : vector<8x512xf32> to vector<8x128xf32>
    %183 = arith.negf %182 : vector<8x128xf32>
    %184 = math.exp %183 : vector<8x128xf32>
    %cst_52 = arith.constant 1.000000e+00 : f32
    %185 = vector.broadcast %cst_52 : f32 to vector<8x128xf32>
    %186 = arith.addf %185, %184 : vector<8x128xf32>
    %187 = arith.divf %185, %186 : vector<8x128xf32>
    %188 = arith.mulf %179, %160 : vector<8x128xf32>
    %189 = arith.mulf %173, %181 : vector<8x128xf32>
    %190 = arith.addf %188, %189 : vector<8x128xf32>
    %191 = math.tanh %190 : vector<8x128xf32>
    %192 = arith.mulf %187, %191 : vector<8x128xf32>
    %c40_53 = arith.constant 40 : index
    %c0_54 = arith.constant 0 : index
    %193 = vector.load %arg5[%c40_53, %c0_54] : memref<64x128xf32, #tpu.memory_space<vmem>>, vector<8x128xf32>
    tpu.vector_store %arg5[%c40_53, %c0_54], %192 {strides = array<i32>} : memref<64x128xf32, #tpu.memory_space<vmem>>, vector<8x128xf32>,
    %c48 = arith.constant 48 : index
    %c0_55 = arith.constant 0 : index
    %194 = vector.load %arg7[%c48, %c0_55] : memref<64x512xf32, #tpu.memory_space<vmem>>, vector<8x512xf32>
    %195 = vector.extract_strided_slice %192 {offsets = [0, 0], sizes = [8, 32], strides = [1, 1]} : vector<8x128xf32> to vector<8x32xf32>
    %cst_56 = arith.constant dense<0.000000e+00> : vector<8x512xf32>
    %196 = tpu.matmul %195, %11, %cst_56 {dimension_numbers = #tpu.dot_dimension_numbers<[1], [0], [0], [1], [0, 0, 1, 1], [], []>} : vector<8x32xf32>, vector<32x512xf32>, vector<8x512xf32> -> vector<8x512xf32>
    %197 = arith.addf %194, %196 : vector<8x512xf32>
    %198 = vector.extract_strided_slice %197 {offsets = [0, 0], sizes = [8, 128], strides = [1, 1]} : vector<8x512xf32> to vector<8x128xf32>
    %199 = arith.negf %198 : vector<8x128xf32>
    %200 = math.exp %199 : vector<8x128xf32>
    %cst_57 = arith.constant 1.000000e+00 : f32
    %201 = vector.broadcast %cst_57 : f32 to vector<8x128xf32>
    %202 = arith.addf %201, %200 : vector<8x128xf32>
    %203 = arith.divf %201, %202 : vector<8x128xf32>
    %204 = vector.extract_strided_slice %197 {offsets = [0, 128], sizes = [8, 128], strides = [1, 1]} : vector<8x512xf32> to vector<8x128xf32>
    %205 = arith.negf %204 : vector<8x128xf32>
    %206 = math.exp %205 : vector<8x128xf32>
    %cst_58 = arith.constant 1.000000e+00 : f32
    %207 = vector.broadcast %cst_58 : f32 to vector<8x128xf32>
    %208 = arith.addf %207, %206 : vector<8x128xf32>
    %209 = arith.divf %207, %208 : vector<8x128xf32>
    %210 = vector.extract_strided_slice %197 {offsets = [0, 256], sizes = [8, 128], strides = [1, 1]} : vector<8x512xf32> to vector<8x128xf32>
    %211 = math.tanh %210 : vector<8x128xf32>
    %212 = vector.extract_strided_slice %197 {offsets = [0, 384], sizes = [8, 128], strides = [1, 1]} : vector<8x512xf32> to vector<8x128xf32>
    %213 = arith.negf %212 : vector<8x128xf32>
    %214 = math.exp %213 : vector<8x128xf32>
    %cst_59 = arith.constant 1.000000e+00 : f32
    %215 = vector.broadcast %cst_59 : f32 to vector<8x128xf32>
    %216 = arith.addf %215, %214 : vector<8x128xf32>
    %217 = arith.divf %215, %216 : vector<8x128xf32>
    %218 = arith.mulf %209, %190 : vector<8x128xf32>
    %219 = arith.mulf %203, %211 : vector<8x128xf32>
    %220 = arith.addf %218, %219 : vector<8x128xf32>
    %221 = math.tanh %220 : vector<8x128xf32>
    %222 = arith.mulf %217, %221 : vector<8x128xf32>
    %c48_60 = arith.constant 48 : index
    %c0_61 = arith.constant 0 : index
    %223 = vector.load %arg5[%c48_60, %c0_61] : memref<64x128xf32, #tpu.memory_space<vmem>>, vector<8x128xf32>
    tpu.vector_store %arg5[%c48_60, %c0_61], %222 {strides = array<i32>} : memref<64x128xf32, #tpu.memory_space<vmem>>, vector<8x128xf32>,
    %c56 = arith.constant 56 : index
    %c0_62 = arith.constant 0 : index
    %224 = vector.load %arg7[%c56, %c0_62] : memref<64x512xf32, #tpu.memory_space<vmem>>, vector<8x512xf32>
    %225 = vector.extract_strided_slice %222 {offsets = [0, 0], sizes = [8, 32], strides = [1, 1]} : vector<8x128xf32> to vector<8x32xf32>
    %cst_63 = arith.constant dense<0.000000e+00> : vector<8x512xf32>
    %226 = tpu.matmul %225, %11, %cst_63 {dimension_numbers = #tpu.dot_dimension_numbers<[1], [0], [0], [1], [0, 0, 1, 1], [], []>} : vector<8x32xf32>, vector<32x512xf32>, vector<8x512xf32> -> vector<8x512xf32>
    %227 = arith.addf %224, %226 : vector<8x512xf32>
    %228 = vector.extract_strided_slice %227 {offsets = [0, 0], sizes = [8, 128], strides = [1, 1]} : vector<8x512xf32> to vector<8x128xf32>
    %229 = arith.negf %228 : vector<8x128xf32>
    %230 = math.exp %229 : vector<8x128xf32>
    %cst_64 = arith.constant 1.000000e+00 : f32
    %231 = vector.broadcast %cst_64 : f32 to vector<8x128xf32>
    %232 = arith.addf %231, %230 : vector<8x128xf32>
    %233 = arith.divf %231, %232 : vector<8x128xf32>
    %234 = vector.extract_strided_slice %227 {offsets = [0, 128], sizes = [8, 128], strides = [1, 1]} : vector<8x512xf32> to vector<8x128xf32>
    %235 = arith.negf %234 : vector<8x128xf32>
    %236 = math.exp %235 : vector<8x128xf32>
    %cst_65 = arith.constant 1.000000e+00 : f32
    %237 = vector.broadcast %cst_65 : f32 to vector<8x128xf32>
    %238 = arith.addf %237, %236 : vector<8x128xf32>
    %239 = arith.divf %237, %238 : vector<8x128xf32>
    %240 = vector.extract_strided_slice %227 {offsets = [0, 256], sizes = [8, 128], strides = [1, 1]} : vector<8x512xf32> to vector<8x128xf32>
    %241 = math.tanh %240 : vector<8x128xf32>
    %242 = vector.extract_strided_slice %227 {offsets = [0, 384], sizes = [8, 128], strides = [1, 1]} : vector<8x512xf32> to vector<8x128xf32>
    %243 = arith.negf %242 : vector<8x128xf32>
    %244 = math.exp %243 : vector<8x128xf32>
    %cst_66 = arith.constant 1.000000e+00 : f32
    %245 = vector.broadcast %cst_66 : f32 to vector<8x128xf32>
    %246 = arith.addf %245, %244 : vector<8x128xf32>
    %247 = arith.divf %245, %246 : vector<8x128xf32>
    %248 = arith.mulf %239, %220 : vector<8x128xf32>
    %249 = arith.mulf %233, %241 : vector<8x128xf32>
    %250 = arith.addf %248, %249 : vector<8x128xf32>
    %251 = math.tanh %250 : vector<8x128xf32>
    %252 = arith.mulf %247, %251 : vector<8x128xf32>
    %c56_67 = arith.constant 56 : index
    %c0_68 = arith.constant 0 : index
    %253 = vector.load %arg5[%c56_67, %c0_68] : memref<64x128xf32, #tpu.memory_space<vmem>>, vector<8x128xf32>
    tpu.vector_store %arg5[%c56_67, %c0_68], %252 {strides = array<i32>} : memref<64x128xf32, #tpu.memory_space<vmem>>, vector<8x128xf32>,
    %c1 = arith.constant 1 : index
    %c0_69 = arith.constant 0 : index
    %c0_70 = arith.constant 0 : index
    %254 = vector.load %arg2[%c1, %c0_69, %c0_70] : memref<2x168x512xf32, #tpu.memory_space<vmem>>, vector<1x128x512xf32>
    %255 = vector.shape_cast %254 : vector<1x128x512xf32> to vector<128x512xf32>
    %c1_71 = arith.constant 1 : index
    %c160_72 = arith.constant 160 : index
    %c0_73 = arith.constant 0 : index
    %256 = vector.load %arg2[%c1_71, %c160_72, %c0_73] : memref<2x168x512xf32, #tpu.memory_space<vmem>>, vector<1x1x512xf32>
    %257 = vector.shape_cast %256 : vector<1x1x512xf32> to vector<1x512xf32>
    %c0_74 = arith.constant 0 : index
    %c0_75 = arith.constant 0 : index
    %258 = vector.load %arg5[%c0_74, %c0_75] : memref<64x128xf32, #tpu.memory_space<vmem>>, vector<64x128xf32>
    %cst_76 = arith.constant dense<0.000000e+00> : vector<64x512xf32>
    %259 = tpu.matmul %258, %255, %cst_76 {dimension_numbers = #tpu.dot_dimension_numbers<[1], [0], [0], [1], [0, 0, 1, 1], [], []>} : vector<64x128xf32>, vector<128x512xf32>, vector<64x512xf32> -> vector<64x512xf32>
    %260 = vector.shape_cast %257 : vector<1x512xf32> to vector<1x512xf32>
    %261 = vector.broadcast %260 : vector<1x512xf32> to vector<64x512xf32>
    %262 = arith.addf %259, %261 : vector<64x512xf32>
    %c0_77 = arith.constant 0 : index
    %c0_78 = arith.constant 0 : index
    %263 = vector.load %arg7[%c0_77, %c0_78] : memref<64x512xf32, #tpu.memory_space<vmem>>, vector<64x512xf32>
    tpu.vector_store %arg7[%c0_77, %c0_78], %262 {strides = array<i32>} : memref<64x512xf32, #tpu.memory_space<vmem>>, vector<64x512xf32>,
    %c1_79 = arith.constant 1 : index
    %c128_80 = arith.constant 128 : index
    %c0_81 = arith.constant 0 : index
    %264 = vector.load %arg2[%c1_79, %c128_80, %c0_81] : memref<2x168x512xf32, #tpu.memory_space<vmem>>, vector<1x32x512xf32>
    %265 = vector.shape_cast %264 : vector<1x32x512xf32> to vector<32x512xf32>
    %cst_82 = arith.constant 0.000000e+00 : f32
    %266 = vector.broadcast %cst_82 : f32 to vector<8x128xf32>
    %cst_83 = arith.constant 0.000000e+00 : f32
    %267 = vector.broadcast %cst_83 : f32 to vector<8x128xf32>
    %c0_84 = arith.constant 0 : index
    %c0_85 = arith.constant 0 : index
    %268 = vector.load %arg7[%c0_84, %c0_85] : memref<64x512xf32, #tpu.memory_space<vmem>>, vector<8x512xf32>
    %269 = vector.extract_strided_slice %266 {offsets = [0, 0], sizes = [8, 32], strides = [1, 1]} : vector<8x128xf32> to vector<8x32xf32>
    %cst_86 = arith.constant dense<0.000000e+00> : vector<8x512xf32>
    %270 = tpu.matmul %269, %265, %cst_86 {dimension_numbers = #tpu.dot_dimension_numbers<[1], [0], [0], [1], [0, 0, 1, 1], [], []>} : vector<8x32xf32>, vector<32x512xf32>, vector<8x512xf32> -> vector<8x512xf32>
    %271 = arith.addf %268, %270 : vector<8x512xf32>
    %272 = vector.extract_strided_slice %271 {offsets = [0, 0], sizes = [8, 128], strides = [1, 1]} : vector<8x512xf32> to vector<8x128xf32>
    %273 = arith.negf %272 : vector<8x128xf32>
    %274 = math.exp %273 : vector<8x128xf32>
    %cst_87 = arith.constant 1.000000e+00 : f32
    %275 = vector.broadcast %cst_87 : f32 to vector<8x128xf32>
    %276 = arith.addf %275, %274 : vector<8x128xf32>
    %277 = arith.divf %275, %276 : vector<8x128xf32>
    %278 = vector.extract_strided_slice %271 {offsets = [0, 128], sizes = [8, 128], strides = [1, 1]} : vector<8x512xf32> to vector<8x128xf32>
    %279 = arith.negf %278 : vector<8x128xf32>
    %280 = math.exp %279 : vector<8x128xf32>
    %cst_88 = arith.constant 1.000000e+00 : f32
    %281 = vector.broadcast %cst_88 : f32 to vector<8x128xf32>
    %282 = arith.addf %281, %280 : vector<8x128xf32>
    %283 = arith.divf %281, %282 : vector<8x128xf32>
    %284 = vector.extract_strided_slice %271 {offsets = [0, 256], sizes = [8, 128], strides = [1, 1]} : vector<8x512xf32> to vector<8x128xf32>
    %285 = math.tanh %284 : vector<8x128xf32>
    %286 = vector.extract_strided_slice %271 {offsets = [0, 384], sizes = [8, 128], strides = [1, 1]} : vector<8x512xf32> to vector<8x128xf32>
    %287 = arith.negf %286 : vector<8x128xf32>
    %288 = math.exp %287 : vector<8x128xf32>
    %cst_89 = arith.constant 1.000000e+00 : f32
    %289 = vector.broadcast %cst_89 : f32 to vector<8x128xf32>
    %290 = arith.addf %289, %288 : vector<8x128xf32>
    %291 = arith.divf %289, %290 : vector<8x128xf32>
    %292 = arith.mulf %283, %267 : vector<8x128xf32>
    %293 = arith.mulf %277, %285 : vector<8x128xf32>
    %294 = arith.addf %292, %293 : vector<8x128xf32>
    %295 = math.tanh %294 : vector<8x128xf32>
    %296 = arith.mulf %291, %295 : vector<8x128xf32>
    %c0_90 = arith.constant 0 : index
    %c0_91 = arith.constant 0 : index
    %297 = vector.load %arg6[%c0_90, %c0_91] : memref<64x128xf32, #tpu.memory_space<vmem>>, vector<8x128xf32>
    tpu.vector_store %arg6[%c0_90, %c0_91], %296 {strides = array<i32>} : memref<64x128xf32, #tpu.memory_space<vmem>>, vector<8x128xf32>,
    %c8_92 = arith.constant 8 : index
    %c0_93 = arith.constant 0 : index
    %298 = vector.load %arg7[%c8_92, %c0_93] : memref<64x512xf32, #tpu.memory_space<vmem>>, vector<8x512xf32>
    %299 = vector.extract_strided_slice %296 {offsets = [0, 0], sizes = [8, 32], strides = [1, 1]} : vector<8x128xf32> to vector<8x32xf32>
    %cst_94 = arith.constant dense<0.000000e+00> : vector<8x512xf32>
    %300 = tpu.matmul %299, %265, %cst_94 {dimension_numbers = #tpu.dot_dimension_numbers<[1], [0], [0], [1], [0, 0, 1, 1], [], []>} : vector<8x32xf32>, vector<32x512xf32>, vector<8x512xf32> -> vector<8x512xf32>
    %301 = arith.addf %298, %300 : vector<8x512xf32>
    %302 = vector.extract_strided_slice %301 {offsets = [0, 0], sizes = [8, 128], strides = [1, 1]} : vector<8x512xf32> to vector<8x128xf32>
    %303 = arith.negf %302 : vector<8x128xf32>
    %304 = math.exp %303 : vector<8x128xf32>
    %cst_95 = arith.constant 1.000000e+00 : f32
    %305 = vector.broadcast %cst_95 : f32 to vector<8x128xf32>
    %306 = arith.addf %305, %304 : vector<8x128xf32>
    %307 = arith.divf %305, %306 : vector<8x128xf32>
    %308 = vector.extract_strided_slice %301 {offsets = [0, 128], sizes = [8, 128], strides = [1, 1]} : vector<8x512xf32> to vector<8x128xf32>
    %309 = arith.negf %308 : vector<8x128xf32>
    %310 = math.exp %309 : vector<8x128xf32>
    %cst_96 = arith.constant 1.000000e+00 : f32
    %311 = vector.broadcast %cst_96 : f32 to vector<8x128xf32>
    %312 = arith.addf %311, %310 : vector<8x128xf32>
    %313 = arith.divf %311, %312 : vector<8x128xf32>
    %314 = vector.extract_strided_slice %301 {offsets = [0, 256], sizes = [8, 128], strides = [1, 1]} : vector<8x512xf32> to vector<8x128xf32>
    %315 = math.tanh %314 : vector<8x128xf32>
    %316 = vector.extract_strided_slice %301 {offsets = [0, 384], sizes = [8, 128], strides = [1, 1]} : vector<8x512xf32> to vector<8x128xf32>
    %317 = arith.negf %316 : vector<8x128xf32>
    %318 = math.exp %317 : vector<8x128xf32>
    %cst_97 = arith.constant 1.000000e+00 : f32
    %319 = vector.broadcast %cst_97 : f32 to vector<8x128xf32>
    %320 = arith.addf %319, %318 : vector<8x128xf32>
    %321 = arith.divf %319, %320 : vector<8x128xf32>
    %322 = arith.mulf %313, %294 : vector<8x128xf32>
    %323 = arith.mulf %307, %315 : vector<8x128xf32>
    %324 = arith.addf %322, %323 : vector<8x128xf32>
    %325 = math.tanh %324 : vector<8x128xf32>
    %326 = arith.mulf %321, %325 : vector<8x128xf32>
    %c8_98 = arith.constant 8 : index
    %c0_99 = arith.constant 0 : index
    %327 = vector.load %arg6[%c8_98, %c0_99] : memref<64x128xf32, #tpu.memory_space<vmem>>, vector<8x128xf32>
    tpu.vector_store %arg6[%c8_98, %c0_99], %326 {strides = array<i32>} : memref<64x128xf32, #tpu.memory_space<vmem>>, vector<8x128xf32>,
    %c16_100 = arith.constant 16 : index
    %c0_101 = arith.constant 0 : index
    %328 = vector.load %arg7[%c16_100, %c0_101] : memref<64x512xf32, #tpu.memory_space<vmem>>, vector<8x512xf32>
    %329 = vector.extract_strided_slice %326 {offsets = [0, 0], sizes = [8, 32], strides = [1, 1]} : vector<8x128xf32> to vector<8x32xf32>
    %cst_102 = arith.constant dense<0.000000e+00> : vector<8x512xf32>
    %330 = tpu.matmul %329, %265, %cst_102 {dimension_numbers = #tpu.dot_dimension_numbers<[1], [0], [0], [1], [0, 0, 1, 1], [], []>} : vector<8x32xf32>, vector<32x512xf32>, vector<8x512xf32> -> vector<8x512xf32>
    %331 = arith.addf %328, %330 : vector<8x512xf32>
    %332 = vector.extract_strided_slice %331 {offsets = [0, 0], sizes = [8, 128], strides = [1, 1]} : vector<8x512xf32> to vector<8x128xf32>
    %333 = arith.negf %332 : vector<8x128xf32>
    %334 = math.exp %333 : vector<8x128xf32>
    %cst_103 = arith.constant 1.000000e+00 : f32
    %335 = vector.broadcast %cst_103 : f32 to vector<8x128xf32>
    %336 = arith.addf %335, %334 : vector<8x128xf32>
    %337 = arith.divf %335, %336 : vector<8x128xf32>
    %338 = vector.extract_strided_slice %331 {offsets = [0, 128], sizes = [8, 128], strides = [1, 1]} : vector<8x512xf32> to vector<8x128xf32>
    %339 = arith.negf %338 : vector<8x128xf32>
    %340 = math.exp %339 : vector<8x128xf32>
    %cst_104 = arith.constant 1.000000e+00 : f32
    %341 = vector.broadcast %cst_104 : f32 to vector<8x128xf32>
    %342 = arith.addf %341, %340 : vector<8x128xf32>
    %343 = arith.divf %341, %342 : vector<8x128xf32>
    %344 = vector.extract_strided_slice %331 {offsets = [0, 256], sizes = [8, 128], strides = [1, 1]} : vector<8x512xf32> to vector<8x128xf32>
    %345 = math.tanh %344 : vector<8x128xf32>
    %346 = vector.extract_strided_slice %331 {offsets = [0, 384], sizes = [8, 128], strides = [1, 1]} : vector<8x512xf32> to vector<8x128xf32>
    %347 = arith.negf %346 : vector<8x128xf32>
    %348 = math.exp %347 : vector<8x128xf32>
    %cst_105 = arith.constant 1.000000e+00 : f32
    %349 = vector.broadcast %cst_105 : f32 to vector<8x128xf32>
    %350 = arith.addf %349, %348 : vector<8x128xf32>
    %351 = arith.divf %349, %350 : vector<8x128xf32>
    %352 = arith.mulf %343, %324 : vector<8x128xf32>
    %353 = arith.mulf %337, %345 : vector<8x128xf32>
    %354 = arith.addf %352, %353 : vector<8x128xf32>
    %355 = math.tanh %354 : vector<8x128xf32>
    %356 = arith.mulf %351, %355 : vector<8x128xf32>
    %c16_106 = arith.constant 16 : index
    %c0_107 = arith.constant 0 : index
    %357 = vector.load %arg6[%c16_106, %c0_107] : memref<64x128xf32, #tpu.memory_space<vmem>>, vector<8x128xf32>
    tpu.vector_store %arg6[%c16_106, %c0_107], %356 {strides = array<i32>} : memref<64x128xf32, #tpu.memory_space<vmem>>, vector<8x128xf32>,
    %c24_108 = arith.constant 24 : index
    %c0_109 = arith.constant 0 : index
    %358 = vector.load %arg7[%c24_108, %c0_109] : memref<64x512xf32, #tpu.memory_space<vmem>>, vector<8x512xf32>
    %359 = vector.extract_strided_slice %356 {offsets = [0, 0], sizes = [8, 32], strides = [1, 1]} : vector<8x128xf32> to vector<8x32xf32>
    %cst_110 = arith.constant dense<0.000000e+00> : vector<8x512xf32>
    %360 = tpu.matmul %359, %265, %cst_110 {dimension_numbers = #tpu.dot_dimension_numbers<[1], [0], [0], [1], [0, 0, 1, 1], [], []>} : vector<8x32xf32>, vector<32x512xf32>, vector<8x512xf32> -> vector<8x512xf32>
    %361 = arith.addf %358, %360 : vector<8x512xf32>
    %362 = vector.extract_strided_slice %361 {offsets = [0, 0], sizes = [8, 128], strides = [1, 1]} : vector<8x512xf32> to vector<8x128xf32>
    %363 = arith.negf %362 : vector<8x128xf32>
    %364 = math.exp %363 : vector<8x128xf32>
    %cst_111 = arith.constant 1.000000e+00 : f32
    %365 = vector.broadcast %cst_111 : f32 to vector<8x128xf32>
    %366 = arith.addf %365, %364 : vector<8x128xf32>
    %367 = arith.divf %365, %366 : vector<8x128xf32>
    %368 = vector.extract_strided_slice %361 {offsets = [0, 128], sizes = [8, 128], strides = [1, 1]} : vector<8x512xf32> to vector<8x128xf32>
    %369 = arith.negf %368 : vector<8x128xf32>
    %370 = math.exp %369 : vector<8x128xf32>
    %cst_112 = arith.constant 1.000000e+00 : f32
    %371 = vector.broadcast %cst_112 : f32 to vector<8x128xf32>
    %372 = arith.addf %371, %370 : vector<8x128xf32>
    %373 = arith.divf %371, %372 : vector<8x128xf32>
    %374 = vector.extract_strided_slice %361 {offsets = [0, 256], sizes = [8, 128], strides = [1, 1]} : vector<8x512xf32> to vector<8x128xf32>
    %375 = math.tanh %374 : vector<8x128xf32>
    %376 = vector.extract_strided_slice %361 {offsets = [0, 384], sizes = [8, 128], strides = [1, 1]} : vector<8x512xf32> to vector<8x128xf32>
    %377 = arith.negf %376 : vector<8x128xf32>
    %378 = math.exp %377 : vector<8x128xf32>
    %cst_113 = arith.constant 1.000000e+00 : f32
    %379 = vector.broadcast %cst_113 : f32 to vector<8x128xf32>
    %380 = arith.addf %379, %378 : vector<8x128xf32>
    %381 = arith.divf %379, %380 : vector<8x128xf32>
    %382 = arith.mulf %373, %354 : vector<8x128xf32>
    %383 = arith.mulf %367, %375 : vector<8x128xf32>
    %384 = arith.addf %382, %383 : vector<8x128xf32>
    %385 = math.tanh %384 : vector<8x128xf32>
    %386 = arith.mulf %381, %385 : vector<8x128xf32>
    %c24_114 = arith.constant 24 : index
    %c0_115 = arith.constant 0 : index
    %387 = vector.load %arg6[%c24_114, %c0_115] : memref<64x128xf32, #tpu.memory_space<vmem>>, vector<8x128xf32>
    tpu.vector_store %arg6[%c24_114, %c0_115], %386 {strides = array<i32>} : memref<64x128xf32, #tpu.memory_space<vmem>>, vector<8x128xf32>,
    %c32_116 = arith.constant 32 : index
    %c0_117 = arith.constant 0 : index
    %388 = vector.load %arg7[%c32_116, %c0_117] : memref<64x512xf32, #tpu.memory_space<vmem>>, vector<8x512xf32>
    %389 = vector.extract_strided_slice %386 {offsets = [0, 0], sizes = [8, 32], strides = [1, 1]} : vector<8x128xf32> to vector<8x32xf32>
    %cst_118 = arith.constant dense<0.000000e+00> : vector<8x512xf32>
    %390 = tpu.matmul %389, %265, %cst_118 {dimension_numbers = #tpu.dot_dimension_numbers<[1], [0], [0], [1], [0, 0, 1, 1], [], []>} : vector<8x32xf32>, vector<32x512xf32>, vector<8x512xf32> -> vector<8x512xf32>
    %391 = arith.addf %388, %390 : vector<8x512xf32>
    %392 = vector.extract_strided_slice %391 {offsets = [0, 0], sizes = [8, 128], strides = [1, 1]} : vector<8x512xf32> to vector<8x128xf32>
    %393 = arith.negf %392 : vector<8x128xf32>
    %394 = math.exp %393 : vector<8x128xf32>
    %cst_119 = arith.constant 1.000000e+00 : f32
    %395 = vector.broadcast %cst_119 : f32 to vector<8x128xf32>
    %396 = arith.addf %395, %394 : vector<8x128xf32>
    %397 = arith.divf %395, %396 : vector<8x128xf32>
    %398 = vector.extract_strided_slice %391 {offsets = [0, 128], sizes = [8, 128], strides = [1, 1]} : vector<8x512xf32> to vector<8x128xf32>
    %399 = arith.negf %398 : vector<8x128xf32>
    %400 = math.exp %399 : vector<8x128xf32>
    %cst_120 = arith.constant 1.000000e+00 : f32
    %401 = vector.broadcast %cst_120 : f32 to vector<8x128xf32>
    %402 = arith.addf %401, %400 : vector<8x128xf32>
    %403 = arith.divf %401, %402 : vector<8x128xf32>
    %404 = vector.extract_strided_slice %391 {offsets = [0, 256], sizes = [8, 128], strides = [1, 1]} : vector<8x512xf32> to vector<8x128xf32>
    %405 = math.tanh %404 : vector<8x128xf32>
    %406 = vector.extract_strided_slice %391 {offsets = [0, 384], sizes = [8, 128], strides = [1, 1]} : vector<8x512xf32> to vector<8x128xf32>
    %407 = arith.negf %406 : vector<8x128xf32>
    %408 = math.exp %407 : vector<8x128xf32>
    %cst_121 = arith.constant 1.000000e+00 : f32
    %409 = vector.broadcast %cst_121 : f32 to vector<8x128xf32>
    %410 = arith.addf %409, %408 : vector<8x128xf32>
    %411 = arith.divf %409, %410 : vector<8x128xf32>
    %412 = arith.mulf %403, %384 : vector<8x128xf32>
    %413 = arith.mulf %397, %405 : vector<8x128xf32>
    %414 = arith.addf %412, %413 : vector<8x128xf32>
    %415 = math.tanh %414 : vector<8x128xf32>
    %416 = arith.mulf %411, %415 : vector<8x128xf32>
    %c32_122 = arith.constant 32 : index
    %c0_123 = arith.constant 0 : index
    %417 = vector.load %arg6[%c32_122, %c0_123] : memref<64x128xf32, #tpu.memory_space<vmem>>, vector<8x128xf32>
    tpu.vector_store %arg6[%c32_122, %c0_123], %416 {strides = array<i32>} : memref<64x128xf32, #tpu.memory_space<vmem>>, vector<8x128xf32>,
    %c40_124 = arith.constant 40 : index
    %c0_125 = arith.constant 0 : index
    %418 = vector.load %arg7[%c40_124, %c0_125] : memref<64x512xf32, #tpu.memory_space<vmem>>, vector<8x512xf32>
    %419 = vector.extract_strided_slice %416 {offsets = [0, 0], sizes = [8, 32], strides = [1, 1]} : vector<8x128xf32> to vector<8x32xf32>
    %cst_126 = arith.constant dense<0.000000e+00> : vector<8x512xf32>
    %420 = tpu.matmul %419, %265, %cst_126 {dimension_numbers = #tpu.dot_dimension_numbers<[1], [0], [0], [1], [0, 0, 1, 1], [], []>} : vector<8x32xf32>, vector<32x512xf32>, vector<8x512xf32> -> vector<8x512xf32>
    %421 = arith.addf %418, %420 : vector<8x512xf32>
    %422 = vector.extract_strided_slice %421 {offsets = [0, 0], sizes = [8, 128], strides = [1, 1]} : vector<8x512xf32> to vector<8x128xf32>
    %423 = arith.negf %422 : vector<8x128xf32>
    %424 = math.exp %423 : vector<8x128xf32>
    %cst_127 = arith.constant 1.000000e+00 : f32
    %425 = vector.broadcast %cst_127 : f32 to vector<8x128xf32>
    %426 = arith.addf %425, %424 : vector<8x128xf32>
    %427 = arith.divf %425, %426 : vector<8x128xf32>
    %428 = vector.extract_strided_slice %421 {offsets = [0, 128], sizes = [8, 128], strides = [1, 1]} : vector<8x512xf32> to vector<8x128xf32>
    %429 = arith.negf %428 : vector<8x128xf32>
    %430 = math.exp %429 : vector<8x128xf32>
    %cst_128 = arith.constant 1.000000e+00 : f32
    %431 = vector.broadcast %cst_128 : f32 to vector<8x128xf32>
    %432 = arith.addf %431, %430 : vector<8x128xf32>
    %433 = arith.divf %431, %432 : vector<8x128xf32>
    %434 = vector.extract_strided_slice %421 {offsets = [0, 256], sizes = [8, 128], strides = [1, 1]} : vector<8x512xf32> to vector<8x128xf32>
    %435 = math.tanh %434 : vector<8x128xf32>
    %436 = vector.extract_strided_slice %421 {offsets = [0, 384], sizes = [8, 128], strides = [1, 1]} : vector<8x512xf32> to vector<8x128xf32>
    %437 = arith.negf %436 : vector<8x128xf32>
    %438 = math.exp %437 : vector<8x128xf32>
    %cst_129 = arith.constant 1.000000e+00 : f32
    %439 = vector.broadcast %cst_129 : f32 to vector<8x128xf32>
    %440 = arith.addf %439, %438 : vector<8x128xf32>
    %441 = arith.divf %439, %440 : vector<8x128xf32>
    %442 = arith.mulf %433, %414 : vector<8x128xf32>
    %443 = arith.mulf %427, %435 : vector<8x128xf32>
    %444 = arith.addf %442, %443 : vector<8x128xf32>
    %445 = math.tanh %444 : vector<8x128xf32>
    %446 = arith.mulf %441, %445 : vector<8x128xf32>
    %c40_130 = arith.constant 40 : index
    %c0_131 = arith.constant 0 : index
    %447 = vector.load %arg6[%c40_130, %c0_131] : memref<64x128xf32, #tpu.memory_space<vmem>>, vector<8x128xf32>
    tpu.vector_store %arg6[%c40_130, %c0_131], %446 {strides = array<i32>} : memref<64x128xf32, #tpu.memory_space<vmem>>, vector<8x128xf32>,
    %c48_132 = arith.constant 48 : index
    %c0_133 = arith.constant 0 : index
    %448 = vector.load %arg7[%c48_132, %c0_133] : memref<64x512xf32, #tpu.memory_space<vmem>>, vector<8x512xf32>
    %449 = vector.extract_strided_slice %446 {offsets = [0, 0], sizes = [8, 32], strides = [1, 1]} : vector<8x128xf32> to vector<8x32xf32>
    %cst_134 = arith.constant dense<0.000000e+00> : vector<8x512xf32>
    %450 = tpu.matmul %449, %265, %cst_134 {dimension_numbers = #tpu.dot_dimension_numbers<[1], [0], [0], [1], [0, 0, 1, 1], [], []>} : vector<8x32xf32>, vector<32x512xf32>, vector<8x512xf32> -> vector<8x512xf32>
    %451 = arith.addf %448, %450 : vector<8x512xf32>
    %452 = vector.extract_strided_slice %451 {offsets = [0, 0], sizes = [8, 128], strides = [1, 1]} : vector<8x512xf32> to vector<8x128xf32>
    %453 = arith.negf %452 : vector<8x128xf32>
    %454 = math.exp %453 : vector<8x128xf32>
    %cst_135 = arith.constant 1.000000e+00 : f32
    %455 = vector.broadcast %cst_135 : f32 to vector<8x128xf32>
    %456 = arith.addf %455, %454 : vector<8x128xf32>
    %457 = arith.divf %455, %456 : vector<8x128xf32>
    %458 = vector.extract_strided_slice %451 {offsets = [0, 128], sizes = [8, 128], strides = [1, 1]} : vector<8x512xf32> to vector<8x128xf32>
    %459 = arith.negf %458 : vector<8x128xf32>
    %460 = math.exp %459 : vector<8x128xf32>
    %cst_136 = arith.constant 1.000000e+00 : f32
    %461 = vector.broadcast %cst_136 : f32 to vector<8x128xf32>
    %462 = arith.addf %461, %460 : vector<8x128xf32>
    %463 = arith.divf %461, %462 : vector<8x128xf32>
    %464 = vector.extract_strided_slice %451 {offsets = [0, 256], sizes = [8, 128], strides = [1, 1]} : vector<8x512xf32> to vector<8x128xf32>
    %465 = math.tanh %464 : vector<8x128xf32>
    %466 = vector.extract_strided_slice %451 {offsets = [0, 384], sizes = [8, 128], strides = [1, 1]} : vector<8x512xf32> to vector<8x128xf32>
    %467 = arith.negf %466 : vector<8x128xf32>
    %468 = math.exp %467 : vector<8x128xf32>
    %cst_137 = arith.constant 1.000000e+00 : f32
    %469 = vector.broadcast %cst_137 : f32 to vector<8x128xf32>
    %470 = arith.addf %469, %468 : vector<8x128xf32>
    %471 = arith.divf %469, %470 : vector<8x128xf32>
    %472 = arith.mulf %463, %444 : vector<8x128xf32>
    %473 = arith.mulf %457, %465 : vector<8x128xf32>
    %474 = arith.addf %472, %473 : vector<8x128xf32>
    %475 = math.tanh %474 : vector<8x128xf32>
    %476 = arith.mulf %471, %475 : vector<8x128xf32>
    %c48_138 = arith.constant 48 : index
    %c0_139 = arith.constant 0 : index
    %477 = vector.load %arg6[%c48_138, %c0_139] : memref<64x128xf32, #tpu.memory_space<vmem>>, vector<8x128xf32>
    tpu.vector_store %arg6[%c48_138, %c0_139], %476 {strides = array<i32>} : memref<64x128xf32, #tpu.memory_space<vmem>>, vector<8x128xf32>,
    %c56_140 = arith.constant 56 : index
    %c0_141 = arith.constant 0 : index
    %478 = vector.load %arg7[%c56_140, %c0_141] : memref<64x512xf32, #tpu.memory_space<vmem>>, vector<8x512xf32>
    %479 = vector.extract_strided_slice %476 {offsets = [0, 0], sizes = [8, 32], strides = [1, 1]} : vector<8x128xf32> to vector<8x32xf32>
    %cst_142 = arith.constant dense<0.000000e+00> : vector<8x512xf32>
    %480 = tpu.matmul %479, %265, %cst_142 {dimension_numbers = #tpu.dot_dimension_numbers<[1], [0], [0], [1], [0, 0, 1, 1], [], []>} : vector<8x32xf32>, vector<32x512xf32>, vector<8x512xf32> -> vector<8x512xf32>
    %481 = arith.addf %478, %480 : vector<8x512xf32>
    %482 = vector.extract_strided_slice %481 {offsets = [0, 0], sizes = [8, 128], strides = [1, 1]} : vector<8x512xf32> to vector<8x128xf32>
    %483 = arith.negf %482 : vector<8x128xf32>
    %484 = math.exp %483 : vector<8x128xf32>
    %cst_143 = arith.constant 1.000000e+00 : f32
    %485 = vector.broadcast %cst_143 : f32 to vector<8x128xf32>
    %486 = arith.addf %485, %484 : vector<8x128xf32>
    %487 = arith.divf %485, %486 : vector<8x128xf32>
    %488 = vector.extract_strided_slice %481 {offsets = [0, 128], sizes = [8, 128], strides = [1, 1]} : vector<8x512xf32> to vector<8x128xf32>
    %489 = arith.negf %488 : vector<8x128xf32>
    %490 = math.exp %489 : vector<8x128xf32>
    %cst_144 = arith.constant 1.000000e+00 : f32
    %491 = vector.broadcast %cst_144 : f32 to vector<8x128xf32>
    %492 = arith.addf %491, %490 : vector<8x128xf32>
    %493 = arith.divf %491, %492 : vector<8x128xf32>
    %494 = vector.extract_strided_slice %481 {offsets = [0, 256], sizes = [8, 128], strides = [1, 1]} : vector<8x512xf32> to vector<8x128xf32>
    %495 = math.tanh %494 : vector<8x128xf32>
    %496 = vector.extract_strided_slice %481 {offsets = [0, 384], sizes = [8, 128], strides = [1, 1]} : vector<8x512xf32> to vector<8x128xf32>
    %497 = arith.negf %496 : vector<8x128xf32>
    %498 = math.exp %497 : vector<8x128xf32>
    %cst_145 = arith.constant 1.000000e+00 : f32
    %499 = vector.broadcast %cst_145 : f32 to vector<8x128xf32>
    %500 = arith.addf %499, %498 : vector<8x128xf32>
    %501 = arith.divf %499, %500 : vector<8x128xf32>
    %502 = arith.mulf %493, %474 : vector<8x128xf32>
    %503 = arith.mulf %487, %495 : vector<8x128xf32>
    %504 = arith.addf %502, %503 : vector<8x128xf32>
    %505 = math.tanh %504 : vector<8x128xf32>
    %506 = arith.mulf %501, %505 : vector<8x128xf32>
    %c56_146 = arith.constant 56 : index
    %c0_147 = arith.constant 0 : index
    %507 = vector.load %arg6[%c56_146, %c0_147] : memref<64x128xf32, #tpu.memory_space<vmem>>, vector<8x128xf32>
    tpu.vector_store %arg6[%c56_146, %c0_147], %506 {strides = array<i32>} : memref<64x128xf32, #tpu.memory_space<vmem>>, vector<8x128xf32>,
    %c0_148 = arith.constant 0 : index
    %c0_149 = arith.constant 0 : index
    %508 = vector.load %arg6[%c0_148, %c0_149] : memref<64x128xf32, #tpu.memory_space<vmem>>, vector<64x128xf32>
    %c0_150 = arith.constant 0 : index
    %c0_151 = arith.constant 0 : index
    %509 = vector.load %arg3[%c0_150, %c0_151] : memref<136x128xf32, #tpu.memory_space<vmem>>, vector<128x128xf32>
    %c128_152 = arith.constant 128 : index
    %c0_153 = arith.constant 0 : index
    %510 = vector.load %arg3[%c128_152, %c0_153] : memref<136x128xf32, #tpu.memory_space<vmem>>, vector<1x128xf32>
    %cst_154 = arith.constant dense<0.000000e+00> : vector<64x128xf32>
    %511 = tpu.matmul %508, %509, %cst_154 {dimension_numbers = #tpu.dot_dimension_numbers<[1], [0], [0], [1], [0, 0, 1, 1], [], []>} : vector<64x128xf32>, vector<128x128xf32>, vector<64x128xf32> -> vector<64x128xf32>
    %512 = vector.shape_cast %510 : vector<1x128xf32> to vector<1x128xf32>
    %513 = vector.broadcast %512 : vector<1x128xf32> to vector<64x128xf32>
    %514 = arith.addf %511, %513 : vector<64x128xf32>
    %c0_155 = arith.constant 0 : index
    %c0_156 = arith.constant 0 : index
    %515 = vector.load %arg4[%c0_155, %c0_156] : memref<64x128xf32, #tpu.memory_space<vmem>>, vector<64x128xf32>
    tpu.vector_store %arg4[%c0_155, %c0_156], %514 {strides = array<i32>} : memref<64x128xf32, #tpu.memory_space<vmem>>, vector<64x128xf32>,
    return
  }
  func.func @transform_0(%arg0: i32) -> (i32, i32) {
    %c0_i32 = arith.constant 0 : i32
    %c0_i32_0 = arith.constant 0 : i32
    %c0_i32_1 = arith.constant 0 : i32
    return %c0_i32, %c0_i32_0 : i32, i32
  }
  func.func @transform_1(%arg0: i32) -> (i32, i32, i32) {
    %c0_i32 = arith.constant 0 : i32
    %c0_i32_0 = arith.constant 0 : i32
    %c0_i32_1 = arith.constant 0 : i32
    %c0_i32_2 = arith.constant 0 : i32
    return %c0_i32, %c0_i32_0, %c0_i32_1 : i32, i32, i32
  }
  func.func @transform_2(%arg0: i32) -> (i32, i32) {
    %c0_i32 = arith.constant 0 : i32
    %c0_i32_0 = arith.constant 0 : i32
    %c0_i32_1 = arith.constant 0 : i32
    return %c0_i32, %c0_i32_0 : i32, i32
  }
  func.func @transform_3(%arg0: i32) -> (i32, i32) {
    %c0_i32 = arith.constant 0 : i32
    %c0_i32_0 = arith.constant 0 : i32
    %c0_i32_1 = arith.constant 0 : i32
    return %c0_i32, %c0_i32_0 : i32, i32
  }
}

</mosaic_0001>

<llo_original>
// kernel: deep_regression_lstm_forward.1
$region0: #{deep_regression_lstm_forward.1}
  #allocation0 [shape = 'u32[]', space=smem, size = 0x4, offset = 0x4, fixed_abs, tag = 'smem constant byte address 0x4 - core index']
  #allocation1 [shape = 'u32[72,128]{1,0:T(1,128)}', space=vmem, size = 0x9000, scoped, tag = 'internal scratch']
  #allocation2 [shape = 'f32[64,128]{1,0:T(8,128)}', space=vmem, size = 0x8000, scoped, tag = 'scratch operand']
  #allocation3 [shape = 'f32[64,128]{1,0:T(8,128)}', space=vmem, size = 0x8000, scoped, tag = 'scratch operand']
  #allocation4 [shape = 'f32[64,512]{1,0:T(8,128)}', space=vmem, size = 0x20000, scoped, tag = 'scratch operand']
  %s0 = inlined_call_operand.vmem [shape: f32[64,128], index: 0, kind: input, shape index: {}]
  %s1 = inlined_call_operand.hbm [shape: f32[2,168,512], index: 1, kind: input, shape index: {}]
  %s2 = inlined_call_operand.hbm [shape: f32[136,128], index: 2, kind: input, shape index: {}]
  %s3 = inlined_call_operand.vmem [shape: f32[64,128], index: 3, kind: output, shape index: {}]
  %s4 = sld [smem:[#allocation0]]
  $region30: #{deep_regression_lstm_forward.1} parent=0
    _
  %s6 = ssub.s32 1, %s4
  %s7 = scalar_select 0, %s6, %s4
  $region1: #{deep_regression_lstm_forward.1} parent=0
    #allocation5 [shape = 'u8[688128]{0}', space=vmem, size = 0xa8000, scoped, tag = 'input window, operand 1, single buffered']
    #allocation6 [shape = 's32[1]{0}', space=sflag, size = 0x4, scoped, tag = 'scoped memory for deep_regression_lstm_forward.1']
    #allocation7 [shape = 'u8[69632]{0}', space=vmem, size = 0x11000, scoped, tag = 'input window, operand 2, single buffered']
    #allocation8 [shape = 's32[1]{0}', space=sflag, size = 0x4, scoped, tag = 'scoped memory for deep_regression_lstm_forward.1']
    %8 = vsyncpa [#allocation6], 0
    %9 = vsyncpa [#allocation8], 0
    // Predicated region
    $region2: #{deep_regression_lstm_forward.1} parent=1 // pred_check
      _
    $region3: #{deep_regression_lstm_forward.1} parent=1 // pred_check_branch
      %11 = sbr.rel (0) target = $region5
    $region4: #{deep_regression_lstm_forward.1} parent=1 // pred_region
      _
    $region5: #{deep_regression_lstm_forward.1} parent=1 // pred_fallthru
      _
    // Predicated region
    $region6: #{deep_regression_lstm_forward.1} parent=1 // pred_check
      _
    $region7: #{deep_regression_lstm_forward.1} parent=1 // pred_check_branch
      %13 = sbr.rel (0) target = $region9
    $region8: #{deep_regression_lstm_forward.1} parent=1 // pred_region
      %15 = vsyncadd [#allocation6], 0
      %s16 = sshll.u32 %s1, 4
      %s17 = int_to_ptr.hbm [resolvable:$true] %s16
      %s18 = sshll.u32 [#allocation5], 4
      %s19 = int_to_ptr.vmem [resolvable:$true] %s18
      %24 = dma.hbm_to_vmem [thread:$0]  %s17, 21504, %s19, [#allocation6], 512, 512, 32
    $region9: #{deep_regression_lstm_forward.1} parent=1 // pred_fallthru
      _
    // Predicated region
    $region10: #{deep_regression_lstm_forward.1} parent=1 // pred_check
      _
    $region11: #{deep_regression_lstm_forward.1} parent=1 // pred_check_branch
      %26 = sbr.rel (0) target = $region13
    $region12: #{deep_regression_lstm_forward.1} parent=1 // pred_region
      %28 = vsyncadd [#allocation8], 0
      %s29 = sshll.u32 %s2, 4
      %s30 = int_to_ptr.hbm [resolvable:$true] %s29
      %s31 = sshll.u32 [#allocation7], 4
      %s32 = int_to_ptr.vmem [resolvable:$true] %s31
      %37 = dma.hbm_to_vmem [thread:$0]  %s30, 2176, %s32, [#allocation8], 128, 128, 8
    $region13: #{deep_regression_lstm_forward.1} parent=1 // pred_fallthru
      _
    // Predicated region
    $region14: #{deep_regression_lstm_forward.1} parent=1 // pred_check
      _
    $region15: #{deep_regression_lstm_forward.1} parent=1 // pred_check_branch
      %39 = sbr.rel (0) target = $region17
    $region16: #{deep_regression_lstm_forward.1} parent=1 // pred_region
      %41 = dma.done [#allocation6], 21504
    $region17: #{deep_regression_lstm_forward.1} parent=1 // pred_fallthru
      _
    // Predicated region
    $region18: #{deep_regression_lstm_forward.1} parent=1 // pred_check
      _
    $region19: #{deep_regression_lstm_forward.1} parent=1 // pred_check_branch
      %43 = sbr.rel (0) target = $region21
    $region20: #{deep_regression_lstm_forward.1} parent=1 // pred_region
      %45 = dma.done [#allocation8], 2176
    $region21: #{deep_regression_lstm_forward.1} parent=1 // pred_fallthru
      _
    %v46 = vld [vmem:[#allocation5] sm:$0xff]
    %v47 = vld [vmem:[#allocation5 + $0x8] sm:$0xff]
    %v48 = vld [vmem:[#allocation5 + $0x10] sm:$0xff]
    %v49 = vld [vmem:[#allocation5 + $0x18] sm:$0xff]
    %v50 = vld [vmem:[#allocation5 + $0x20] sm:$0xff]
    %v51 = vld [vmem:[#allocation5 + $0x28] sm:$0xff]
    %v52 = vld [vmem:[#allocation5 + $0x30] sm:$0xff]
    %v53 = vld [vmem:[#allocation5 + $0x38] sm:$0xff]
    %v54 = vld [vmem:[#allocation5 + $0x40] sm:$0xff]
    %v55 = vld [vmem:[#allocation5 + $0x48] sm:$0xff]
    %v56 = vld [vmem:[#allocation5 + $0x50] sm:$0xff]
    %v57 = vld [vmem:[#allocation5 + $0x58] sm:$0xff]
    %v58 = vld [vmem:[#allocation5 + $0x60] sm:$0xff]
    %v59 = vld [vmem:[#allocation5 + $0x68] sm:$0xff]
    %v60 = vld [vmem:[#allocation5 + $0x70] sm:$0xff]
    %v61 = vld [vmem:[#allocation5 + $0x78] sm:$0xff]
    %v62 = vld [vmem:[#allocation5 + $0x80] sm:$0xff]
    %v63 = vld [vmem:[#allocation5 + $0x88] sm:$0xff]
    %v64 = vld [vmem:[#allocation5 + $0x90] sm:$0xff]
    %v65 = vld [vmem:[#allocation5 + $0x98] sm:$0xff]
    %v66 = vld [vmem:[#allocation5 + $0xa0] sm:$0xff]
    %v67 = vld [vmem:[#allocation5 + $0xa8] sm:$0xff]
    %v68 = vld [vmem:[#allocation5 + $0xb0] sm:$0xff]
    %v69 = vld [vmem:[#allocation5 + $0xb8] sm:$0xff]
    %v70 = vld [vmem:[#allocation5 + $0xc0] sm:$0xff]
    %v71 = vld [vmem:[#allocation5 + $0xc8] sm:$0xff]
    %v72 = vld [vmem:[#allocation5 + $0xd0] sm:$0xff]
    %v73 = vld [vmem:[#allocation5 + $0xd8] sm:$0xff]
    %v74 = vld [vmem:[#allocation5 + $0xe0] sm:$0xff]
    %v75 = vld [vmem:[#allocation5 + $0xe8] sm:$0xff]
    %v76 = vld [vmem:[#allocation5 + $0xf0] sm:$0xff]
    %v77 = vld [vmem:[#allocation5 + $0xf8] sm:$0xff]
    %v78 = vld [vmem:[#allocation5 + $0x100] sm:$0xff]
    %v79 = vld [vmem:[#allocation5 + $0x108] sm:$0xff]
    %v80 = vld [vmem:[#allocation5 + $0x110] sm:$0xff]
    %v81 = vld [vmem:[#allocation5 + $0x118] sm:$0xff]
    %v82 = vld [vmem:[#allocation5 + $0x120] sm:$0xff]
    %v83 = vld [vmem:[#allocation5 + $0x128] sm:$0xff]
    %v84 = vld [vmem:[#allocation5 + $0x130] sm:$0xff]
    %v85 = vld [vmem:[#allocation5 + $0x138] sm:$0xff]
    %v86 = vld [vmem:[#allocation5 + $0x140] sm:$0xff]
    %v87 = vld [vmem:[#allocation5 + $0x148] sm:$0xff]
    %v88 = vld [vmem:[#allocation5 + $0x150] sm:$0xff]
    %v89 = vld [vmem:[#allocation5 + $0x158] sm:$0xff]
    %v90 = vld [vmem:[#allocation5 + $0x160] sm:$0xff]
    %v91 = vld [vmem:[#allocation5 + $0x168] sm:$0xff]
    %v92 = vld [vmem:[#allocation5 + $0x170] sm:$0xff]
    %v93 = vld [vmem:[#allocation5 + $0x178] sm:$0xff]
    %v94 = vld [vmem:[#allocation5 + $0x180] sm:$0xff]
    %v95 = vld [vmem:[#allocation5 + $0x188] sm:$0xff]
    %v96 = vld [vmem:[#allocation5 + $0x190] sm:$0xff]
    %v97 = vld [vmem:[#allocation5 + $0x198] sm:$0xff]
    %v98 = vld [vmem:[#allocation5 + $0x1a0] sm:$0xff]
    %v99 = vld [vmem:[#allocation5 + $0x1a8] sm:$0xff]
    %v100 = vld [vmem:[#allocation5 + $0x1b0] sm:$0xff]
    %v101 = vld [vmem:[#allocation5 + $0x1b8] sm:$0xff]
    %v102 = vld [vmem:[#allocation5 + $0x1c0] sm:$0xff]
    %v103 = vld [vmem:[#allocation5 + $0x1c8] sm:$0xff]
    %v104 = vld [vmem:[#allocation5 + $0x1d0] sm:$0xff]
    %v105 = vld [vmem:[#allocation5 + $0x1d8] sm:$0xff]
    %v106 = vld [vmem:[#allocation5 + $0x1e0] sm:$0xff]
    %v107 = vld [vmem:[#allocation5 + $0x1e8] sm:$0xff]
    %v108 = vld [vmem:[#allocation5 + $0x1f0] sm:$0xff]
    %v109 = vld [vmem:[#allocation5 + $0x1f8] sm:$0xff]
    %s110 = scalar_lea.vmem [#allocation5], 640
    %v111 = vld [vmem:[%s110] ss:$8 sm:$0xf]
    %v112 = vld [vmem:[%s0] sm:$0xff]
    %v113 = vld [vmem:[%s0 + $0x8] sm:$0xff]
    %v114 = vld [vmem:[%s0 + $0x10] sm:$0xff]
    %v115 = vld [vmem:[%s0 + $0x18] sm:$0xff]
    %v116 = vld [vmem:[%s0 + $0x20] sm:$0xff]
    %v117 = vld [vmem:[%s0 + $0x28] sm:$0xff]
    %v118 = vld [vmem:[%s0 + $0x30] sm:$0xff]
    %v119 = vld [vmem:[%s0 + $0x38] sm:$0xff]
    %v121 = vperm.slane %v111, 0
    %v122 = vperm.slane %v111, 1
    %v123 = vperm.slane %v111, 2
    %v124 = vperm.slane %v111, 3
    %129 = vmatpush.msra.mxu0 %v106
    %130 = vmatpush.msra.mxu0 %v102
    %131 = vmatpush.msra.mxu0 %v98
    %132 = vmatpush.msra.mxu0 %v94
    %133 = vmatpush.msra.mxu0 %v90
    %134 = vmatpush.msra.mxu0 %v86
    %135 = vmatpush.msra.mxu0 %v82
    %136 = vmatpush.msra.mxu0 %v78
    %137 = vmatpush.msra.mxu0 %v74
    %138 = vmatpush.msra.mxu0 %v70
    %139 = vmatpush.msra.mxu0 %v66
    %140 = vmatpush.msra.mxu0 %v62
    %141 = vmatpush.msra.mxu0 %v58
    %142 = vmatpush.msra.mxu0 %v54
    %143 = vmatpush.msra.mxu0 %v50
    %144 = vmatpush.msra.mxu0 %v46
    %145 = vmatmul.f32.gmra.mxu0 %v112
    %v146 = vpop.f32.mrf.mxu0
    %v147 = vadd.f32 %v121, %v146
    %148 = vmatmul.f32.gmra.mxu0 %v113
    %v149 = vpop.f32.mrf.mxu0
    %v150 = vadd.f32 %v121, %v149
    %151 = vmatmul.f32.gmra.mxu0 %v114
    %v152 = vpop.f32.mrf.mxu0
    %v153 = vadd.f32 %v121, %v152
    %154 = vmatmul.f32.gmra.mxu0 %v115
    %v155 = vpop.f32.mrf.mxu0
    %v156 = vadd.f32 %v121, %v155
    %157 = vmatmul.f32.gmra.mxu0 %v116
    %v158 = vpop.f32.mrf.mxu0
    %v159 = vadd.f32 %v121, %v158
    %160 = vmatmul.f32.gmra.mxu0 %v117
    %v161 = vpop.f32.mrf.mxu0
    %v162 = vadd.f32 %v121, %v161
    %163 = vmatmul.f32.gmra.mxu0 %v118
    %v164 = vpop.f32.mrf.mxu0
    %v165 = vadd.f32 %v121, %v164
    %166 = vmatmul.f32.gmra.mxu0 %v119
    %v167 = vpop.f32.mrf.mxu0
    %v168 = vadd.f32 %v121, %v167
    %169 = vdwg.mxu0
    %170 = vmatpush.msra.mxu0 %v107
    %171 = vmatpush.msra.mxu0 %v103
    %172 = vmatpush.msra.mxu0 %v99
    %173 = vmatpush.msra.mxu0 %v95
    %174 = vmatpush.msra.mxu0 %v91
    %175 = vmatpush.msra.mxu0 %v87
    %176 = vmatpush.msra.mxu0 %v83
    %177 = vmatpush.msra.mxu0 %v79
    %178 = vmatpush.msra.mxu0 %v75
    %179 = vmatpush.msra.mxu0 %v71
    %180 = vmatpush.msra.mxu0 %v67
    %181 = vmatpush.msra.mxu0 %v63
    %182 = vmatpush.msra.mxu0 %v59
    %183 = vmatpush.msra.mxu0 %v55
    %184 = vmatpush.msra.mxu0 %v51
    %185 = vmatpush.msra.mxu0 %v47
    %186 = vmatmul.f32.gmra.mxu0 %v112
    %v187 = vpop.f32.mrf.mxu0
    %v188 = vadd.f32 %v122, %v187
    %189 = vmatmul.f32.gmra.mxu0 %v113
    %v190 = vpop.f32.mrf.mxu0
    %v191 = vadd.f32 %v122, %v190
    %192 = vmatmul.f32.gmra.mxu0 %v114
    %v193 = vpop.f32.mrf.mxu0
    %v194 = vadd.f32 %v122, %v193
    %195 = vmatmul.f32.gmra.mxu0 %v115
    %v196 = vpop.f32.mrf.mxu0
    %v197 = vadd.f32 %v122, %v196
    %198 = vmatmul.f32.gmra.mxu0 %v116
    %v199 = vpop.f32.mrf.mxu0
    %v200 = vadd.f32 %v122, %v199
    %201 = vmatmul.f32.gmra.mxu0 %v117
    %v202 = vpop.f32.mrf.mxu0
    %v203 = vadd.f32 %v122, %v202
    %204 = vmatmul.f32.gmra.mxu0 %v118
    %v205 = vpop.f32.mrf.mxu0
    %v206 = vadd.f32 %v122, %v205
    %207 = vmatmul.f32.gmra.mxu0 %v119
    %v208 = vpop.f32.mrf.mxu0
    %v209 = vadd.f32 %v122, %v208
    %210 = vdwg.mxu0
    %211 = vmatpush.msra.mxu0 %v108
    %212 = vmatpush.msra.mxu0 %v104
    %213 = vmatpush.msra.mxu0 %v100
    %214 = vmatpush.msra.mxu0 %v96
    %215 = vmatpush.msra.mxu0 %v92
    %216 = vmatpush.msra.mxu0 %v88
    %217 = vmatpush.msra.mxu0 %v84
    %218 = vmatpush.msra.mxu0 %v80
    %219 = vmatpush.msra.mxu0 %v76
    %220 = vmatpush.msra.mxu0 %v72
    %221 = vmatpush.msra.mxu0 %v68
    %222 = vmatpush.msra.mxu0 %v64
    %223 = vmatpush.msra.mxu0 %v60
    %224 = vmatpush.msra.mxu0 %v56
    %225 = vmatpush.msra.mxu0 %v52
    %226 = vmatpush.msra.mxu0 %v48
    %227 = vmatmul.f32.gmra.mxu0 %v112
    %v228 = vpop.f32.mrf.mxu0
    %v229 = vadd.f32 %v123, %v228
    %230 = vmatmul.f32.gmra.mxu0 %v113
    %v231 = vpop.f32.mrf.mxu0
    %v232 = vadd.f32 %v123, %v231
    %233 = vmatmul.f32.gmra.mxu0 %v114
    %v234 = vpop.f32.mrf.mxu0
    %v235 = vadd.f32 %v123, %v234
    %236 = vmatmul.f32.gmra.mxu0 %v115
    %v237 = vpop.f32.mrf.mxu0
    %v238 = vadd.f32 %v123, %v237
    %239 = vmatmul.f32.gmra.mxu0 %v116
    %v240 = vpop.f32.mrf.mxu0
    %v241 = vadd.f32 %v123, %v240
    %242 = vmatmul.f32.gmra.mxu0 %v117
    %v243 = vpop.f32.mrf.mxu0
    %v244 = vadd.f32 %v123, %v243
    %245 = vmatmul.f32.gmra.mxu0 %v118
    %v246 = vpop.f32.mrf.mxu0
    %v247 = vadd.f32 %v123, %v246
    %248 = vmatmul.f32.gmra.mxu0 %v119
    %v249 = vpop.f32.mrf.mxu0
    %v250 = vadd.f32 %v123, %v249
    %251 = vdwg.mxu0
    %252 = vmatpush.msra.mxu0 %v109
    %253 = vmatpush.msra.mxu0 %v105
    %254 = vmatpush.msra.mxu0 %v101
    %255 = vmatpush.msra.mxu0 %v97
    %256 = vmatpush.msra.mxu0 %v93
    %257 = vmatpush.msra.mxu0 %v89
    %258 = vmatpush.msra.mxu0 %v85
    %259 = vmatpush.msra.mxu0 %v81
    %260 = vmatpush.msra.mxu0 %v77
    %261 = vmatpush.msra.mxu0 %v73
    %262 = vmatpush.msra.mxu0 %v69
    %263 = vmatpush.msra.mxu0 %v65
    %264 = vmatpush.msra.mxu0 %v61
    %265 = vmatpush.msra.mxu0 %v57
    %266 = vmatpush.msra.mxu0 %v53
    %267 = vmatpush.msra.mxu0 %v49
    %268 = vmatmul.f32.gmra.mxu0 %v112
    %v269 = vpop.f32.mrf.mxu0
    %v270 = vadd.f32 %v124, %v269
    %271 = vmatmul.f32.gmra.mxu0 %v113
    %v272 = vpop.f32.mrf.mxu0
    %v273 = vadd.f32 %v124, %v272
    %274 = vmatmul.f32.gmra.mxu0 %v114
    %v275 = vpop.f32.mrf.mxu0
    %v276 = vadd.f32 %v124, %v275
    %277 = vmatmul.f32.gmra.mxu0 %v115
    %v278 = vpop.f32.mrf.mxu0
    %v279 = vadd.f32 %v124, %v278
    %280 = vmatmul.f32.gmra.mxu0 %v116
    %v281 = vpop.f32.mrf.mxu0
    %v282 = vadd.f32 %v124, %v281
    %283 = vmatmul.f32.gmra.mxu0 %v117
    %v284 = vpop.f32.mrf.mxu0
    %v285 = vadd.f32 %v124, %v284
    %286 = vmatmul.f32.gmra.mxu0 %v118
    %v287 = vpop.f32.mrf.mxu0
    %v288 = vadd.f32 %v124, %v287
    %289 = vmatmul.f32.gmra.mxu0 %v119
    %v290 = vpop.f32.mrf.mxu0
    %v291 = vadd.f32 %v124, %v290
    %292 = vdwg.mxu0
    %293 = vst [vmem:[#allocation4] sm:$0xff] %v147
    %294 = vst [vmem:[#allocation4 + $0x8] sm:$0xff] %v188
    %295 = vst [vmem:[#allocation4 + $0x10] sm:$0xff] %v229
    %296 = vst [vmem:[#allocation4 + $0x18] sm:$0xff] %v270
    %297 = vst [vmem:[#allocation4 + $0x20] sm:$0xff] %v150
    %298 = vst [vmem:[#allocation4 + $0x28] sm:$0xff] %v191
    %299 = vst [vmem:[#allocation4 + $0x30] sm:$0xff] %v232
    %300 = vst [vmem:[#allocation4 + $0x38] sm:$0xff] %v273
    %301 = vst [vmem:[#allocation4 + $0x40] sm:$0xff] %v153
    %302 = vst [vmem:[#allocation4 + $0x48] sm:$0xff] %v194
    %303 = vst [vmem:[#allocation4 + $0x50] sm:$0xff] %v235
    %304 = vst [vmem:[#allocation4 + $0x58] sm:$0xff] %v276
    %305 = vst [vmem:[#allocation4 + $0x60] sm:$0xff] %v156
    %306 = vst [vmem:[#allocation4 + $0x68] sm:$0xff] %v197
    %307 = vst [vmem:[#allocation4 + $0x70] sm:$0xff] %v238
    %308 = vst [vmem:[#allocation4 + $0x78] sm:$0xff] %v279
    %309 = vst [vmem:[#allocation4 + $0x80] sm:$0xff] %v159
    %310 = vst [vmem:[#allocation4 + $0x88] sm:$0xff] %v200
    %311 = vst [vmem:[#allocation4 + $0x90] sm:$0xff] %v241
    %312 = vst [vmem:[#allocation4 + $0x98] sm:$0xff] %v282
    %313 = vst [vmem:[#allocation4 + $0xa0] sm:$0xff] %v162
    %314 = vst [vmem:[#allocation4 + $0xa8] sm:$0xff] %v203
    %315 = vst [vmem:[#allocation4 + $0xb0] sm:$0xff] %v244
    %316 = vst [vmem:[#allocation4 + $0xb8] sm:$0xff] %v285
    %317 = vst [vmem:[#allocation4 + $0xc0] sm:$0xff] %v165
    %318 = vst [vmem:[#allocation4 + $0xc8] sm:$0xff] %v206
    %319 = vst [vmem:[#allocation4 + $0xd0] sm:$0xff] %v247
    %320 = vst [vmem:[#allocation4 + $0xd8] sm:$0xff] %v288
    %321 = vst [vmem:[#allocation4 + $0xe0] sm:$0xff] %v168
    %322 = vst [vmem:[#allocation4 + $0xe8] sm:$0xff] %v209
    %323 = vst [vmem:[#allocation4 + $0xf0] sm:$0xff] %v250
    %324 = vst [vmem:[#allocation4 + $0xf8] sm:$0xff] %v291
    %v325 = vld [vmem:[#allocation5 + $0x200] sm:$0xff]
    %v326 = vld [vmem:[#allocation5 + $0x208] sm:$0xff]
    %v327 = vld [vmem:[#allocation5 + $0x210] sm:$0xff]
    %v328 = vld [vmem:[#allocation5 + $0x218] sm:$0xff]
    %v329 = vld [vmem:[#allocation5 + $0x220] sm:$0xff]
    %v330 = vld [vmem:[#allocation5 + $0x228] sm:$0xff]
    %v331 = vld [vmem:[#allocation5 + $0x230] sm:$0xff]
    %v332 = vld [vmem:[#allocation5 + $0x238] sm:$0xff]
    %v333 = vld [vmem:[#allocation5 + $0x240] sm:$0xff]
    %v334 = vld [vmem:[#allocation5 + $0x248] sm:$0xff]
    %v335 = vld [vmem:[#allocation5 + $0x250] sm:$0xff]
    %v336 = vld [vmem:[#allocation5 + $0x258] sm:$0xff]
    %v337 = vld [vmem:[#allocation5 + $0x260] sm:$0xff]
    %v338 = vld [vmem:[#allocation5 + $0x268] sm:$0xff]
    %v339 = vld [vmem:[#allocation5 + $0x270] sm:$0xff]
    %v340 = vld [vmem:[#allocation5 + $0x278] sm:$0xff]
    %v341 = vld [vmem:[#allocation4] sm:$0xff]
    %v342 = vld [vmem:[#allocation4 + $0x8] sm:$0xff]
    %v343 = vld [vmem:[#allocation4 + $0x10] sm:$0xff]
    %v344 = vld [vmem:[#allocation4 + $0x18] sm:$0xff]
    %vm345 = vcmask 261120
    %v347 = vsel %vm345, 0.0, 0
    %349 = vmatpush.msra.mxu0 0.0
    %350 = vmatpush.msra.mxu0 0.0
    %351 = vmatpush.msra.mxu0 0.0
    %352 = vmatpush.msra.mxu0 0.0
    %353 = vmatpush.msra.mxu0 0.0
    %354 = vmatpush.msra.mxu0 0.0
    %355 = vmatpush.msra.mxu0 0.0
    %356 = vmatpush.msra.mxu0 0.0
    %357 = vmatpush.msra.mxu0 0.0
    %358 = vmatpush.msra.mxu0 0.0
    %359 = vmatpush.msra.mxu0 0.0
    %360 = vmatpush.msra.mxu0 0.0
    %361 = vmatpush.msra.mxu0 %v337
    %362 = vmatpush.msra.mxu0 %v333
    %363 = vmatpush.msra.mxu0 %v329
    %364 = vmatpush.msra.mxu0 %v325
    %365 = vmatmul.f32.gmra.mxu0 %v347
    %v366 = vpop.f32.mrf.mxu0
    %v367 = vadd.f32 0.0, %v366
    %368 = vdwg.mxu0
    %369 = vmatpush.msra.mxu0 0.0
    %370 = vmatpush.msra.mxu0 0.0
    %371 = vmatpush.msra.mxu0 0.0
    %372 = vmatpush.msra.mxu0 0.0
    %373 = vmatpush.msra.mxu0 0.0
    %374 = vmatpush.msra.mxu0 0.0
    %375 = vmatpush.msra.mxu0 0.0
    %376 = vmatpush.msra.mxu0 0.0
    %377 = vmatpush.msra.mxu0 0.0
    %378 = vmatpush.msra.mxu0 0.0
    %379 = vmatpush.msra.mxu0 0.0
    %380 = vmatpush.msra.mxu0 0.0
    %381 = vmatpush.msra.mxu0 %v338
    %382 = vmatpush.msra.mxu0 %v334
    %383 = vmatpush.msra.mxu0 %v330
    %384 = vmatpush.msra.mxu0 %v326
    %385 = vmatmul.f32.gmra.mxu0 %v347
    %v386 = vpop.f32.mrf.mxu0
    %v387 = vadd.f32 0.0, %v386
    %388 = vdwg.mxu0
    %389 = vmatpush.msra.mxu0 0.0
    %390 = vmatpush.msra.mxu0 0.0
    %391 = vmatpush.msra.mxu0 0.0
    %392 = vmatpush.msra.mxu0 0.0
    %393 = vmatpush.msra.mxu0 0.0
    %394 = vmatpush.msra.mxu0 0.0
    %395 = vmatpush.msra.mxu0 0.0
    %396 = vmatpush.msra.mxu0 0.0
    %397 = vmatpush.msra.mxu0 0.0
    %398 = vmatpush.msra.mxu0 0.0
    %399 = vmatpush.msra.mxu0 0.0
    %400 = vmatpush.msra.mxu0 0.0
    %401 = vmatpush.msra.mxu0 %v339
    %402 = vmatpush.msra.mxu0 %v335
    %403 = vmatpush.msra.mxu0 %v331
    %404 = vmatpush.msra.mxu0 %v327
    %405 = vmatmul.f32.gmra.mxu0 %v347
    %v406 = vpop.f32.mrf.mxu0
    %v407 = vadd.f32 0.0, %v406
    %408 = vdwg.mxu0
    %409 = vmatpush.msra.mxu0 0.0
    %410 = vmatpush.msra.mxu0 0.0
    %411 = vmatpush.msra.mxu0 0.0
    %412 = vmatpush.msra.mxu0 0.0
    %413 = vmatpush.msra.mxu0 0.0
    %414 = vmatpush.msra.mxu0 0.0
    %415 = vmatpush.msra.mxu0 0.0
    %416 = vmatpush.msra.mxu0 0.0
    %417 = vmatpush.msra.mxu0 0.0
    %418 = vmatpush.msra.mxu0 0.0
    %419 = vmatpush.msra.mxu0 0.0
    %420 = vmatpush.msra.mxu0 0.0
    %421 = vmatpush.msra.mxu0 %v340
    %422 = vmatpush.msra.mxu0 %v336
    %423 = vmatpush.msra.mxu0 %v332
    %424 = vmatpush.msra.mxu0 %v328
    %425 = vmatmul.f32.gmra.mxu0 %v347
    %v426 = vpop.f32.mrf.mxu0
    %v427 = vadd.f32 0.0, %v426
    %428 = vdwg.mxu0
    %v429 = vadd.f32 %v341, %v367
    %v430 = vadd.f32 %v342, %v387
    %v431 = vadd.f32 %v343, %v407
    %v432 = vadd.f32 %v344, %v427
    %v433 = vxor.u32 %v429, 2147483648
    %v434 = vmul.f32 %v433, 1.442695
    %v435 = vpow.pop %v434
    %v436 = vadd.f32 %v435, 1.0
    %v437 = vrcp.pop %v436
    %v438 = vmul.f32 %v436, %v437
    %v439 = vsub.f32 1.0, %v438
    %v440 = vmul.f32 %v437, %v439
    %v441 = vadd.f32 %v437, %v440
    %vm442 = vweird.f32 %v436
    %vm443 = vweird.f32 %v437
    %vm444 = vmor %vm442, %vm443
    %v445 = vsel %vm444, %v437, %v441
    %v446 = vand.u32 2147483647, %v436
    %vm447 = vcmp.eq.f32.partialorder %v446, 8.507059e+37
    %v448 = vand.u32 %v436, 2147483648
    %v449 = vor.u32 1.1754944e-38, %v448
    %v450 = vsel %vm447, %v449, %v445
    %v451 = vmul.f32 1.0, %v450
    %v452 = vxor.u32 %v430, 2147483648
    %v453 = vmul.f32 %v452, 1.442695
    %v454 = vpow.pop %v453
    %v455 = vadd.f32 %v454, 1.0
    %v456 = vrcp.pop %v455
    %v457 = vmul.f32 %v455, %v456
    %v458 = vsub.f32 1.0, %v457
    %v459 = vmul.f32 %v456, %v458
    %v460 = vadd.f32 %v456, %v459
    %vm461 = vweird.f32 %v455
    %vm462 = vweird.f32 %v456
    %vm463 = vmor %vm461, %vm462
    %v464 = vsel %vm463, %v456, %v460
    %v465 = vand.u32 2147483647, %v455
    %vm466 = vcmp.eq.f32.partialorder %v465, 8.507059e+37
    %v467 = vand.u32 %v455, 2147483648
    %v468 = vor.u32 1.1754944e-38, %v467
    %v469 = vsel %vm466, %v468, %v464
    %v470 = vmul.f32 1.0, %v469
    %v471 = vtanh.pop %v431
    %v472 = vxor.u32 %v432, 2147483648
    %v473 = vmul.f32 %v472, 1.442695
    %v474 = vpow.pop %v473
    %v475 = vadd.f32 %v474, 1.0
    %v476 = vrcp.pop %v475
    %v477 = vmul.f32 %v475, %v476
    %v478 = vsub.f32 1.0, %v477
    %v479 = vmul.f32 %v476, %v478
    %v480 = vadd.f32 %v476, %v479
    %vm481 = vweird.f32 %v475
    %vm482 = vweird.f32 %v476
    %vm483 = vmor %vm481, %vm482
    %v484 = vsel %vm483, %v476, %v480
    %v485 = vand.u32 2147483647, %v475
    %vm486 = vcmp.eq.f32.partialorder %v485, 8.507059e+37
    %v487 = vand.u32 %v475, 2147483648
    %v488 = vor.u32 1.1754944e-38, %v487
    %v489 = vsel %vm486, %v488, %v484
    %v490 = vmul.f32 1.0, %v489
    %v491 = vmul.f32 %v470, 0.0
    %v492 = vmul.f32 %v451, %v471
    %v493 = vadd.f32 %v491, %v492
    %v494 = vtanh.pop %v493
    %v495 = vmul.f32 %v490, %v494
    %496 = vst [vmem:[#allocation2] sm:$0xff] %v495
    %v497 = vld [vmem:[#allocation4 + $0x20] sm:$0xff]
    %v498 = vld [vmem:[#allocation4 + $0x28] sm:$0xff]
    %v499 = vld [vmem:[#allocation4 + $0x30] sm:$0xff]
    %v500 = vld [vmem:[#allocation4 + $0x38] sm:$0xff]
    %v502 = vsel %vm345, %v495, 0
    %504 = vmatpush.msra.mxu0 0.0
    %505 = vmatpush.msra.mxu0 0.0
    %506 = vmatpush.msra.mxu0 0.0
    %507 = vmatpush.msra.mxu0 0.0
    %508 = vmatpush.msra.mxu0 0.0
    %509 = vmatpush.msra.mxu0 0.0
    %510 = vmatpush.msra.mxu0 0.0
    %511 = vmatpush.msra.mxu0 0.0
    %512 = vmatpush.msra.mxu0 0.0
    %513 = vmatpush.msra.mxu0 0.0
    %514 = vmatpush.msra.mxu0 0.0
    %515 = vmatpush.msra.mxu0 0.0
    %516 = vmatpush.msra.mxu0 %v337
    %517 = vmatpush.msra.mxu0 %v333
    %518 = vmatpush.msra.mxu0 %v329
    %519 = vmatpush.msra.mxu0 %v325
    %520 = vmatmul.f32.gmra.mxu0 %v502
    %v521 = vpop.f32.mrf.mxu0
    %v522 = vadd.f32 0.0, %v521
    %523 = vdwg.mxu0
    %524 = vmatpush.msra.mxu0 0.0
    %525 = vmatpush.msra.mxu0 0.0
    %526 = vmatpush.msra.mxu0 0.0
    %527 = vmatpush.msra.mxu0 0.0
    %528 = vmatpush.msra.mxu0 0.0
    %529 = vmatpush.msra.mxu0 0.0
    %530 = vmatpush.msra.mxu0 0.0
    %531 = vmatpush.msra.mxu0 0.0
    %532 = vmatpush.msra.mxu0 0.0
    %533 = vmatpush.msra.mxu0 0.0
    %534 = vmatpush.msra.mxu0 0.0
    %535 = vmatpush.msra.mxu0 0.0
    %536 = vmatpush.msra.mxu0 %v338
    %537 = vmatpush.msra.mxu0 %v334
    %538 = vmatpush.msra.mxu0 %v330
    %539 = vmatpush.msra.mxu0 %v326
    %540 = vmatmul.f32.gmra.mxu0 %v502
    %v541 = vpop.f32.mrf.mxu0
    %v542 = vadd.f32 0.0, %v541
    %543 = vdwg.mxu0
    %544 = vmatpush.msra.mxu0 0.0
    %545 = vmatpush.msra.mxu0 0.0
    %546 = vmatpush.msra.mxu0 0.0
    %547 = vmatpush.msra.mxu0 0.0
    %548 = vmatpush.msra.mxu0 0.0
    %549 = vmatpush.msra.mxu0 0.0
    %550 = vmatpush.msra.mxu0 0.0
    %551 = vmatpush.msra.mxu0 0.0
    %552 = vmatpush.msra.mxu0 0.0
    %553 = vmatpush.msra.mxu0 0.0
    %554 = vmatpush.msra.mxu0 0.0
    %555 = vmatpush.msra.mxu0 0.0
    %556 = vmatpush.msra.mxu0 %v339
    %557 = vmatpush.msra.mxu0 %v335
    %558 = vmatpush.msra.mxu0 %v331
    %559 = vmatpush.msra.mxu0 %v327
    %560 = vmatmul.f32.gmra.mxu0 %v502
    %v561 = vpop.f32.mrf.mxu0
    %v562 = vadd.f32 0.0, %v561
    %563 = vdwg.mxu0
    %564 = vmatpush.msra.mxu0 0.0
    %565 = vmatpush.msra.mxu0 0.0
    %566 = vmatpush.msra.mxu0 0.0
    %567 = vmatpush.msra.mxu0 0.0
    %568 = vmatpush.msra.mxu0 0.0
    %569 = vmatpush.msra.mxu0 0.0
    %570 = vmatpush.msra.mxu0 0.0
    %571 = vmatpush.msra.mxu0 0.0
    %572 = vmatpush.msra.mxu0 0.0
    %573 = vmatpush.msra.mxu0 0.0
    %574 = vmatpush.msra.mxu0 0.0
    %575 = vmatpush.msra.mxu0 0.0
    %576 = vmatpush.msra.mxu0 %v340
    %577 = vmatpush.msra.mxu0 %v336
    %578 = vmatpush.msra.mxu0 %v332
    %579 = vmatpush.msra.mxu0 %v328
    %580 = vmatmul.f32.gmra.mxu0 %v502
    %v581 = vpop.f32.mrf.mxu0
    %v582 = vadd.f32 0.0, %v581
    %583 = vdwg.mxu0
    %v584 = vadd.f32 %v497, %v522
    %v585 = vadd.f32 %v498, %v542
    %v586 = vadd.f32 %v499, %v562
    %v587 = vadd.f32 %v500, %v582
    %v588 = vxor.u32 %v584, 2147483648
    %v589 = vmul.f32 %v588, 1.442695
    %v590 = vpow.pop %v589
    %v591 = vadd.f32 %v590, 1.0
    %v592 = vrcp.pop %v591
    %v593 = vmul.f32 %v591, %v592
    %v594 = vsub.f32 1.0, %v593
    %v595 = vmul.f32 %v592, %v594
    %v596 = vadd.f32 %v592, %v595
    %vm597 = vweird.f32 %v591
    %vm598 = vweird.f32 %v592
    %vm599 = vmor %vm597, %vm598
    %v600 = vsel %vm599, %v592, %v596
    %v601 = vand.u32 2147483647, %v591
    %vm602 = vcmp.eq.f32.partialorder %v601, 8.507059e+37
    %v603 = vand.u32 %v591, 2147483648
    %v604 = vor.u32 1.1754944e-38, %v603
    %v605 = vsel %vm602, %v604, %v600
    %v606 = vmul.f32 1.0, %v605
    %v607 = vxor.u32 %v585, 2147483648
    %v608 = vmul.f32 %v607, 1.442695
    %v609 = vpow.pop %v608
    %v610 = vadd.f32 %v609, 1.0
    %v611 = vrcp.pop %v610
    %v612 = vmul.f32 %v610, %v611
    %v613 = vsub.f32 1.0, %v612
    %v614 = vmul.f32 %v611, %v613
    %v615 = vadd.f32 %v611, %v614
    %vm616 = vweird.f32 %v610
    %vm617 = vweird.f32 %v611
    %vm618 = vmor %vm616, %vm617
    %v619 = vsel %vm618, %v611, %v615
    %v620 = vand.u32 2147483647, %v610
    %vm621 = vcmp.eq.f32.partialorder %v620, 8.507059e+37
    %v622 = vand.u32 %v610, 2147483648
    %v623 = vor.u32 1.1754944e-38, %v622
    %v624 = vsel %vm621, %v623, %v619
    %v625 = vmul.f32 1.0, %v624
    %v626 = vtanh.pop %v586
    %v627 = vxor.u32 %v587, 2147483648
    %v628 = vmul.f32 %v627, 1.442695
    %v629 = vpow.pop %v628
    %v630 = vadd.f32 %v629, 1.0
    %v631 = vrcp.pop %v630
    %v632 = vmul.f32 %v630, %v631
    %v633 = vsub.f32 1.0, %v632
    %v634 = vmul.f32 %v631, %v633
    %v635 = vadd.f32 %v631, %v634
    %vm636 = vweird.f32 %v630
    %vm637 = vweird.f32 %v631
    %vm638 = vmor %vm636, %vm637
    %v639 = vsel %vm638, %v631, %v635
    %v640 = vand.u32 2147483647, %v630
    %vm641 = vcmp.eq.f32.partialorder %v640, 8.507059e+37
    %v642 = vand.u32 %v630, 2147483648
    %v643 = vor.u32 1.1754944e-38, %v642
    %v644 = vsel %vm641, %v643, %v639
    %v645 = vmul.f32 1.0, %v644
    %v646 = vmul.f32 %v625, %v493
    %v647 = vmul.f32 %v606, %v626
    %v648 = vadd.f32 %v646, %v647
    %v649 = vtanh.pop %v648
    %v650 = vmul.f32 %v645, %v649
    %651 = vst [vmem:[#allocation2 + $0x8] sm:$0xff] %v650
    %v652 = vld [vmem:[#allocation4 + $0x40] sm:$0xff]
    %v653 = vld [vmem:[#allocation4 + $0x48] sm:$0xff]
    %v654 = vld [vmem:[#allocation4 + $0x50] sm:$0xff]
    %v655 = vld [vmem:[#allocation4 + $0x58] sm:$0xff]
    %v657 = vsel %vm345, %v650, 0
    %659 = vmatpush.msra.mxu0 0.0
    %660 = vmatpush.msra.mxu0 0.0
    %661 = vmatpush.msra.mxu0 0.0
    %662 = vmatpush.msra.mxu0 0.0
    %663 = vmatpush.msra.mxu0 0.0
    %664 = vmatpush.msra.mxu0 0.0
    %665 = vmatpush.msra.mxu0 0.0
    %666 = vmatpush.msra.mxu0 0.0
    %667 = vmatpush.msra.mxu0 0.0
    %668 = vmatpush.msra.mxu0 0.0
    %669 = vmatpush.msra.mxu0 0.0
    %670 = vmatpush.msra.mxu0 0.0
    %671 = vmatpush.msra.mxu0 %v337
    %672 = vmatpush.msra.mxu0 %v333
    %673 = vmatpush.msra.mxu0 %v329
    %674 = vmatpush.msra.mxu0 %v325
    %675 = vmatmul.f32.gmra.mxu0 %v657
    %v676 = vpop.f32.mrf.mxu0
    %v677 = vadd.f32 0.0, %v676
    %678 = vdwg.mxu0
    %679 = vmatpush.msra.mxu0 0.0
    %680 = vmatpush.msra.mxu0 0.0
    %681 = vmatpush.msra.mxu0 0.0
    %682 = vmatpush.msra.mxu0 0.0
    %683 = vmatpush.msra.mxu0 0.0
    %684 = vmatpush.msra.mxu0 0.0
    %685 = vmatpush.msra.mxu0 0.0
    %686 = vmatpush.msra.mxu0 0.0
    %687 = vmatpush.msra.mxu0 0.0
    %688 = vmatpush.msra.mxu0 0.0
    %689 = vmatpush.msra.mxu0 0.0
    %690 = vmatpush.msra.mxu0 0.0
    %691 = vmatpush.msra.mxu0 %v338
    %692 = vmatpush.msra.mxu0 %v334
    %693 = vmatpush.msra.mxu0 %v330
    %694 = vmatpush.msra.mxu0 %v326
    %695 = vmatmul.f32.gmra.mxu0 %v657
    %v696 = vpop.f32.mrf.mxu0
    %v697 = vadd.f32 0.0, %v696
    %698 = vdwg.mxu0
    %699 = vmatpush.msra.mxu0 0.0
    %700 = vmatpush.msra.mxu0 0.0
    %701 = vmatpush.msra.mxu0 0.0
    %702 = vmatpush.msra.mxu0 0.0
    %703 = vmatpush.msra.mxu0 0.0
    %704 = vmatpush.msra.mxu0 0.0
    %705 = vmatpush.msra.mxu0 0.0
    %706 = vmatpush.msra.mxu0 0.0
    %707 = vmatpush.msra.mxu0 0.0
    %708 = vmatpush.msra.mxu0 0.0
    %709 = vmatpush.msra.mxu0 0.0
    %710 = vmatpush.msra.mxu0 0.0
    %711 = vmatpush.msra.mxu0 %v339
    %712 = vmatpush.msra.mxu0 %v335
    %713 = vmatpush.msra.mxu0 %v331
    %714 = vmatpush.msra.mxu0 %v327
    %715 = vmatmul.f32.gmra.mxu0 %v657
    %v716 = vpop.f32.mrf.mxu0
    %v717 = vadd.f32 0.0, %v716
    %718 = vdwg.mxu0
    %719 = vmatpush.msra.mxu0 0.0
    %720 = vmatpush.msra.mxu0 0.0
    %721 = vmatpush.msra.mxu0 0.0
    %722 = vmatpush.msra.mxu0 0.0
    %723 = vmatpush.msra.mxu0 0.0
    %724 = vmatpush.msra.mxu0 0.0
    %725 = vmatpush.msra.mxu0 0.0
    %726 = vmatpush.msra.mxu0 0.0
    %727 = vmatpush.msra.mxu0 0.0
    %728 = vmatpush.msra.mxu0 0.0
    %729 = vmatpush.msra.mxu0 0.0
    %730 = vmatpush.msra.mxu0 0.0
    %731 = vmatpush.msra.mxu0 %v340
    %732 = vmatpush.msra.mxu0 %v336
    %733 = vmatpush.msra.mxu0 %v332
    %734 = vmatpush.msra.mxu0 %v328
    %735 = vmatmul.f32.gmra.mxu0 %v657
    %v736 = vpop.f32.mrf.mxu0
    %v737 = vadd.f32 0.0, %v736
    %738 = vdwg.mxu0
    %v739 = vadd.f32 %v652, %v677
    %v740 = vadd.f32 %v653, %v697
    %v741 = vadd.f32 %v654, %v717
    %v742 = vadd.f32 %v655, %v737
    %v743 = vxor.u32 %v739, 2147483648
    %v744 = vmul.f32 %v743, 1.442695
    %v745 = vpow.pop %v744
    %v746 = vadd.f32 %v745, 1.0
    %v747 = vrcp.pop %v746
    %v748 = vmul.f32 %v746, %v747
    %v749 = vsub.f32 1.0, %v748
    %v750 = vmul.f32 %v747, %v749
    %v751 = vadd.f32 %v747, %v750
    %vm752 = vweird.f32 %v746
    %vm753 = vweird.f32 %v747
    %vm754 = vmor %vm752, %vm753
    %v755 = vsel %vm754, %v747, %v751
    %v756 = vand.u32 2147483647, %v746
    %vm757 = vcmp.eq.f32.partialorder %v756, 8.507059e+37
    %v758 = vand.u32 %v746, 2147483648
    %v759 = vor.u32 1.1754944e-38, %v758
    %v760 = vsel %vm757, %v759, %v755
    %v761 = vmul.f32 1.0, %v760
    %v762 = vxor.u32 %v740, 2147483648
    %v763 = vmul.f32 %v762, 1.442695
    %v764 = vpow.pop %v763
    %v765 = vadd.f32 %v764, 1.0
    %v766 = vrcp.pop %v765
    %v767 = vmul.f32 %v765, %v766
    %v768 = vsub.f32 1.0, %v767
    %v769 = vmul.f32 %v766, %v768
    %v770 = vadd.f32 %v766, %v769
    %vm771 = vweird.f32 %v765
    %vm772 = vweird.f32 %v766
    %vm773 = vmor %vm771, %vm772
    %v774 = vsel %vm773, %v766, %v770
    %v775 = vand.u32 2147483647, %v765
    %vm776 = vcmp.eq.f32.partialorder %v775, 8.507059e+37
    %v777 = vand.u32 %v765, 2147483648
    %v778 = vor.u32 1.1754944e-38, %v777
    %v779 = vsel %vm776, %v778, %v774
    %v780 = vmul.f32 1.0, %v779
    %v781 = vtanh.pop %v741
    %v782 = vxor.u32 %v742, 2147483648
    %v783 = vmul.f32 %v782, 1.442695
    %v784 = vpow.pop %v783
    %v785 = vadd.f32 %v784, 1.0
    %v786 = vrcp.pop %v785
    %v787 = vmul.f32 %v785, %v786
    %v788 = vsub.f32 1.0, %v787
    %v789 = vmul.f32 %v786, %v788
    %v790 = vadd.f32 %v786, %v789
    %vm791 = vweird.f32 %v785
    %vm792 = vweird.f32 %v786
    %vm793 = vmor %vm791, %vm792
    %v794 = vsel %vm793, %v786, %v790
    %v795 = vand.u32 2147483647, %v785
    %vm796 = vcmp.eq.f32.partialorder %v795, 8.507059e+37
    %v797 = vand.u32 %v785, 2147483648
    %v798 = vor.u32 1.1754944e-38, %v797
    %v799 = vsel %vm796, %v798, %v794
    %v800 = vmul.f32 1.0, %v799
    %v801 = vmul.f32 %v780, %v648
    %v802 = vmul.f32 %v761, %v781
    %v803 = vadd.f32 %v801, %v802
    %v804 = vtanh.pop %v803
    %v805 = vmul.f32 %v800, %v804
    %806 = vst [vmem:[#allocation2 + $0x10] sm:$0xff] %v805
    %v807 = vld [vmem:[#allocation4 + $0x60] sm:$0xff]
    %v808 = vld [vmem:[#allocation4 + $0x68] sm:$0xff]
    %v809 = vld [vmem:[#allocation4 + $0x70] sm:$0xff]
    %v810 = vld [vmem:[#allocation4 + $0x78] sm:$0xff]
    %v812 = vsel %vm345, %v805, 0
    %814 = vmatpush.msra.mxu0 0.0
    %815 = vmatpush.msra.mxu0 0.0
    %816 = vmatpush.msra.mxu0 0.0
    %817 = vmatpush.msra.mxu0 0.0
    %818 = vmatpush.msra.mxu0 0.0
    %819 = vmatpush.msra.mxu0 0.0
    %820 = vmatpush.msra.mxu0 0.0
    %821 = vmatpush.msra.mxu0 0.0
    %822 = vmatpush.msra.mxu0 0.0
    %823 = vmatpush.msra.mxu0 0.0
    %824 = vmatpush.msra.mxu0 0.0
    %825 = vmatpush.msra.mxu0 0.0
    %826 = vmatpush.msra.mxu0 %v337
    %827 = vmatpush.msra.mxu0 %v333
    %828 = vmatpush.msra.mxu0 %v329
    %829 = vmatpush.msra.mxu0 %v325
    %830 = vmatmul.f32.gmra.mxu0 %v812
    %v831 = vpop.f32.mrf.mxu0
    %v832 = vadd.f32 0.0, %v831
    %833 = vdwg.mxu0
    %834 = vmatpush.msra.mxu0 0.0
    %835 = vmatpush.msra.mxu0 0.0
    %836 = vmatpush.msra.mxu0 0.0
    %837 = vmatpush.msra.mxu0 0.0
    %838 = vmatpush.msra.mxu0 0.0
    %839 = vmatpush.msra.mxu0 0.0
    %840 = vmatpush.msra.mxu0 0.0
    %841 = vmatpush.msra.mxu0 0.0
    %842 = vmatpush.msra.mxu0 0.0
    %843 = vmatpush.msra.mxu0 0.0
    %844 = vmatpush.msra.mxu0 0.0
    %845 = vmatpush.msra.mxu0 0.0
    %846 = vmatpush.msra.mxu0 %v338
    %847 = vmatpush.msra.mxu0 %v334
    %848 = vmatpush.msra.mxu0 %v330
    %849 = vmatpush.msra.mxu0 %v326
    %850 = vmatmul.f32.gmra.mxu0 %v812
    %v851 = vpop.f32.mrf.mxu0
    %v852 = vadd.f32 0.0, %v851
    %853 = vdwg.mxu0
    %854 = vmatpush.msra.mxu0 0.0
    %855 = vmatpush.msra.mxu0 0.0
    %856 = vmatpush.msra.mxu0 0.0
    %857 = vmatpush.msra.mxu0 0.0
    %858 = vmatpush.msra.mxu0 0.0
    %859 = vmatpush.msra.mxu0 0.0
    %860 = vmatpush.msra.mxu0 0.0
    %861 = vmatpush.msra.mxu0 0.0
    %862 = vmatpush.msra.mxu0 0.0
    %863 = vmatpush.msra.mxu0 0.0
    %864 = vmatpush.msra.mxu0 0.0
    %865 = vmatpush.msra.mxu0 0.0
    %866 = vmatpush.msra.mxu0 %v339
    %867 = vmatpush.msra.mxu0 %v335
    %868 = vmatpush.msra.mxu0 %v331
    %869 = vmatpush.msra.mxu0 %v327
    %870 = vmatmul.f32.gmra.mxu0 %v812
    %v871 = vpop.f32.mrf.mxu0
    %v872 = vadd.f32 0.0, %v871
    %873 = vdwg.mxu0
    %874 = vmatpush.msra.mxu0 0.0
    %875 = vmatpush.msra.mxu0 0.0
    %876 = vmatpush.msra.mxu0 0.0
    %877 = vmatpush.msra.mxu0 0.0
    %878 = vmatpush.msra.mxu0 0.0
    %879 = vmatpush.msra.mxu0 0.0
    %880 = vmatpush.msra.mxu0 0.0
    %881 = vmatpush.msra.mxu0 0.0
    %882 = vmatpush.msra.mxu0 0.0
    %883 = vmatpush.msra.mxu0 0.0
    %884 = vmatpush.msra.mxu0 0.0
    %885 = vmatpush.msra.mxu0 0.0
    %886 = vmatpush.msra.mxu0 %v340
    %887 = vmatpush.msra.mxu0 %v336
    %888 = vmatpush.msra.mxu0 %v332
    %889 = vmatpush.msra.mxu0 %v328
    %890 = vmatmul.f32.gmra.mxu0 %v812
    %v891 = vpop.f32.mrf.mxu0
    %v892 = vadd.f32 0.0, %v891
    %893 = vdwg.mxu0
    %v894 = vadd.f32 %v807, %v832
    %v895 = vadd.f32 %v808, %v852
    %v896 = vadd.f32 %v809, %v872
    %v897 = vadd.f32 %v810, %v892
    %v898 = vxor.u32 %v894, 2147483648
    %v899 = vmul.f32 %v898, 1.442695
    %v900 = vpow.pop %v899
    %v901 = vadd.f32 %v900, 1.0
    %v902 = vrcp.pop %v901
    %v903 = vmul.f32 %v901, %v902
    %v904 = vsub.f32 1.0, %v903
    %v905 = vmul.f32 %v902, %v904
    %v906 = vadd.f32 %v902, %v905
    %vm907 = vweird.f32 %v901
    %vm908 = vweird.f32 %v902
    %vm909 = vmor %vm907, %vm908
    %v910 = vsel %vm909, %v902, %v906
    %v911 = vand.u32 2147483647, %v901
    %vm912 = vcmp.eq.f32.partialorder %v911, 8.507059e+37
    %v913 = vand.u32 %v901, 2147483648
    %v914 = vor.u32 1.1754944e-38, %v913
    %v915 = vsel %vm912, %v914, %v910
    %v916 = vmul.f32 1.0, %v915
    %v917 = vxor.u32 %v895, 2147483648
    %v918 = vmul.f32 %v917, 1.442695
    %v919 = vpow.pop %v918
    %v920 = vadd.f32 %v919, 1.0
    %v921 = vrcp.pop %v920
    %v922 = vmul.f32 %v920, %v921
    %v923 = vsub.f32 1.0, %v922
    %v924 = vmul.f32 %v921, %v923
    %v925 = vadd.f32 %v921, %v924
    %vm926 = vweird.f32 %v920
    %vm927 = vweird.f32 %v921
    %vm928 = vmor %vm926, %vm927
    %v929 = vsel %vm928, %v921, %v925
    %v930 = vand.u32 2147483647, %v920
    %vm931 = vcmp.eq.f32.partialorder %v930, 8.507059e+37
    %v932 = vand.u32 %v920, 2147483648
    %v933 = vor.u32 1.1754944e-38, %v932
    %v934 = vsel %vm931, %v933, %v929
    %v935 = vmul.f32 1.0, %v934
    %v936 = vtanh.pop %v896
    %v937 = vxor.u32 %v897, 2147483648
    %v938 = vmul.f32 %v937, 1.442695
    %v939 = vpow.pop %v938
    %v940 = vadd.f32 %v939, 1.0
    %v941 = vrcp.pop %v940
    %v942 = vmul.f32 %v940, %v941
    %v943 = vsub.f32 1.0, %v942
    %v944 = vmul.f32 %v941, %v943
    %v945 = vadd.f32 %v941, %v944
    %vm946 = vweird.f32 %v940
    %vm947 = vweird.f32 %v941
    %vm948 = vmor %vm946, %vm947
    %v949 = vsel %vm948, %v941, %v945
    %v950 = vand.u32 2147483647, %v940
    %vm951 = vcmp.eq.f32.partialorder %v950, 8.507059e+37
    %v952 = vand.u32 %v940, 2147483648
    %v953 = vor.u32 1.1754944e-38, %v952
    %v954 = vsel %vm951, %v953, %v949
    %v955 = vmul.f32 1.0, %v954
    %v956 = vmul.f32 %v935, %v803
    %v957 = vmul.f32 %v916, %v936
    %v958 = vadd.f32 %v956, %v957
    %v959 = vtanh.pop %v958
    %v960 = vmul.f32 %v955, %v959
    %961 = vst [vmem:[#allocation2 + $0x18] sm:$0xff] %v960
    %v962 = vld [vmem:[#allocation4 + $0x80] sm:$0xff]
    %v963 = vld [vmem:[#allocation4 + $0x88] sm:$0xff]
    %v964 = vld [vmem:[#allocation4 + $0x90] sm:$0xff]
    %v965 = vld [vmem:[#allocation4 + $0x98] sm:$0xff]
    %v967 = vsel %vm345, %v960, 0
    %969 = vmatpush.msra.mxu0 0.0
    %970 = vmatpush.msra.mxu0 0.0
    %971 = vmatpush.msra.mxu0 0.0
    %972 = vmatpush.msra.mxu0 0.0
    %973 = vmatpush.msra.mxu0 0.0
    %974 = vmatpush.msra.mxu0 0.0
    %975 = vmatpush.msra.mxu0 0.0
    %976 = vmatpush.msra.mxu0 0.0
    %977 = vmatpush.msra.mxu0 0.0
    %978 = vmatpush.msra.mxu0 0.0
    %979 = vmatpush.msra.mxu0 0.0
    %980 = vmatpush.msra.mxu0 0.0
    %981 = vmatpush.msra.mxu0 %v337
    %982 = vmatpush.msra.mxu0 %v333
    %983 = vmatpush.msra.mxu0 %v329
    %984 = vmatpush.msra.mxu0 %v325
    %985 = vmatmul.f32.gmra.mxu0 %v967
    %v986 = vpop.f32.mrf.mxu0
    %v987 = vadd.f32 0.0, %v986
    %988 = vdwg.mxu0
    %989 = vmatpush.msra.mxu0 0.0
    %990 = vmatpush.msra.mxu0 0.0
    %991 = vmatpush.msra.mxu0 0.0
    %992 = vmatpush.msra.mxu0 0.0
    %993 = vmatpush.msra.mxu0 0.0
    %994 = vmatpush.msra.mxu0 0.0
    %995 = vmatpush.msra.mxu0 0.0
    %996 = vmatpush.msra.mxu0 0.0
    %997 = vmatpush.msra.mxu0 0.0
    %998 = vmatpush.msra.mxu0 0.0
    %999 = vmatpush.msra.mxu0 0.0
    %1000 = vmatpush.msra.mxu0 0.0
    %1001 = vmatpush.msra.mxu0 %v338
    %1002 = vmatpush.msra.mxu0 %v334
    %1003 = vmatpush.msra.mxu0 %v330
    %1004 = vmatpush.msra.mxu0 %v326
    %1005 = vmatmul.f32.gmra.mxu0 %v967
    %v1006 = vpop.f32.mrf.mxu0
    %v1007 = vadd.f32 0.0, %v1006
    %1008 = vdwg.mxu0
    %1009 = vmatpush.msra.mxu0 0.0
    %1010 = vmatpush.msra.mxu0 0.0
    %1011 = vmatpush.msra.mxu0 0.0
    %1012 = vmatpush.msra.mxu0 0.0
    %1013 = vmatpush.msra.mxu0 0.0
    %1014 = vmatpush.msra.mxu0 0.0
    %1015 = vmatpush.msra.mxu0 0.0
    %1016 = vmatpush.msra.mxu0 0.0
    %1017 = vmatpush.msra.mxu0 0.0
    %1018 = vmatpush.msra.mxu0 0.0
    %1019 = vmatpush.msra.mxu0 0.0
    %1020 = vmatpush.msra.mxu0 0.0
    %1021 = vmatpush.msra.mxu0 %v339
    %1022 = vmatpush.msra.mxu0 %v335
    %1023 = vmatpush.msra.mxu0 %v331
    %1024 = vmatpush.msra.mxu0 %v327
    %1025 = vmatmul.f32.gmra.mxu0 %v967
    %v1026 = vpop.f32.mrf.mxu0
    %v1027 = vadd.f32 0.0, %v1026
    %1028 = vdwg.mxu0
    %1029 = vmatpush.msra.mxu0 0.0
    %1030 = vmatpush.msra.mxu0 0.0
    %1031 = vmatpush.msra.mxu0 0.0
    %1032 = vmatpush.msra.mxu0 0.0
    %1033 = vmatpush.msra.mxu0 0.0
    %1034 = vmatpush.msra.mxu0 0.0
    %1035 = vmatpush.msra.mxu0 0.0
    %1036 = vmatpush.msra.mxu0 0.0
    %1037 = vmatpush.msra.mxu0 0.0
    %1038 = vmatpush.msra.mxu0 0.0
    %1039 = vmatpush.msra.mxu0 0.0
    %1040 = vmatpush.msra.mxu0 0.0
    %1041 = vmatpush.msra.mxu0 %v340
    %1042 = vmatpush.msra.mxu0 %v336
    %1043 = vmatpush.msra.mxu0 %v332
    %1044 = vmatpush.msra.mxu0 %v328
    %1045 = vmatmul.f32.gmra.mxu0 %v967
    %v1046 = vpop.f32.mrf.mxu0
    %v1047 = vadd.f32 0.0, %v1046
    %1048 = vdwg.mxu0
    %v1049 = vadd.f32 %v962, %v987
    %v1050 = vadd.f32 %v963, %v1007
    %v1051 = vadd.f32 %v964, %v1027
    %v1052 = vadd.f32 %v965, %v1047
    %v1053 = vxor.u32 %v1049, 2147483648
    %v1054 = vmul.f32 %v1053, 1.442695
    %v1055 = vpow.pop %v1054
    %v1056 = vadd.f32 %v1055, 1.0
    %v1057 = vrcp.pop %v1056
    %v1058 = vmul.f32 %v1056, %v1057
    %v1059 = vsub.f32 1.0, %v1058
    %v1060 = vmul.f32 %v1057, %v1059
    %v1061 = vadd.f32 %v1057, %v1060
    %vm1062 = vweird.f32 %v1056
    %vm1063 = vweird.f32 %v1057
    %vm1064 = vmor %vm1062, %vm1063
    %v1065 = vsel %vm1064, %v1057, %v1061
    %v1066 = vand.u32 2147483647, %v1056
    %vm1067 = vcmp.eq.f32.partialorder %v1066, 8.507059e+37
    %v1068 = vand.u32 %v1056, 2147483648
    %v1069 = vor.u32 1.1754944e-38, %v1068
    %v1070 = vsel %vm1067, %v1069, %v1065
    %v1071 = vmul.f32 1.0, %v1070
    %v1072 = vxor.u32 %v1050, 2147483648
    %v1073 = vmul.f32 %v1072, 1.442695
    %v1074 = vpow.pop %v1073
    %v1075 = vadd.f32 %v1074, 1.0
    %v1076 = vrcp.pop %v1075
    %v1077 = vmul.f32 %v1075, %v1076
    %v1078 = vsub.f32 1.0, %v1077
    %v1079 = vmul.f32 %v1076, %v1078
    %v1080 = vadd.f32 %v1076, %v1079
    %vm1081 = vweird.f32 %v1075
    %vm1082 = vweird.f32 %v1076
    %vm1083 = vmor %vm1081, %vm1082
    %v1084 = vsel %vm1083, %v1076, %v1080
    %v1085 = vand.u32 2147483647, %v1075
    %vm1086 = vcmp.eq.f32.partialorder %v1085, 8.507059e+37
    %v1087 = vand.u32 %v1075, 2147483648
    %v1088 = vor.u32 1.1754944e-38, %v1087
    %v1089 = vsel %vm1086, %v1088, %v1084
    %v1090 = vmul.f32 1.0, %v1089
    %v1091 = vtanh.pop %v1051
    %v1092 = vxor.u32 %v1052, 2147483648
    %v1093 = vmul.f32 %v1092, 1.442695
    %v1094 = vpow.pop %v1093
    %v1095 = vadd.f32 %v1094, 1.0
    %v1096 = vrcp.pop %v1095
    %v1097 = vmul.f32 %v1095, %v1096
    %v1098 = vsub.f32 1.0, %v1097
    %v1099 = vmul.f32 %v1096, %v1098
    %v1100 = vadd.f32 %v1096, %v1099
    %vm1101 = vweird.f32 %v1095
    %vm1102 = vweird.f32 %v1096
    %vm1103 = vmor %vm1101, %vm1102
    %v1104 = vsel %vm1103, %v1096, %v1100
    %v1105 = vand.u32 2147483647, %v1095
    %vm1106 = vcmp.eq.f32.partialorder %v1105, 8.507059e+37
    %v1107 = vand.u32 %v1095, 2147483648
    %v1108 = vor.u32 1.1754944e-38, %v1107
    %v1109 = vsel %vm1106, %v1108, %v1104
    %v1110 = vmul.f32 1.0, %v1109
    %v1111 = vmul.f32 %v1090, %v958
    %v1112 = vmul.f32 %v1071, %v1091
    %v1113 = vadd.f32 %v1111, %v1112
    %v1114 = vtanh.pop %v1113
    %v1115 = vmul.f32 %v1110, %v1114
    %1116 = vst [vmem:[#allocation2 + $0x20] sm:$0xff] %v1115
    %v1117 = vld [vmem:[#allocation4 + $0xa0] sm:$0xff]
    %v1118 = vld [vmem:[#allocation4 + $0xa8] sm:$0xff]
    %v1119 = vld [vmem:[#allocation4 + $0xb0] sm:$0xff]
    %v1120 = vld [vmem:[#allocation4 + $0xb8] sm:$0xff]
    %v1122 = vsel %vm345, %v1115, 0
    %1124 = vmatpush.msra.mxu0 0.0
    %1125 = vmatpush.msra.mxu0 0.0
    %1126 = vmatpush.msra.mxu0 0.0
    %1127 = vmatpush.msra.mxu0 0.0
    %1128 = vmatpush.msra.mxu0 0.0
    %1129 = vmatpush.msra.mxu0 0.0
    %1130 = vmatpush.msra.mxu0 0.0
    %1131 = vmatpush.msra.mxu0 0.0
    %1132 = vmatpush.msra.mxu0 0.0
    %1133 = vmatpush.msra.mxu0 0.0
    %1134 = vmatpush.msra.mxu0 0.0
    %1135 = vmatpush.msra.mxu0 0.0
    %1136 = vmatpush.msra.mxu0 %v337
    %1137 = vmatpush.msra.mxu0 %v333
    %1138 = vmatpush.msra.mxu0 %v329
    %1139 = vmatpush.msra.mxu0 %v325
    %1140 = vmatmul.f32.gmra.mxu0 %v1122
    %v1141 = vpop.f32.mrf.mxu0
    %v1142 = vadd.f32 0.0, %v1141
    %1143 = vdwg.mxu0
    %1144 = vmatpush.msra.mxu0 0.0
    %1145 = vmatpush.msra.mxu0 0.0
    %1146 = vmatpush.msra.mxu0 0.0
    %1147 = vmatpush.msra.mxu0 0.0
    %1148 = vmatpush.msra.mxu0 0.0
    %1149 = vmatpush.msra.mxu0 0.0
    %1150 = vmatpush.msra.mxu0 0.0
    %1151 = vmatpush.msra.mxu0 0.0
    %1152 = vmatpush.msra.mxu0 0.0
    %1153 = vmatpush.msra.mxu0 0.0
    %1154 = vmatpush.msra.mxu0 0.0
    %1155 = vmatpush.msra.mxu0 0.0
    %1156 = vmatpush.msra.mxu0 %v338
    %1157 = vmatpush.msra.mxu0 %v334
    %1158 = vmatpush.msra.mxu0 %v330
    %1159 = vmatpush.msra.mxu0 %v326
    %1160 = vmatmul.f32.gmra.mxu0 %v1122
    %v1161 = vpop.f32.mrf.mxu0
    %v1162 = vadd.f32 0.0, %v1161
    %1163 = vdwg.mxu0
    %1164 = vmatpush.msra.mxu0 0.0
    %1165 = vmatpush.msra.mxu0 0.0
    %1166 = vmatpush.msra.mxu0 0.0
    %1167 = vmatpush.msra.mxu0 0.0
    %1168 = vmatpush.msra.mxu0 0.0
    %1169 = vmatpush.msra.mxu0 0.0
    %1170 = vmatpush.msra.mxu0 0.0
    %1171 = vmatpush.msra.mxu0 0.0
    %1172 = vmatpush.msra.mxu0 0.0
    %1173 = vmatpush.msra.mxu0 0.0
    %1174 = vmatpush.msra.mxu0 0.0
    %1175 = vmatpush.msra.mxu0 0.0
    %1176 = vmatpush.msra.mxu0 %v339
    %1177 = vmatpush.msra.mxu0 %v335
    %1178 = vmatpush.msra.mxu0 %v331
    %1179 = vmatpush.msra.mxu0 %v327
    %1180 = vmatmul.f32.gmra.mxu0 %v1122
    %v1181 = vpop.f32.mrf.mxu0
    %v1182 = vadd.f32 0.0, %v1181
    %1183 = vdwg.mxu0
    %1184 = vmatpush.msra.mxu0 0.0
    %1185 = vmatpush.msra.mxu0 0.0
    %1186 = vmatpush.msra.mxu0 0.0
    %1187 = vmatpush.msra.mxu0 0.0
    %1188 = vmatpush.msra.mxu0 0.0
    %1189 = vmatpush.msra.mxu0 0.0
    %1190 = vmatpush.msra.mxu0 0.0
    %1191 = vmatpush.msra.mxu0 0.0
    %1192 = vmatpush.msra.mxu0 0.0
    %1193 = vmatpush.msra.mxu0 0.0
    %1194 = vmatpush.msra.mxu0 0.0
    %1195 = vmatpush.msra.mxu0 0.0
    %1196 = vmatpush.msra.mxu0 %v340
    %1197 = vmatpush.msra.mxu0 %v336
    %1198 = vmatpush.msra.mxu0 %v332
    %1199 = vmatpush.msra.mxu0 %v328
    %1200 = vmatmul.f32.gmra.mxu0 %v1122
    %v1201 = vpop.f32.mrf.mxu0
    %v1202 = vadd.f32 0.0, %v1201
    %1203 = vdwg.mxu0
    %v1204 = vadd.f32 %v1117, %v1142
    %v1205 = vadd.f32 %v1118, %v1162
    %v1206 = vadd.f32 %v1119, %v1182
    %v1207 = vadd.f32 %v1120, %v1202
    %v1208 = vxor.u32 %v1204, 2147483648
    %v1209 = vmul.f32 %v1208, 1.442695
    %v1210 = vpow.pop %v1209
    %v1211 = vadd.f32 %v1210, 1.0
    %v1212 = vrcp.pop %v1211
    %v1213 = vmul.f32 %v1211, %v1212
    %v1214 = vsub.f32 1.0, %v1213
    %v1215 = vmul.f32 %v1212, %v1214
    %v1216 = vadd.f32 %v1212, %v1215
    %vm1217 = vweird.f32 %v1211
    %vm1218 = vweird.f32 %v1212
    %vm1219 = vmor %vm1217, %vm1218
    %v1220 = vsel %vm1219, %v1212, %v1216
    %v1221 = vand.u32 2147483647, %v1211
    %vm1222 = vcmp.eq.f32.partialorder %v1221, 8.507059e+37
    %v1223 = vand.u32 %v1211, 2147483648
    %v1224 = vor.u32 1.1754944e-38, %v1223
    %v1225 = vsel %vm1222, %v1224, %v1220
    %v1226 = vmul.f32 1.0, %v1225
    %v1227 = vxor.u32 %v1205, 2147483648
    %v1228 = vmul.f32 %v1227, 1.442695
    %v1229 = vpow.pop %v1228
    %v1230 = vadd.f32 %v1229, 1.0
    %v1231 = vrcp.pop %v1230
    %v1232 = vmul.f32 %v1230, %v1231
    %v1233 = vsub.f32 1.0, %v1232
    %v1234 = vmul.f32 %v1231, %v1233
    %v1235 = vadd.f32 %v1231, %v1234
    %vm1236 = vweird.f32 %v1230
    %vm1237 = vweird.f32 %v1231
    %vm1238 = vmor %vm1236, %vm1237
    %v1239 = vsel %vm1238, %v1231, %v1235
    %v1240 = vand.u32 2147483647, %v1230
    %vm1241 = vcmp.eq.f32.partialorder %v1240, 8.507059e+37
    %v1242 = vand.u32 %v1230, 2147483648
    %v1243 = vor.u32 1.1754944e-38, %v1242
    %v1244 = vsel %vm1241, %v1243, %v1239
    %v1245 = vmul.f32 1.0, %v1244
    %v1246 = vtanh.pop %v1206
    %v1247 = vxor.u32 %v1207, 2147483648
    %v1248 = vmul.f32 %v1247, 1.442695
    %v1249 = vpow.pop %v1248
    %v1250 = vadd.f32 %v1249, 1.0
    %v1251 = vrcp.pop %v1250
    %v1252 = vmul.f32 %v1250, %v1251
    %v1253 = vsub.f32 1.0, %v1252
    %v1254 = vmul.f32 %v1251, %v1253
    %v1255 = vadd.f32 %v1251, %v1254
    %vm1256 = vweird.f32 %v1250
    %vm1257 = vweird.f32 %v1251
    %vm1258 = vmor %vm1256, %vm1257
    %v1259 = vsel %vm1258, %v1251, %v1255
    %v1260 = vand.u32 2147483647, %v1250
    %vm1261 = vcmp.eq.f32.partialorder %v1260, 8.507059e+37
    %v1262 = vand.u32 %v1250, 2147483648
    %v1263 = vor.u32 1.1754944e-38, %v1262
    %v1264 = vsel %vm1261, %v1263, %v1259
    %v1265 = vmul.f32 1.0, %v1264
    %v1266 = vmul.f32 %v1245, %v1113
    %v1267 = vmul.f32 %v1226, %v1246
    %v1268 = vadd.f32 %v1266, %v1267
    %v1269 = vtanh.pop %v1268
    %v1270 = vmul.f32 %v1265, %v1269
    %1271 = vst [vmem:[#allocation2 + $0x28] sm:$0xff] %v1270
    %v1272 = vld [vmem:[#allocation4 + $0xc0] sm:$0xff]
    %v1273 = vld [vmem:[#allocation4 + $0xc8] sm:$0xff]
    %v1274 = vld [vmem:[#allocation4 + $0xd0] sm:$0xff]
    %v1275 = vld [vmem:[#allocation4 + $0xd8] sm:$0xff]
    %v1277 = vsel %vm345, %v1270, 0
    %1279 = vmatpush.msra.mxu0 0.0
    %1280 = vmatpush.msra.mxu0 0.0
    %1281 = vmatpush.msra.mxu0 0.0
    %1282 = vmatpush.msra.mxu0 0.0
    %1283 = vmatpush.msra.mxu0 0.0
    %1284 = vmatpush.msra.mxu0 0.0
    %1285 = vmatpush.msra.mxu0 0.0
    %1286 = vmatpush.msra.mxu0 0.0
    %1287 = vmatpush.msra.mxu0 0.0
    %1288 = vmatpush.msra.mxu0 0.0
    %1289 = vmatpush.msra.mxu0 0.0
    %1290 = vmatpush.msra.mxu0 0.0
    %1291 = vmatpush.msra.mxu0 %v337
    %1292 = vmatpush.msra.mxu0 %v333
    %1293 = vmatpush.msra.mxu0 %v329
    %1294 = vmatpush.msra.mxu0 %v325
    %1295 = vmatmul.f32.gmra.mxu0 %v1277
    %v1296 = vpop.f32.mrf.mxu0
    %v1297 = vadd.f32 0.0, %v1296
    %1298 = vdwg.mxu0
    %1299 = vmatpush.msra.mxu0 0.0
    %1300 = vmatpush.msra.mxu0 0.0
    %1301 = vmatpush.msra.mxu0 0.0
    %1302 = vmatpush.msra.mxu0 0.0
    %1303 = vmatpush.msra.mxu0 0.0
    %1304 = vmatpush.msra.mxu0 0.0
    %1305 = vmatpush.msra.mxu0 0.0
    %1306 = vmatpush.msra.mxu0 0.0
    %1307 = vmatpush.msra.mxu0 0.0
    %1308 = vmatpush.msra.mxu0 0.0
    %1309 = vmatpush.msra.mxu0 0.0
    %1310 = vmatpush.msra.mxu0 0.0
    %1311 = vmatpush.msra.mxu0 %v338
    %1312 = vmatpush.msra.mxu0 %v334
    %1313 = vmatpush.msra.mxu0 %v330
    %1314 = vmatpush.msra.mxu0 %v326
    %1315 = vmatmul.f32.gmra.mxu0 %v1277
    %v1316 = vpop.f32.mrf.mxu0
    %v1317 = vadd.f32 0.0, %v1316
    %1318 = vdwg.mxu0
    %1319 = vmatpush.msra.mxu0 0.0
    %1320 = vmatpush.msra.mxu0 0.0
    %1321 = vmatpush.msra.mxu0 0.0
    %1322 = vmatpush.msra.mxu0 0.0
    %1323 = vmatpush.msra.mxu0 0.0
    %1324 = vmatpush.msra.mxu0 0.0
    %1325 = vmatpush.msra.mxu0 0.0
    %1326 = vmatpush.msra.mxu0 0.0
    %1327 = vmatpush.msra.mxu0 0.0
    %1328 = vmatpush.msra.mxu0 0.0
    %1329 = vmatpush.msra.mxu0 0.0
    %1330 = vmatpush.msra.mxu0 0.0
    %1331 = vmatpush.msra.mxu0 %v339
    %1332 = vmatpush.msra.mxu0 %v335
    %1333 = vmatpush.msra.mxu0 %v331
    %1334 = vmatpush.msra.mxu0 %v327
    %1335 = vmatmul.f32.gmra.mxu0 %v1277
    %v1336 = vpop.f32.mrf.mxu0
    %v1337 = vadd.f32 0.0, %v1336
    %1338 = vdwg.mxu0
    %1339 = vmatpush.msra.mxu0 0.0
    %1340 = vmatpush.msra.mxu0 0.0
    %1341 = vmatpush.msra.mxu0 0.0
    %1342 = vmatpush.msra.mxu0 0.0
    %1343 = vmatpush.msra.mxu0 0.0
    %1344 = vmatpush.msra.mxu0 0.0
    %1345 = vmatpush.msra.mxu0 0.0
    %1346 = vmatpush.msra.mxu0 0.0
    %1347 = vmatpush.msra.mxu0 0.0
    %1348 = vmatpush.msra.mxu0 0.0
    %1349 = vmatpush.msra.mxu0 0.0
    %1350 = vmatpush.msra.mxu0 0.0
    %1351 = vmatpush.msra.mxu0 %v340
    %1352 = vmatpush.msra.mxu0 %v336
    %1353 = vmatpush.msra.mxu0 %v332
    %1354 = vmatpush.msra.mxu0 %v328
    %1355 = vmatmul.f32.gmra.mxu0 %v1277
    %v1356 = vpop.f32.mrf.mxu0
    %v1357 = vadd.f32 0.0, %v1356
    %1358 = vdwg.mxu0
    %v1359 = vadd.f32 %v1272, %v1297
    %v1360 = vadd.f32 %v1273, %v1317
    %v1361 = vadd.f32 %v1274, %v1337
    %v1362 = vadd.f32 %v1275, %v1357
    %v1363 = vxor.u32 %v1359, 2147483648
    %v1364 = vmul.f32 %v1363, 1.442695
    %v1365 = vpow.pop %v1364
    %v1366 = vadd.f32 %v1365, 1.0
    %v1367 = vrcp.pop %v1366
    %v1368 = vmul.f32 %v1366, %v1367
    %v1369 = vsub.f32 1.0, %v1368
    %v1370 = vmul.f32 %v1367, %v1369
    %v1371 = vadd.f32 %v1367, %v1370
    %vm1372 = vweird.f32 %v1366
    %vm1373 = vweird.f32 %v1367
    %vm1374 = vmor %vm1372, %vm1373
    %v1375 = vsel %vm1374, %v1367, %v1371
    %v1376 = vand.u32 2147483647, %v1366
    %vm1377 = vcmp.eq.f32.partialorder %v1376, 8.507059e+37
    %v1378 = vand.u32 %v1366, 2147483648
    %v1379 = vor.u32 1.1754944e-38, %v1378
    %v1380 = vsel %vm1377, %v1379, %v1375
    %v1381 = vmul.f32 1.0, %v1380
    %v1382 = vxor.u32 %v1360, 2147483648
    %v1383 = vmul.f32 %v1382, 1.442695
    %v1384 = vpow.pop %v1383
    %v1385 = vadd.f32 %v1384, 1.0
    %v1386 = vrcp.pop %v1385
    %v1387 = vmul.f32 %v1385, %v1386
    %v1388 = vsub.f32 1.0, %v1387
    %v1389 = vmul.f32 %v1386, %v1388
    %v1390 = vadd.f32 %v1386, %v1389
    %vm1391 = vweird.f32 %v1385
    %vm1392 = vweird.f32 %v1386
    %vm1393 = vmor %vm1391, %vm1392
    %v1394 = vsel %vm1393, %v1386, %v1390
    %v1395 = vand.u32 2147483647, %v1385
    %vm1396 = vcmp.eq.f32.partialorder %v1395, 8.507059e+37
    %v1397 = vand.u32 %v1385, 2147483648
    %v1398 = vor.u32 1.1754944e-38, %v1397
    %v1399 = vsel %vm1396, %v1398, %v1394
    %v1400 = vmul.f32 1.0, %v1399
    %v1401 = vtanh.pop %v1361
    %v1402 = vxor.u32 %v1362, 2147483648
    %v1403 = vmul.f32 %v1402, 1.442695
    %v1404 = vpow.pop %v1403
    %v1405 = vadd.f32 %v1404, 1.0
    %v1406 = vrcp.pop %v1405
    %v1407 = vmul.f32 %v1405, %v1406
    %v1408 = vsub.f32 1.0, %v1407
    %v1409 = vmul.f32 %v1406, %v1408
    %v1410 = vadd.f32 %v1406, %v1409
    %vm1411 = vweird.f32 %v1405
    %vm1412 = vweird.f32 %v1406
    %vm1413 = vmor %vm1411, %vm1412
    %v1414 = vsel %vm1413, %v1406, %v1410
    %v1415 = vand.u32 2147483647, %v1405
    %vm1416 = vcmp.eq.f32.partialorder %v1415, 8.507059e+37
    %v1417 = vand.u32 %v1405, 2147483648
    %v1418 = vor.u32 1.1754944e-38, %v1417
    %v1419 = vsel %vm1416, %v1418, %v1414
    %v1420 = vmul.f32 1.0, %v1419
    %v1421 = vmul.f32 %v1400, %v1268
    %v1422 = vmul.f32 %v1381, %v1401
    %v1423 = vadd.f32 %v1421, %v1422
    %v1424 = vtanh.pop %v1423
    %v1425 = vmul.f32 %v1420, %v1424
    %1426 = vst [vmem:[#allocation2 + $0x30] sm:$0xff] %v1425
    %v1427 = vld [vmem:[#allocation4 + $0xe0] sm:$0xff]
    %v1428 = vld [vmem:[#allocation4 + $0xe8] sm:$0xff]
    %v1429 = vld [vmem:[#allocation4 + $0xf0] sm:$0xff]
    %v1430 = vld [vmem:[#allocation4 + $0xf8] sm:$0xff]
    %v1432 = vsel %vm345, %v1425, 0
    %1434 = vmatpush.msra.mxu0 0.0
    %1435 = vmatpush.msra.mxu0 0.0
    %1436 = vmatpush.msra.mxu0 0.0
    %1437 = vmatpush.msra.mxu0 0.0
    %1438 = vmatpush.msra.mxu0 0.0
    %1439 = vmatpush.msra.mxu0 0.0
    %1440 = vmatpush.msra.mxu0 0.0
    %1441 = vmatpush.msra.mxu0 0.0
    %1442 = vmatpush.msra.mxu0 0.0
    %1443 = vmatpush.msra.mxu0 0.0
    %1444 = vmatpush.msra.mxu0 0.0
    %1445 = vmatpush.msra.mxu0 0.0
    %1446 = vmatpush.msra.mxu0 %v337
    %1447 = vmatpush.msra.mxu0 %v333
    %1448 = vmatpush.msra.mxu0 %v329
    %1449 = vmatpush.msra.mxu0 %v325
    %1450 = vmatmul.f32.gmra.mxu0 %v1432
    %v1451 = vpop.f32.mrf.mxu0
    %v1452 = vadd.f32 0.0, %v1451
    %1453 = vdwg.mxu0
    %1454 = vmatpush.msra.mxu0 0.0
    %1455 = vmatpush.msra.mxu0 0.0
    %1456 = vmatpush.msra.mxu0 0.0
    %1457 = vmatpush.msra.mxu0 0.0
    %1458 = vmatpush.msra.mxu0 0.0
    %1459 = vmatpush.msra.mxu0 0.0
    %1460 = vmatpush.msra.mxu0 0.0
    %1461 = vmatpush.msra.mxu0 0.0
    %1462 = vmatpush.msra.mxu0 0.0
    %1463 = vmatpush.msra.mxu0 0.0
    %1464 = vmatpush.msra.mxu0 0.0
    %1465 = vmatpush.msra.mxu0 0.0
    %1466 = vmatpush.msra.mxu0 %v338
    %1467 = vmatpush.msra.mxu0 %v334
    %1468 = vmatpush.msra.mxu0 %v330
    %1469 = vmatpush.msra.mxu0 %v326
    %1470 = vmatmul.f32.gmra.mxu0 %v1432
    %v1471 = vpop.f32.mrf.mxu0
    %v1472 = vadd.f32 0.0, %v1471
    %1473 = vdwg.mxu0
    %1474 = vmatpush.msra.mxu0 0.0
    %1475 = vmatpush.msra.mxu0 0.0
    %1476 = vmatpush.msra.mxu0 0.0
    %1477 = vmatpush.msra.mxu0 0.0
    %1478 = vmatpush.msra.mxu0 0.0
    %1479 = vmatpush.msra.mxu0 0.0
    %1480 = vmatpush.msra.mxu0 0.0
    %1481 = vmatpush.msra.mxu0 0.0
    %1482 = vmatpush.msra.mxu0 0.0
    %1483 = vmatpush.msra.mxu0 0.0
    %1484 = vmatpush.msra.mxu0 0.0
    %1485 = vmatpush.msra.mxu0 0.0
    %1486 = vmatpush.msra.mxu0 %v339
    %1487 = vmatpush.msra.mxu0 %v335
    %1488 = vmatpush.msra.mxu0 %v331
    %1489 = vmatpush.msra.mxu0 %v327
    %1490 = vmatmul.f32.gmra.mxu0 %v1432
    %v1491 = vpop.f32.mrf.mxu0
    %v1492 = vadd.f32 0.0, %v1491
    %1493 = vdwg.mxu0
    %1494 = vmatpush.msra.mxu0 0.0
    %1495 = vmatpush.msra.mxu0 0.0
    %1496 = vmatpush.msra.mxu0 0.0
    %1497 = vmatpush.msra.mxu0 0.0
    %1498 = vmatpush.msra.mxu0 0.0
    %1499 = vmatpush.msra.mxu0 0.0
    %1500 = vmatpush.msra.mxu0 0.0
    %1501 = vmatpush.msra.mxu0 0.0
    %1502 = vmatpush.msra.mxu0 0.0
    %1503 = vmatpush.msra.mxu0 0.0
    %1504 = vmatpush.msra.mxu0 0.0
    %1505 = vmatpush.msra.mxu0 0.0
    %1506 = vmatpush.msra.mxu0 %v340
    %1507 = vmatpush.msra.mxu0 %v336
    %1508 = vmatpush.msra.mxu0 %v332
    %1509 = vmatpush.msra.mxu0 %v328
    %1510 = vmatmul.f32.gmra.mxu0 %v1432
    %v1511 = vpop.f32.mrf.mxu0
    %v1512 = vadd.f32 0.0, %v1511
    %1513 = vdwg.mxu0
    %v1514 = vadd.f32 %v1427, %v1452
    %v1515 = vadd.f32 %v1428, %v1472
    %v1516 = vadd.f32 %v1429, %v1492
    %v1517 = vadd.f32 %v1430, %v1512
    %v1518 = vxor.u32 %v1514, 2147483648
    %v1519 = vmul.f32 %v1518, 1.442695
    %v1520 = vpow.pop %v1519
    %v1521 = vadd.f32 %v1520, 1.0
    %v1522 = vrcp.pop %v1521
    %v1523 = vmul.f32 %v1521, %v1522
    %v1524 = vsub.f32 1.0, %v1523
    %v1525 = vmul.f32 %v1522, %v1524
    %v1526 = vadd.f32 %v1522, %v1525
    %vm1527 = vweird.f32 %v1521
    %vm1528 = vweird.f32 %v1522
    %vm1529 = vmor %vm1527, %vm1528
    %v1530 = vsel %vm1529, %v1522, %v1526
    %v1531 = vand.u32 2147483647, %v1521
    %vm1532 = vcmp.eq.f32.partialorder %v1531, 8.507059e+37
    %v1533 = vand.u32 %v1521, 2147483648
    %v1534 = vor.u32 1.1754944e-38, %v1533
    %v1535 = vsel %vm1532, %v1534, %v1530
    %v1536 = vmul.f32 1.0, %v1535
    %v1537 = vxor.u32 %v1515, 2147483648
    %v1538 = vmul.f32 %v1537, 1.442695
    %v1539 = vpow.pop %v1538
    %v1540 = vadd.f32 %v1539, 1.0
    %v1541 = vrcp.pop %v1540
    %v1542 = vmul.f32 %v1540, %v1541
    %v1543 = vsub.f32 1.0, %v1542
    %v1544 = vmul.f32 %v1541, %v1543
    %v1545 = vadd.f32 %v1541, %v1544
    %vm1546 = vweird.f32 %v1540
    %vm1547 = vweird.f32 %v1541
    %vm1548 = vmor %vm1546, %vm1547
    %v1549 = vsel %vm1548, %v1541, %v1545
    %v1550 = vand.u32 2147483647, %v1540
    %vm1551 = vcmp.eq.f32.partialorder %v1550, 8.507059e+37
    %v1552 = vand.u32 %v1540, 2147483648
    %v1553 = vor.u32 1.1754944e-38, %v1552
    %v1554 = vsel %vm1551, %v1553, %v1549
    %v1555 = vmul.f32 1.0, %v1554
    %v1556 = vtanh.pop %v1516
    %v1557 = vxor.u32 %v1517, 2147483648
    %v1558 = vmul.f32 %v1557, 1.442695
    %v1559 = vpow.pop %v1558
    %v1560 = vadd.f32 %v1559, 1.0
    %v1561 = vrcp.pop %v1560
    %v1562 = vmul.f32 %v1560, %v1561
    %v1563 = vsub.f32 1.0, %v1562
    %v1564 = vmul.f32 %v1561, %v1563
    %v1565 = vadd.f32 %v1561, %v1564
    %vm1566 = vweird.f32 %v1560
    %vm1567 = vweird.f32 %v1561
    %vm1568 = vmor %vm1566, %vm1567
    %v1569 = vsel %vm1568, %v1561, %v1565
    %v1570 = vand.u32 2147483647, %v1560
    %vm1571 = vcmp.eq.f32.partialorder %v1570, 8.507059e+37
    %v1572 = vand.u32 %v1560, 2147483648
    %v1573 = vor.u32 1.1754944e-38, %v1572
    %v1574 = vsel %vm1571, %v1573, %v1569
    %v1575 = vmul.f32 1.0, %v1574
    %v1576 = vmul.f32 %v1555, %v1423
    %v1577 = vmul.f32 %v1536, %v1556
    %v1578 = vadd.f32 %v1576, %v1577
    %v1579 = vtanh.pop %v1578
    %v1580 = vmul.f32 %v1575, %v1579
    %1581 = vst [vmem:[#allocation2 + $0x38] sm:$0xff] %v1580
    %s1582 = scalar_lea.vmem [#allocation5], 672
    %v1583 = vld [vmem:[%s1582] sm:$0xff]
    %v1584 = vld [vmem:[%s1582 + $0x8] sm:$0xff]
    %v1585 = vld [vmem:[%s1582 + $0x10] sm:$0xff]
    %v1586 = vld [vmem:[%s1582 + $0x18] sm:$0xff]
    %v1587 = vld [vmem:[%s1582 + $0x20] sm:$0xff]
    %v1588 = vld [vmem:[%s1582 + $0x28] sm:$0xff]
    %v1589 = vld [vmem:[%s1582 + $0x30] sm:$0xff]
    %v1590 = vld [vmem:[%s1582 + $0x38] sm:$0xff]
    %v1591 = vld [vmem:[%s1582 + $0x40] sm:$0xff]
    %v1592 = vld [vmem:[%s1582 + $0x48] sm:$0xff]
    %v1593 = vld [vmem:[%s1582 + $0x50] sm:$0xff]
    %v1594 = vld [vmem:[%s1582 + $0x58] sm:$0xff]
    %v1595 = vld [vmem:[%s1582 + $0x60] sm:$0xff]
    %v1596 = vld [vmem:[%s1582 + $0x68] sm:$0xff]
    %v1597 = vld [vmem:[%s1582 + $0x70] sm:$0xff]
    %v1598 = vld [vmem:[%s1582 + $0x78] sm:$0xff]
    %v1599 = vld [vmem:[%s1582 + $0x80] sm:$0xff]
    %v1600 = vld [vmem:[%s1582 + $0x88] sm:$0xff]
    %v1601 = vld [vmem:[%s1582 + $0x90] sm:$0xff]
    %v1602 = vld [vmem:[%s1582 + $0x98] sm:$0xff]
    %v1603 = vld [vmem:[%s1582 + $0xa0] sm:$0xff]
    %v1604 = vld [vmem:[%s1582 + $0xa8] sm:$0xff]
    %v1605 = vld [vmem:[%s1582 + $0xb0] sm:$0xff]
    %v1606 = vld [vmem:[%s1582 + $0xb8] sm:$0xff]
    %v1607 = vld [vmem:[%s1582 + $0xc0] sm:$0xff]
    %v1608 = vld [vmem:[%s1582 + $0xc8] sm:$0xff]
    %v1609 = vld [vmem:[%s1582 + $0xd0] sm:$0xff]
    %v1610 = vld [vmem:[%s1582 + $0xd8] sm:$0xff]
    %v1611 = vld [vmem:[%s1582 + $0xe0] sm:$0xff]
    %v1612 = vld [vmem:[%s1582 + $0xe8] sm:$0xff]
    %v1613 = vld [vmem:[%s1582 + $0xf0] sm:$0xff]
    %v1614 = vld [vmem:[%s1582 + $0xf8] sm:$0xff]
    %v1615 = vld [vmem:[%s1582 + $0x100] sm:$0xff]
    %v1616 = vld [vmem:[%s1582 + $0x108] sm:$0xff]
    %v1617 = vld [vmem:[%s1582 + $0x110] sm:$0xff]
    %v1618 = vld [vmem:[%s1582 + $0x118] sm:$0xff]
    %v1619 = vld [vmem:[%s1582 + $0x120] sm:$0xff]
    %v1620 = vld [vmem:[%s1582 + $0x128] sm:$0xff]
    %v1621 = vld [vmem:[%s1582 + $0x130] sm:$0xff]
    %v1622 = vld [vmem:[%s1582 + $0x138] sm:$0xff]
    %v1623 = vld [vmem:[%s1582 + $0x140] sm:$0xff]
    %v1624 = vld [vmem:[%s1582 + $0x148] sm:$0xff]
    %v1625 = vld [vmem:[%s1582 + $0x150] sm:$0xff]
    %v1626 = vld [vmem:[%s1582 + $0x158] sm:$0xff]
    %v1627 = vld [vmem:[%s1582 + $0x160] sm:$0xff]
    %v1628 = vld [vmem:[%s1582 + $0x168] sm:$0xff]
    %v1629 = vld [vmem:[%s1582 + $0x170] sm:$0xff]
    %v1630 = vld [vmem:[%s1582 + $0x178] sm:$0xff]
    %v1631 = vld [vmem:[%s1582 + $0x180] sm:$0xff]
    %v1632 = vld [vmem:[%s1582 + $0x188] sm:$0xff]
    %v1633 = vld [vmem:[%s1582 + $0x190] sm:$0xff]
    %v1634 = vld [vmem:[%s1582 + $0x198] sm:$0xff]
    %v1635 = vld [vmem:[%s1582 + $0x1a0] sm:$0xff]
    %v1636 = vld [vmem:[%s1582 + $0x1a8] sm:$0xff]
    %v1637 = vld [vmem:[%s1582 + $0x1b0] sm:$0xff]
    %v1638 = vld [vmem:[%s1582 + $0x1b8] sm:$0xff]
    %v1639 = vld [vmem:[%s1582 + $0x1c0] sm:$0xff]
    %v1640 = vld [vmem:[%s1582 + $0x1c8] sm:$0xff]
    %v1641 = vld [vmem:[%s1582 + $0x1d0] sm:$0xff]
    %v1642 = vld [vmem:[%s1582 + $0x1d8] sm:$0xff]
    %v1643 = vld [vmem:[%s1582 + $0x1e0] sm:$0xff]
    %v1644 = vld [vmem:[%s1582 + $0x1e8] sm:$0xff]
    %v1645 = vld [vmem:[%s1582 + $0x1f0] sm:$0xff]
    %v1646 = vld [vmem:[%s1582 + $0x1f8] sm:$0xff]
    %s1647 = scalar_lea.vmem %s1582, 640 [#allocation5]
    %v1648 = vld [vmem:[%s1647] ss:$8 sm:$0xf]
    %v1649 = vld [vmem:[#allocation2] sm:$0xff]
    %v1650 = vld [vmem:[#allocation2 + $0x8] sm:$0xff]
    %v1651 = vld [vmem:[#allocation2 + $0x10] sm:$0xff]
    %v1652 = vld [vmem:[#allocation2 + $0x18] sm:$0xff]
    %v1653 = vld [vmem:[#allocation2 + $0x20] sm:$0xff]
    %v1654 = vld [vmem:[#allocation2 + $0x28] sm:$0xff]
    %v1655 = vld [vmem:[#allocation2 + $0x30] sm:$0xff]
    %v1656 = vld [vmem:[#allocation2 + $0x38] sm:$0xff]
    %v1658 = vperm.slane %v1648, 0
    %v1659 = vperm.slane %v1648, 1
    %v1660 = vperm.slane %v1648, 2
    %v1661 = vperm.slane %v1648, 3
    %1666 = vmatpush.msra.mxu0 %v1643
    %1667 = vmatpush.msra.mxu0 %v1639
    %1668 = vmatpush.msra.mxu0 %v1635
    %1669 = vmatpush.msra.mxu0 %v1631
    %1670 = vmatpush.msra.mxu0 %v1627
    %1671 = vmatpush.msra.mxu0 %v1623
    %1672 = vmatpush.msra.mxu0 %v1619
    %1673 = vmatpush.msra.mxu0 %v1615
    %1674 = vmatpush.msra.mxu0 %v1611
    %1675 = vmatpush.msra.mxu0 %v1607
    %1676 = vmatpush.msra.mxu0 %v1603
    %1677 = vmatpush.msra.mxu0 %v1599
    %1678 = vmatpush.msra.mxu0 %v1595
    %1679 = vmatpush.msra.mxu0 %v1591
    %1680 = vmatpush.msra.mxu0 %v1587
    %1681 = vmatpush.msra.mxu0 %v1583
    %1682 = vmatmul.f32.gmra.mxu0 %v1649
    %v1683 = vpop.f32.mrf.mxu0
    %v1684 = vadd.f32 %v1658, %v1683
    %1685 = vmatmul.f32.gmra.mxu0 %v1650
    %v1686 = vpop.f32.mrf.mxu0
    %v1687 = vadd.f32 %v1658, %v1686
    %1688 = vmatmul.f32.gmra.mxu0 %v1651
    %v1689 = vpop.f32.mrf.mxu0
    %v1690 = vadd.f32 %v1658, %v1689
    %1691 = vmatmul.f32.gmra.mxu0 %v1652
    %v1692 = vpop.f32.mrf.mxu0
    %v1693 = vadd.f32 %v1658, %v1692
    %1694 = vmatmul.f32.gmra.mxu0 %v1653
    %v1695 = vpop.f32.mrf.mxu0
    %v1696 = vadd.f32 %v1658, %v1695
    %1697 = vmatmul.f32.gmra.mxu0 %v1654
    %v1698 = vpop.f32.mrf.mxu0
    %v1699 = vadd.f32 %v1658, %v1698
    %1700 = vmatmul.f32.gmra.mxu0 %v1655
    %v1701 = vpop.f32.mrf.mxu0
    %v1702 = vadd.f32 %v1658, %v1701
    %1703 = vmatmul.f32.gmra.mxu0 %v1656
    %v1704 = vpop.f32.mrf.mxu0
    %v1705 = vadd.f32 %v1658, %v1704
    %1706 = vdwg.mxu0
    %1707 = vmatpush.msra.mxu0 %v1644
    %1708 = vmatpush.msra.mxu0 %v1640
    %1709 = vmatpush.msra.mxu0 %v1636
    %1710 = vmatpush.msra.mxu0 %v1632
    %1711 = vmatpush.msra.mxu0 %v1628
    %1712 = vmatpush.msra.mxu0 %v1624
    %1713 = vmatpush.msra.mxu0 %v1620
    %1714 = vmatpush.msra.mxu0 %v1616
    %1715 = vmatpush.msra.mxu0 %v1612
    %1716 = vmatpush.msra.mxu0 %v1608
    %1717 = vmatpush.msra.mxu0 %v1604
    %1718 = vmatpush.msra.mxu0 %v1600
    %1719 = vmatpush.msra.mxu0 %v1596
    %1720 = vmatpush.msra.mxu0 %v1592
    %1721 = vmatpush.msra.mxu0 %v1588
    %1722 = vmatpush.msra.mxu0 %v1584
    %1723 = vmatmul.f32.gmra.mxu0 %v1649
    %v1724 = vpop.f32.mrf.mxu0
    %v1725 = vadd.f32 %v1659, %v1724
    %1726 = vmatmul.f32.gmra.mxu0 %v1650
    %v1727 = vpop.f32.mrf.mxu0
    %v1728 = vadd.f32 %v1659, %v1727
    %1729 = vmatmul.f32.gmra.mxu0 %v1651
    %v1730 = vpop.f32.mrf.mxu0
    %v1731 = vadd.f32 %v1659, %v1730
    %1732 = vmatmul.f32.gmra.mxu0 %v1652
    %v1733 = vpop.f32.mrf.mxu0
    %v1734 = vadd.f32 %v1659, %v1733
    %1735 = vmatmul.f32.gmra.mxu0 %v1653
    %v1736 = vpop.f32.mrf.mxu0
    %v1737 = vadd.f32 %v1659, %v1736
    %1738 = vmatmul.f32.gmra.mxu0 %v1654
    %v1739 = vpop.f32.mrf.mxu0
    %v1740 = vadd.f32 %v1659, %v1739
    %1741 = vmatmul.f32.gmra.mxu0 %v1655
    %v1742 = vpop.f32.mrf.mxu0
    %v1743 = vadd.f32 %v1659, %v1742
    %1744 = vmatmul.f32.gmra.mxu0 %v1656
    %v1745 = vpop.f32.mrf.mxu0
    %v1746 = vadd.f32 %v1659, %v1745
    %1747 = vdwg.mxu0
    %1748 = vmatpush.msra.mxu0 %v1645
    %1749 = vmatpush.msra.mxu0 %v1641
    %1750 = vmatpush.msra.mxu0 %v1637
    %1751 = vmatpush.msra.mxu0 %v1633
    %1752 = vmatpush.msra.mxu0 %v1629
    %1753 = vmatpush.msra.mxu0 %v1625
    %1754 = vmatpush.msra.mxu0 %v1621
    %1755 = vmatpush.msra.mxu0 %v1617
    %1756 = vmatpush.msra.mxu0 %v1613
    %1757 = vmatpush.msra.mxu0 %v1609
    %1758 = vmatpush.msra.mxu0 %v1605
    %1759 = vmatpush.msra.mxu0 %v1601
    %1760 = vmatpush.msra.mxu0 %v1597
    %1761 = vmatpush.msra.mxu0 %v1593
    %1762 = vmatpush.msra.mxu0 %v1589
    %1763 = vmatpush.msra.mxu0 %v1585
    %1764 = vmatmul.f32.gmra.mxu0 %v1649
    %v1765 = vpop.f32.mrf.mxu0
    %v1766 = vadd.f32 %v1660, %v1765
    %1767 = vmatmul.f32.gmra.mxu0 %v1650
    %v1768 = vpop.f32.mrf.mxu0
    %v1769 = vadd.f32 %v1660, %v1768
    %1770 = vmatmul.f32.gmra.mxu0 %v1651
    %v1771 = vpop.f32.mrf.mxu0
    %v1772 = vadd.f32 %v1660, %v1771
    %1773 = vmatmul.f32.gmra.mxu0 %v1652
    %v1774 = vpop.f32.mrf.mxu0
    %v1775 = vadd.f32 %v1660, %v1774
    %1776 = vmatmul.f32.gmra.mxu0 %v1653
    %v1777 = vpop.f32.mrf.mxu0
    %v1778 = vadd.f32 %v1660, %v1777
    %1779 = vmatmul.f32.gmra.mxu0 %v1654
    %v1780 = vpop.f32.mrf.mxu0
    %v1781 = vadd.f32 %v1660, %v1780
    %1782 = vmatmul.f32.gmra.mxu0 %v1655
    %v1783 = vpop.f32.mrf.mxu0
    %v1784 = vadd.f32 %v1660, %v1783
    %1785 = vmatmul.f32.gmra.mxu0 %v1656
    %v1786 = vpop.f32.mrf.mxu0
    %v1787 = vadd.f32 %v1660, %v1786
    %1788 = vdwg.mxu0
    %1789 = vmatpush.msra.mxu0 %v1646
    %1790 = vmatpush.msra.mxu0 %v1642
    %1791 = vmatpush.msra.mxu0 %v1638
    %1792 = vmatpush.msra.mxu0 %v1634
    %1793 = vmatpush.msra.mxu0 %v1630
    %1794 = vmatpush.msra.mxu0 %v1626
    %1795 = vmatpush.msra.mxu0 %v1622
    %1796 = vmatpush.msra.mxu0 %v1618
    %1797 = vmatpush.msra.mxu0 %v1614
    %1798 = vmatpush.msra.mxu0 %v1610
    %1799 = vmatpush.msra.mxu0 %v1606
    %1800 = vmatpush.msra.mxu0 %v1602
    %1801 = vmatpush.msra.mxu0 %v1598
    %1802 = vmatpush.msra.mxu0 %v1594
    %1803 = vmatpush.msra.mxu0 %v1590
    %1804 = vmatpush.msra.mxu0 %v1586
    %1805 = vmatmul.f32.gmra.mxu0 %v1649
    %v1806 = vpop.f32.mrf.mxu0
    %v1807 = vadd.f32 %v1661, %v1806
    %1808 = vmatmul.f32.gmra.mxu0 %v1650
    %v1809 = vpop.f32.mrf.mxu0
    %v1810 = vadd.f32 %v1661, %v1809
    %1811 = vmatmul.f32.gmra.mxu0 %v1651
    %v1812 = vpop.f32.mrf.mxu0
    %v1813 = vadd.f32 %v1661, %v1812
    %1814 = vmatmul.f32.gmra.mxu0 %v1652
    %v1815 = vpop.f32.mrf.mxu0
    %v1816 = vadd.f32 %v1661, %v1815
    %1817 = vmatmul.f32.gmra.mxu0 %v1653
    %v1818 = vpop.f32.mrf.mxu0
    %v1819 = vadd.f32 %v1661, %v1818
    %1820 = vmatmul.f32.gmra.mxu0 %v1654
    %v1821 = vpop.f32.mrf.mxu0
    %v1822 = vadd.f32 %v1661, %v1821
    %1823 = vmatmul.f32.gmra.mxu0 %v1655
    %v1824 = vpop.f32.mrf.mxu0
    %v1825 = vadd.f32 %v1661, %v1824
    %1826 = vmatmul.f32.gmra.mxu0 %v1656
    %v1827 = vpop.f32.mrf.mxu0
    %v1828 = vadd.f32 %v1661, %v1827
    %1829 = vdwg.mxu0
    %1830 = vst [vmem:[#allocation4] sm:$0xff] %v1684
    %1831 = vst [vmem:[#allocation4 + $0x8] sm:$0xff] %v1725
    %1832 = vst [vmem:[#allocation4 + $0x10] sm:$0xff] %v1766
    %1833 = vst [vmem:[#allocation4 + $0x18] sm:$0xff] %v1807
    %1834 = vst [vmem:[#allocation4 + $0x20] sm:$0xff] %v1687
    %1835 = vst [vmem:[#allocation4 + $0x28] sm:$0xff] %v1728
    %1836 = vst [vmem:[#allocation4 + $0x30] sm:$0xff] %v1769
    %1837 = vst [vmem:[#allocation4 + $0x38] sm:$0xff] %v1810
    %1838 = vst [vmem:[#allocation4 + $0x40] sm:$0xff] %v1690
    %1839 = vst [vmem:[#allocation4 + $0x48] sm:$0xff] %v1731
    %1840 = vst [vmem:[#allocation4 + $0x50] sm:$0xff] %v1772
    %1841 = vst [vmem:[#allocation4 + $0x58] sm:$0xff] %v1813
    %1842 = vst [vmem:[#allocation4 + $0x60] sm:$0xff] %v1693
    %1843 = vst [vmem:[#allocation4 + $0x68] sm:$0xff] %v1734
    %1844 = vst [vmem:[#allocation4 + $0x70] sm:$0xff] %v1775
    %1845 = vst [vmem:[#allocation4 + $0x78] sm:$0xff] %v1816
    %1846 = vst [vmem:[#allocation4 + $0x80] sm:$0xff] %v1696
    %1847 = vst [vmem:[#allocation4 + $0x88] sm:$0xff] %v1737
    %1848 = vst [vmem:[#allocation4 + $0x90] sm:$0xff] %v1778
    %1849 = vst [vmem:[#allocation4 + $0x98] sm:$0xff] %v1819
    %1850 = vst [vmem:[#allocation4 + $0xa0] sm:$0xff] %v1699
    %1851 = vst [vmem:[#allocation4 + $0xa8] sm:$0xff] %v1740
    %1852 = vst [vmem:[#allocation4 + $0xb0] sm:$0xff] %v1781
    %1853 = vst [vmem:[#allocation4 + $0xb8] sm:$0xff] %v1822
    %1854 = vst [vmem:[#allocation4 + $0xc0] sm:$0xff] %v1702
    %1855 = vst [vmem:[#allocation4 + $0xc8] sm:$0xff] %v1743
    %1856 = vst [vmem:[#allocation4 + $0xd0] sm:$0xff] %v1784
    %1857 = vst [vmem:[#allocation4 + $0xd8] sm:$0xff] %v1825
    %1858 = vst [vmem:[#allocation4 + $0xe0] sm:$0xff] %v1705
    %1859 = vst [vmem:[#allocation4 + $0xe8] sm:$0xff] %v1746
    %1860 = vst [vmem:[#allocation4 + $0xf0] sm:$0xff] %v1787
    %1861 = vst [vmem:[#allocation4 + $0xf8] sm:$0xff] %v1828
    %v1862 = vld [vmem:[%s1582 + $0x200] sm:$0xff]
    %v1863 = vld [vmem:[%s1582 + $0x208] sm:$0xff]
    %v1864 = vld [vmem:[%s1582 + $0x210] sm:$0xff]
    %v1865 = vld [vmem:[%s1582 + $0x218] sm:$0xff]
    %v1866 = vld [vmem:[%s1582 + $0x220] sm:$0xff]
    %v1867 = vld [vmem:[%s1582 + $0x228] sm:$0xff]
    %v1868 = vld [vmem:[%s1582 + $0x230] sm:$0xff]
    %v1869 = vld [vmem:[%s1582 + $0x238] sm:$0xff]
    %v1870 = vld [vmem:[%s1582 + $0x240] sm:$0xff]
    %v1871 = vld [vmem:[%s1582 + $0x248] sm:$0xff]
    %v1872 = vld [vmem:[%s1582 + $0x250] sm:$0xff]
    %v1873 = vld [vmem:[%s1582 + $0x258] sm:$0xff]
    %v1874 = vld [vmem:[%s1582 + $0x260] sm:$0xff]
    %v1875 = vld [vmem:[%s1582 + $0x268] sm:$0xff]
    %v1876 = vld [vmem:[%s1582 + $0x270] sm:$0xff]
    %v1877 = vld [vmem:[%s1582 + $0x278] sm:$0xff]
    %v1878 = vld [vmem:[#allocation4] sm:$0xff]
    %v1879 = vld [vmem:[#allocation4 + $0x8] sm:$0xff]
    %v1880 = vld [vmem:[#allocation4 + $0x10] sm:$0xff]
    %v1881 = vld [vmem:[#allocation4 + $0x18] sm:$0xff]
    %1882 = vmatpush.msra.mxu0 0.0
    %1883 = vmatpush.msra.mxu0 0.0
    %1884 = vmatpush.msra.mxu0 0.0
    %1885 = vmatpush.msra.mxu0 0.0
    %1886 = vmatpush.msra.mxu0 0.0
    %1887 = vmatpush.msra.mxu0 0.0
    %1888 = vmatpush.msra.mxu0 0.0
    %1889 = vmatpush.msra.mxu0 0.0
    %1890 = vmatpush.msra.mxu0 0.0
    %1891 = vmatpush.msra.mxu0 0.0
    %1892 = vmatpush.msra.mxu0 0.0
    %1893 = vmatpush.msra.mxu0 0.0
    %1894 = vmatpush.msra.mxu0 %v1874
    %1895 = vmatpush.msra.mxu0 %v1870
    %1896 = vmatpush.msra.mxu0 %v1866
    %1897 = vmatpush.msra.mxu0 %v1862
    %1898 = vmatmul.f32.gmra.mxu0 %v347
    %v1899 = vpop.f32.mrf.mxu0
    %v1900 = vadd.f32 0.0, %v1899
    %1901 = vdwg.mxu0
    %1902 = vmatpush.msra.mxu0 0.0
    %1903 = vmatpush.msra.mxu0 0.0
    %1904 = vmatpush.msra.mxu0 0.0
    %1905 = vmatpush.msra.mxu0 0.0
    %1906 = vmatpush.msra.mxu0 0.0
    %1907 = vmatpush.msra.mxu0 0.0
    %1908 = vmatpush.msra.mxu0 0.0
    %1909 = vmatpush.msra.mxu0 0.0
    %1910 = vmatpush.msra.mxu0 0.0
    %1911 = vmatpush.msra.mxu0 0.0
    %1912 = vmatpush.msra.mxu0 0.0
    %1913 = vmatpush.msra.mxu0 0.0
    %1914 = vmatpush.msra.mxu0 %v1875
    %1915 = vmatpush.msra.mxu0 %v1871
    %1916 = vmatpush.msra.mxu0 %v1867
    %1917 = vmatpush.msra.mxu0 %v1863
    %1918 = vmatmul.f32.gmra.mxu0 %v347
    %v1919 = vpop.f32.mrf.mxu0
    %v1920 = vadd.f32 0.0, %v1919
    %1921 = vdwg.mxu0
    %1922 = vmatpush.msra.mxu0 0.0
    %1923 = vmatpush.msra.mxu0 0.0
    %1924 = vmatpush.msra.mxu0 0.0
    %1925 = vmatpush.msra.mxu0 0.0
    %1926 = vmatpush.msra.mxu0 0.0
    %1927 = vmatpush.msra.mxu0 0.0
    %1928 = vmatpush.msra.mxu0 0.0
    %1929 = vmatpush.msra.mxu0 0.0
    %1930 = vmatpush.msra.mxu0 0.0
    %1931 = vmatpush.msra.mxu0 0.0
    %1932 = vmatpush.msra.mxu0 0.0
    %1933 = vmatpush.msra.mxu0 0.0
    %1934 = vmatpush.msra.mxu0 %v1876
    %1935 = vmatpush.msra.mxu0 %v1872
    %1936 = vmatpush.msra.mxu0 %v1868
    %1937 = vmatpush.msra.mxu0 %v1864
    %1938 = vmatmul.f32.gmra.mxu0 %v347
    %v1939 = vpop.f32.mrf.mxu0
    %v1940 = vadd.f32 0.0, %v1939
    %1941 = vdwg.mxu0
    %1942 = vmatpush.msra.mxu0 0.0
    %1943 = vmatpush.msra.mxu0 0.0
    %1944 = vmatpush.msra.mxu0 0.0
    %1945 = vmatpush.msra.mxu0 0.0
    %1946 = vmatpush.msra.mxu0 0.0
    %1947 = vmatpush.msra.mxu0 0.0
    %1948 = vmatpush.msra.mxu0 0.0
    %1949 = vmatpush.msra.mxu0 0.0
    %1950 = vmatpush.msra.mxu0 0.0
    %1951 = vmatpush.msra.mxu0 0.0
    %1952 = vmatpush.msra.mxu0 0.0
    %1953 = vmatpush.msra.mxu0 0.0
    %1954 = vmatpush.msra.mxu0 %v1877
    %1955 = vmatpush.msra.mxu0 %v1873
    %1956 = vmatpush.msra.mxu0 %v1869
    %1957 = vmatpush.msra.mxu0 %v1865
    %1958 = vmatmul.f32.gmra.mxu0 %v347
    %v1959 = vpop.f32.mrf.mxu0
    %v1960 = vadd.f32 0.0, %v1959
    %1961 = vdwg.mxu0
    %v1962 = vadd.f32 %v1878, %v1900
    %v1963 = vadd.f32 %v1879, %v1920
    %v1964 = vadd.f32 %v1880, %v1940
    %v1965 = vadd.f32 %v1881, %v1960
    %v1966 = vxor.u32 %v1962, 2147483648
    %v1967 = vmul.f32 %v1966, 1.442695
    %v1968 = vpow.pop %v1967
    %v1969 = vadd.f32 %v1968, 1.0
    %v1970 = vrcp.pop %v1969
    %v1971 = vmul.f32 %v1969, %v1970
    %v1972 = vsub.f32 1.0, %v1971
    %v1973 = vmul.f32 %v1970, %v1972
    %v1974 = vadd.f32 %v1970, %v1973
    %vm1975 = vweird.f32 %v1969
    %vm1976 = vweird.f32 %v1970
    %vm1977 = vmor %vm1975, %vm1976
    %v1978 = vsel %vm1977, %v1970, %v1974
    %v1979 = vand.u32 2147483647, %v1969
    %vm1980 = vcmp.eq.f32.partialorder %v1979, 8.507059e+37
    %v1981 = vand.u32 %v1969, 2147483648
    %v1982 = vor.u32 1.1754944e-38, %v1981
    %v1983 = vsel %vm1980, %v1982, %v1978
    %v1984 = vmul.f32 1.0, %v1983
    %v1985 = vxor.u32 %v1963, 2147483648
    %v1986 = vmul.f32 %v1985, 1.442695
    %v1987 = vpow.pop %v1986
    %v1988 = vadd.f32 %v1987, 1.0
    %v1989 = vrcp.pop %v1988
    %v1990 = vmul.f32 %v1988, %v1989
    %v1991 = vsub.f32 1.0, %v1990
    %v1992 = vmul.f32 %v1989, %v1991
    %v1993 = vadd.f32 %v1989, %v1992
    %vm1994 = vweird.f32 %v1988
    %vm1995 = vweird.f32 %v1989
    %vm1996 = vmor %vm1994, %vm1995
    %v1997 = vsel %vm1996, %v1989, %v1993
    %v1998 = vand.u32 2147483647, %v1988
    %vm1999 = vcmp.eq.f32.partialorder %v1998, 8.507059e+37
    %v2000 = vand.u32 %v1988, 2147483648
    %v2001 = vor.u32 1.1754944e-38, %v2000
    %v2002 = vsel %vm1999, %v2001, %v1997
    %v2003 = vmul.f32 1.0, %v2002
    %v2004 = vtanh.pop %v1964
    %v2005 = vxor.u32 %v1965, 2147483648
    %v2006 = vmul.f32 %v2005, 1.442695
    %v2007 = vpow.pop %v2006
    %v2008 = vadd.f32 %v2007, 1.0
    %v2009 = vrcp.pop %v2008
    %v2010 = vmul.f32 %v2008, %v2009
    %v2011 = vsub.f32 1.0, %v2010
    %v2012 = vmul.f32 %v2009, %v2011
    %v2013 = vadd.f32 %v2009, %v2012
    %vm2014 = vweird.f32 %v2008
    %vm2015 = vweird.f32 %v2009
    %vm2016 = vmor %vm2014, %vm2015
    %v2017 = vsel %vm2016, %v2009, %v2013
    %v2018 = vand.u32 2147483647, %v2008
    %vm2019 = vcmp.eq.f32.partialorder %v2018, 8.507059e+37
    %v2020 = vand.u32 %v2008, 2147483648
    %v2021 = vor.u32 1.1754944e-38, %v2020
    %v2022 = vsel %vm2019, %v2021, %v2017
    %v2023 = vmul.f32 1.0, %v2022
    %v2024 = vmul.f32 %v2003, 0.0
    %v2025 = vmul.f32 %v1984, %v2004
    %v2026 = vadd.f32 %v2024, %v2025
    %v2027 = vtanh.pop %v2026
    %v2028 = vmul.f32 %v2023, %v2027
    %2029 = vst [vmem:[#allocation3] sm:$0xff] %v2028
    %v2030 = vld [vmem:[#allocation4 + $0x20] sm:$0xff]
    %v2031 = vld [vmem:[#allocation4 + $0x28] sm:$0xff]
    %v2032 = vld [vmem:[#allocation4 + $0x30] sm:$0xff]
    %v2033 = vld [vmem:[#allocation4 + $0x38] sm:$0xff]
    %v2035 = vsel %vm345, %v2028, 0
    %2037 = vmatpush.msra.mxu0 0.0
    %2038 = vmatpush.msra.mxu0 0.0
    %2039 = vmatpush.msra.mxu0 0.0
    %2040 = vmatpush.msra.mxu0 0.0
    %2041 = vmatpush.msra.mxu0 0.0
    %2042 = vmatpush.msra.mxu0 0.0
    %2043 = vmatpush.msra.mxu0 0.0
    %2044 = vmatpush.msra.mxu0 0.0
    %2045 = vmatpush.msra.mxu0 0.0
    %2046 = vmatpush.msra.mxu0 0.0
    %2047 = vmatpush.msra.mxu0 0.0
    %2048 = vmatpush.msra.mxu0 0.0
    %2049 = vmatpush.msra.mxu0 %v1874
    %2050 = vmatpush.msra.mxu0 %v1870
    %2051 = vmatpush.msra.mxu0 %v1866
    %2052 = vmatpush.msra.mxu0 %v1862
    %2053 = vmatmul.f32.gmra.mxu0 %v2035
    %v2054 = vpop.f32.mrf.mxu0
    %v2055 = vadd.f32 0.0, %v2054
    %2056 = vdwg.mxu0
    %2057 = vmatpush.msra.mxu0 0.0
    %2058 = vmatpush.msra.mxu0 0.0
    %2059 = vmatpush.msra.mxu0 0.0
    %2060 = vmatpush.msra.mxu0 0.0
    %2061 = vmatpush.msra.mxu0 0.0
    %2062 = vmatpush.msra.mxu0 0.0
    %2063 = vmatpush.msra.mxu0 0.0
    %2064 = vmatpush.msra.mxu0 0.0
    %2065 = vmatpush.msra.mxu0 0.0
    %2066 = vmatpush.msra.mxu0 0.0
    %2067 = vmatpush.msra.mxu0 0.0
    %2068 = vmatpush.msra.mxu0 0.0
    %2069 = vmatpush.msra.mxu0 %v1875
    %2070 = vmatpush.msra.mxu0 %v1871
    %2071 = vmatpush.msra.mxu0 %v1867
    %2072 = vmatpush.msra.mxu0 %v1863
    %2073 = vmatmul.f32.gmra.mxu0 %v2035
    %v2074 = vpop.f32.mrf.mxu0
    %v2075 = vadd.f32 0.0, %v2074
    %2076 = vdwg.mxu0
    %2077 = vmatpush.msra.mxu0 0.0
    %2078 = vmatpush.msra.mxu0 0.0
    %2079 = vmatpush.msra.mxu0 0.0
    %2080 = vmatpush.msra.mxu0 0.0
    %2081 = vmatpush.msra.mxu0 0.0
    %2082 = vmatpush.msra.mxu0 0.0
    %2083 = vmatpush.msra.mxu0 0.0
    %2084 = vmatpush.msra.mxu0 0.0
    %2085 = vmatpush.msra.mxu0 0.0
    %2086 = vmatpush.msra.mxu0 0.0
    %2087 = vmatpush.msra.mxu0 0.0
    %2088 = vmatpush.msra.mxu0 0.0
    %2089 = vmatpush.msra.mxu0 %v1876
    %2090 = vmatpush.msra.mxu0 %v1872
    %2091 = vmatpush.msra.mxu0 %v1868
    %2092 = vmatpush.msra.mxu0 %v1864
    %2093 = vmatmul.f32.gmra.mxu0 %v2035
    %v2094 = vpop.f32.mrf.mxu0
    %v2095 = vadd.f32 0.0, %v2094
    %2096 = vdwg.mxu0
    %2097 = vmatpush.msra.mxu0 0.0
    %2098 = vmatpush.msra.mxu0 0.0
    %2099 = vmatpush.msra.mxu0 0.0
    %2100 = vmatpush.msra.mxu0 0.0
    %2101 = vmatpush.msra.mxu0 0.0
    %2102 = vmatpush.msra.mxu0 0.0
    %2103 = vmatpush.msra.mxu0 0.0
    %2104 = vmatpush.msra.mxu0 0.0
    %2105 = vmatpush.msra.mxu0 0.0
    %2106 = vmatpush.msra.mxu0 0.0
    %2107 = vmatpush.msra.mxu0 0.0
    %2108 = vmatpush.msra.mxu0 0.0
    %2109 = vmatpush.msra.mxu0 %v1877
    %2110 = vmatpush.msra.mxu0 %v1873
    %2111 = vmatpush.msra.mxu0 %v1869
    %2112 = vmatpush.msra.mxu0 %v1865
    %2113 = vmatmul.f32.gmra.mxu0 %v2035
    %v2114 = vpop.f32.mrf.mxu0
    %v2115 = vadd.f32 0.0, %v2114
    %2116 = vdwg.mxu0
    %v2117 = vadd.f32 %v2030, %v2055
    %v2118 = vadd.f32 %v2031, %v2075
    %v2119 = vadd.f32 %v2032, %v2095
    %v2120 = vadd.f32 %v2033, %v2115
    %v2121 = vxor.u32 %v2117, 2147483648
    %v2122 = vmul.f32 %v2121, 1.442695
    %v2123 = vpow.pop %v2122
    %v2124 = vadd.f32 %v2123, 1.0
    %v2125 = vrcp.pop %v2124
    %v2126 = vmul.f32 %v2124, %v2125
    %v2127 = vsub.f32 1.0, %v2126
    %v2128 = vmul.f32 %v2125, %v2127
    %v2129 = vadd.f32 %v2125, %v2128
    %vm2130 = vweird.f32 %v2124
    %vm2131 = vweird.f32 %v2125
    %vm2132 = vmor %vm2130, %vm2131
    %v2133 = vsel %vm2132, %v2125, %v2129
    %v2134 = vand.u32 2147483647, %v2124
    %vm2135 = vcmp.eq.f32.partialorder %v2134, 8.507059e+37
    %v2136 = vand.u32 %v2124, 2147483648
    %v2137 = vor.u32 1.1754944e-38, %v2136
    %v2138 = vsel %vm2135, %v2137, %v2133
    %v2139 = vmul.f32 1.0, %v2138
    %v2140 = vxor.u32 %v2118, 2147483648
    %v2141 = vmul.f32 %v2140, 1.442695
    %v2142 = vpow.pop %v2141
    %v2143 = vadd.f32 %v2142, 1.0
    %v2144 = vrcp.pop %v2143
    %v2145 = vmul.f32 %v2143, %v2144
    %v2146 = vsub.f32 1.0, %v2145
    %v2147 = vmul.f32 %v2144, %v2146
    %v2148 = vadd.f32 %v2144, %v2147
    %vm2149 = vweird.f32 %v2143
    %vm2150 = vweird.f32 %v2144
    %vm2151 = vmor %vm2149, %vm2150
    %v2152 = vsel %vm2151, %v2144, %v2148
    %v2153 = vand.u32 2147483647, %v2143
    %vm2154 = vcmp.eq.f32.partialorder %v2153, 8.507059e+37
    %v2155 = vand.u32 %v2143, 2147483648
    %v2156 = vor.u32 1.1754944e-38, %v2155
    %v2157 = vsel %vm2154, %v2156, %v2152
    %v2158 = vmul.f32 1.0, %v2157
    %v2159 = vtanh.pop %v2119
    %v2160 = vxor.u32 %v2120, 2147483648
    %v2161 = vmul.f32 %v2160, 1.442695
    %v2162 = vpow.pop %v2161
    %v2163 = vadd.f32 %v2162, 1.0
    %v2164 = vrcp.pop %v2163
    %v2165 = vmul.f32 %v2163, %v2164
    %v2166 = vsub.f32 1.0, %v2165
    %v2167 = vmul.f32 %v2164, %v2166
    %v2168 = vadd.f32 %v2164, %v2167
    %vm2169 = vweird.f32 %v2163
    %vm2170 = vweird.f32 %v2164
    %vm2171 = vmor %vm2169, %vm2170
    %v2172 = vsel %vm2171, %v2164, %v2168
    %v2173 = vand.u32 2147483647, %v2163
    %vm2174 = vcmp.eq.f32.partialorder %v2173, 8.507059e+37
    %v2175 = vand.u32 %v2163, 2147483648
    %v2176 = vor.u32 1.1754944e-38, %v2175
    %v2177 = vsel %vm2174, %v2176, %v2172
    %v2178 = vmul.f32 1.0, %v2177
    %v2179 = vmul.f32 %v2158, %v2026
    %v2180 = vmul.f32 %v2139, %v2159
    %v2181 = vadd.f32 %v2179, %v2180
    %v2182 = vtanh.pop %v2181
    %v2183 = vmul.f32 %v2178, %v2182
    %2184 = vst [vmem:[#allocation3 + $0x8] sm:$0xff] %v2183
    %v2185 = vld [vmem:[#allocation4 + $0x40] sm:$0xff]
    %v2186 = vld [vmem:[#allocation4 + $0x48] sm:$0xff]
    %v2187 = vld [vmem:[#allocation4 + $0x50] sm:$0xff]
    %v2188 = vld [vmem:[#allocation4 + $0x58] sm:$0xff]
    %v2190 = vsel %vm345, %v2183, 0
    %2192 = vmatpush.msra.mxu0 0.0
    %2193 = vmatpush.msra.mxu0 0.0
    %2194 = vmatpush.msra.mxu0 0.0
    %2195 = vmatpush.msra.mxu0 0.0
    %2196 = vmatpush.msra.mxu0 0.0
    %2197 = vmatpush.msra.mxu0 0.0
    %2198 = vmatpush.msra.mxu0 0.0
    %2199 = vmatpush.msra.mxu0 0.0
    %2200 = vmatpush.msra.mxu0 0.0
    %2201 = vmatpush.msra.mxu0 0.0
    %2202 = vmatpush.msra.mxu0 0.0
    %2203 = vmatpush.msra.mxu0 0.0
    %2204 = vmatpush.msra.mxu0 %v1874
    %2205 = vmatpush.msra.mxu0 %v1870
    %2206 = vmatpush.msra.mxu0 %v1866
    %2207 = vmatpush.msra.mxu0 %v1862
    %2208 = vmatmul.f32.gmra.mxu0 %v2190
    %v2209 = vpop.f32.mrf.mxu0
    %v2210 = vadd.f32 0.0, %v2209
    %2211 = vdwg.mxu0
    %2212 = vmatpush.msra.mxu0 0.0
    %2213 = vmatpush.msra.mxu0 0.0
    %2214 = vmatpush.msra.mxu0 0.0
    %2215 = vmatpush.msra.mxu0 0.0
    %2216 = vmatpush.msra.mxu0 0.0
    %2217 = vmatpush.msra.mxu0 0.0
    %2218 = vmatpush.msra.mxu0 0.0
    %2219 = vmatpush.msra.mxu0 0.0
    %2220 = vmatpush.msra.mxu0 0.0
    %2221 = vmatpush.msra.mxu0 0.0
    %2222 = vmatpush.msra.mxu0 0.0
    %2223 = vmatpush.msra.mxu0 0.0
    %2224 = vmatpush.msra.mxu0 %v1875
    %2225 = vmatpush.msra.mxu0 %v1871
    %2226 = vmatpush.msra.mxu0 %v1867
    %2227 = vmatpush.msra.mxu0 %v1863
    %2228 = vmatmul.f32.gmra.mxu0 %v2190
    %v2229 = vpop.f32.mrf.mxu0
    %v2230 = vadd.f32 0.0, %v2229
    %2231 = vdwg.mxu0
    %2232 = vmatpush.msra.mxu0 0.0
    %2233 = vmatpush.msra.mxu0 0.0
    %2234 = vmatpush.msra.mxu0 0.0
    %2235 = vmatpush.msra.mxu0 0.0
    %2236 = vmatpush.msra.mxu0 0.0
    %2237 = vmatpush.msra.mxu0 0.0
    %2238 = vmatpush.msra.mxu0 0.0
    %2239 = vmatpush.msra.mxu0 0.0
    %2240 = vmatpush.msra.mxu0 0.0
    %2241 = vmatpush.msra.mxu0 0.0
    %2242 = vmatpush.msra.mxu0 0.0
    %2243 = vmatpush.msra.mxu0 0.0
    %2244 = vmatpush.msra.mxu0 %v1876
    %2245 = vmatpush.msra.mxu0 %v1872
    %2246 = vmatpush.msra.mxu0 %v1868
    %2247 = vmatpush.msra.mxu0 %v1864
    %2248 = vmatmul.f32.gmra.mxu0 %v2190
    %v2249 = vpop.f32.mrf.mxu0
    %v2250 = vadd.f32 0.0, %v2249
    %2251 = vdwg.mxu0
    %2252 = vmatpush.msra.mxu0 0.0
    %2253 = vmatpush.msra.mxu0 0.0
    %2254 = vmatpush.msra.mxu0 0.0
    %2255 = vmatpush.msra.mxu0 0.0
    %2256 = vmatpush.msra.mxu0 0.0
    %2257 = vmatpush.msra.mxu0 0.0
    %2258 = vmatpush.msra.mxu0 0.0
    %2259 = vmatpush.msra.mxu0 0.0
    %2260 = vmatpush.msra.mxu0 0.0
    %2261 = vmatpush.msra.mxu0 0.0
    %2262 = vmatpush.msra.mxu0 0.0
    %2263 = vmatpush.msra.mxu0 0.0
    %2264 = vmatpush.msra.mxu0 %v1877
    %2265 = vmatpush.msra.mxu0 %v1873
    %2266 = vmatpush.msra.mxu0 %v1869
    %2267 = vmatpush.msra.mxu0 %v1865
    %2268 = vmatmul.f32.gmra.mxu0 %v2190
    %v2269 = vpop.f32.mrf.mxu0
    %v2270 = vadd.f32 0.0, %v2269
    %2271 = vdwg.mxu0
    %v2272 = vadd.f32 %v2185, %v2210
    %v2273 = vadd.f32 %v2186, %v2230
    %v2274 = vadd.f32 %v2187, %v2250
    %v2275 = vadd.f32 %v2188, %v2270
    %v2276 = vxor.u32 %v2272, 2147483648
    %v2277 = vmul.f32 %v2276, 1.442695
    %v2278 = vpow.pop %v2277
    %v2279 = vadd.f32 %v2278, 1.0
    %v2280 = vrcp.pop %v2279
    %v2281 = vmul.f32 %v2279, %v2280
    %v2282 = vsub.f32 1.0, %v2281
    %v2283 = vmul.f32 %v2280, %v2282
    %v2284 = vadd.f32 %v2280, %v2283
    %vm2285 = vweird.f32 %v2279
    %vm2286 = vweird.f32 %v2280
    %vm2287 = vmor %vm2285, %vm2286
    %v2288 = vsel %vm2287, %v2280, %v2284
    %v2289 = vand.u32 2147483647, %v2279
    %vm2290 = vcmp.eq.f32.partialorder %v2289, 8.507059e+37
    %v2291 = vand.u32 %v2279, 2147483648
    %v2292 = vor.u32 1.1754944e-38, %v2291
    %v2293 = vsel %vm2290, %v2292, %v2288
    %v2294 = vmul.f32 1.0, %v2293
    %v2295 = vxor.u32 %v2273, 2147483648
    %v2296 = vmul.f32 %v2295, 1.442695
    %v2297 = vpow.pop %v2296
    %v2298 = vadd.f32 %v2297, 1.0
    %v2299 = vrcp.pop %v2298
    %v2300 = vmul.f32 %v2298, %v2299
    %v2301 = vsub.f32 1.0, %v2300
    %v2302 = vmul.f32 %v2299, %v2301
    %v2303 = vadd.f32 %v2299, %v2302
    %vm2304 = vweird.f32 %v2298
    %vm2305 = vweird.f32 %v2299
    %vm2306 = vmor %vm2304, %vm2305
    %v2307 = vsel %vm2306, %v2299, %v2303
    %v2308 = vand.u32 2147483647, %v2298
    %vm2309 = vcmp.eq.f32.partialorder %v2308, 8.507059e+37
    %v2310 = vand.u32 %v2298, 2147483648
    %v2311 = vor.u32 1.1754944e-38, %v2310
    %v2312 = vsel %vm2309, %v2311, %v2307
    %v2313 = vmul.f32 1.0, %v2312
    %v2314 = vtanh.pop %v2274
    %v2315 = vxor.u32 %v2275, 2147483648
    %v2316 = vmul.f32 %v2315, 1.442695
    %v2317 = vpow.pop %v2316
    %v2318 = vadd.f32 %v2317, 1.0
    %v2319 = vrcp.pop %v2318
    %v2320 = vmul.f32 %v2318, %v2319
    %v2321 = vsub.f32 1.0, %v2320
    %v2322 = vmul.f32 %v2319, %v2321
    %v2323 = vadd.f32 %v2319, %v2322
    %vm2324 = vweird.f32 %v2318
    %vm2325 = vweird.f32 %v2319
    %vm2326 = vmor %vm2324, %vm2325
    %v2327 = vsel %vm2326, %v2319, %v2323
    %v2328 = vand.u32 2147483647, %v2318
    %vm2329 = vcmp.eq.f32.partialorder %v2328, 8.507059e+37
    %v2330 = vand.u32 %v2318, 2147483648
    %v2331 = vor.u32 1.1754944e-38, %v2330
    %v2332 = vsel %vm2329, %v2331, %v2327
    %v2333 = vmul.f32 1.0, %v2332
    %v2334 = vmul.f32 %v2313, %v2181
    %v2335 = vmul.f32 %v2294, %v2314
    %v2336 = vadd.f32 %v2334, %v2335
    %v2337 = vtanh.pop %v2336
    %v2338 = vmul.f32 %v2333, %v2337
    %2339 = vst [vmem:[#allocation3 + $0x10] sm:$0xff] %v2338
    %v2340 = vld [vmem:[#allocation4 + $0x60] sm:$0xff]
    %v2341 = vld [vmem:[#allocation4 + $0x68] sm:$0xff]
    %v2342 = vld [vmem:[#allocation4 + $0x70] sm:$0xff]
    %v2343 = vld [vmem:[#allocation4 + $0x78] sm:$0xff]
    %v2345 = vsel %vm345, %v2338, 0
    %2347 = vmatpush.msra.mxu0 0.0
    %2348 = vmatpush.msra.mxu0 0.0
    %2349 = vmatpush.msra.mxu0 0.0
    %2350 = vmatpush.msra.mxu0 0.0
    %2351 = vmatpush.msra.mxu0 0.0
    %2352 = vmatpush.msra.mxu0 0.0
    %2353 = vmatpush.msra.mxu0 0.0
    %2354 = vmatpush.msra.mxu0 0.0
    %2355 = vmatpush.msra.mxu0 0.0
    %2356 = vmatpush.msra.mxu0 0.0
    %2357 = vmatpush.msra.mxu0 0.0
    %2358 = vmatpush.msra.mxu0 0.0
    %2359 = vmatpush.msra.mxu0 %v1874
    %2360 = vmatpush.msra.mxu0 %v1870
    %2361 = vmatpush.msra.mxu0 %v1866
    %2362 = vmatpush.msra.mxu0 %v1862
    %2363 = vmatmul.f32.gmra.mxu0 %v2345
    %v2364 = vpop.f32.mrf.mxu0
    %v2365 = vadd.f32 0.0, %v2364
    %2366 = vdwg.mxu0
    %2367 = vmatpush.msra.mxu0 0.0
    %2368 = vmatpush.msra.mxu0 0.0
    %2369 = vmatpush.msra.mxu0 0.0
    %2370 = vmatpush.msra.mxu0 0.0
    %2371 = vmatpush.msra.mxu0 0.0
    %2372 = vmatpush.msra.mxu0 0.0
    %2373 = vmatpush.msra.mxu0 0.0
    %2374 = vmatpush.msra.mxu0 0.0
    %2375 = vmatpush.msra.mxu0 0.0
    %2376 = vmatpush.msra.mxu0 0.0
    %2377 = vmatpush.msra.mxu0 0.0
    %2378 = vmatpush.msra.mxu0 0.0
    %2379 = vmatpush.msra.mxu0 %v1875
    %2380 = vmatpush.msra.mxu0 %v1871
    %2381 = vmatpush.msra.mxu0 %v1867
    %2382 = vmatpush.msra.mxu0 %v1863
    %2383 = vmatmul.f32.gmra.mxu0 %v2345
    %v2384 = vpop.f32.mrf.mxu0
    %v2385 = vadd.f32 0.0, %v2384
    %2386 = vdwg.mxu0
    %2387 = vmatpush.msra.mxu0 0.0
    %2388 = vmatpush.msra.mxu0 0.0
    %2389 = vmatpush.msra.mxu0 0.0
    %2390 = vmatpush.msra.mxu0 0.0
    %2391 = vmatpush.msra.mxu0 0.0
    %2392 = vmatpush.msra.mxu0 0.0
    %2393 = vmatpush.msra.mxu0 0.0
    %2394 = vmatpush.msra.mxu0 0.0
    %2395 = vmatpush.msra.mxu0 0.0
    %2396 = vmatpush.msra.mxu0 0.0
    %2397 = vmatpush.msra.mxu0 0.0
    %2398 = vmatpush.msra.mxu0 0.0
    %2399 = vmatpush.msra.mxu0 %v1876
    %2400 = vmatpush.msra.mxu0 %v1872
    %2401 = vmatpush.msra.mxu0 %v1868
    %2402 = vmatpush.msra.mxu0 %v1864
    %2403 = vmatmul.f32.gmra.mxu0 %v2345
    %v2404 = vpop.f32.mrf.mxu0
    %v2405 = vadd.f32 0.0, %v2404
    %2406 = vdwg.mxu0
    %2407 = vmatpush.msra.mxu0 0.0
    %2408 = vmatpush.msra.mxu0 0.0
    %2409 = vmatpush.msra.mxu0 0.0
    %2410 = vmatpush.msra.mxu0 0.0
    %2411 = vmatpush.msra.mxu0 0.0
    %2412 = vmatpush.msra.mxu0 0.0
    %2413 = vmatpush.msra.mxu0 0.0
    %2414 = vmatpush.msra.mxu0 0.0
    %2415 = vmatpush.msra.mxu0 0.0
    %2416 = vmatpush.msra.mxu0 0.0
    %2417 = vmatpush.msra.mxu0 0.0
    %2418 = vmatpush.msra.mxu0 0.0
    %2419 = vmatpush.msra.mxu0 %v1877
    %2420 = vmatpush.msra.mxu0 %v1873
    %2421 = vmatpush.msra.mxu0 %v1869
    %2422 = vmatpush.msra.mxu0 %v1865
    %2423 = vmatmul.f32.gmra.mxu0 %v2345
    %v2424 = vpop.f32.mrf.mxu0
    %v2425 = vadd.f32 0.0, %v2424
    %2426 = vdwg.mxu0
    %v2427 = vadd.f32 %v2340, %v2365
    %v2428 = vadd.f32 %v2341, %v2385
    %v2429 = vadd.f32 %v2342, %v2405
    %v2430 = vadd.f32 %v2343, %v2425
    %v2431 = vxor.u32 %v2427, 2147483648
    %v2432 = vmul.f32 %v2431, 1.442695
    %v2433 = vpow.pop %v2432
    %v2434 = vadd.f32 %v2433, 1.0
    %v2435 = vrcp.pop %v2434
    %v2436 = vmul.f32 %v2434, %v2435
    %v2437 = vsub.f32 1.0, %v2436
    %v2438 = vmul.f32 %v2435, %v2437
    %v2439 = vadd.f32 %v2435, %v2438
    %vm2440 = vweird.f32 %v2434
    %vm2441 = vweird.f32 %v2435
    %vm2442 = vmor %vm2440, %vm2441
    %v2443 = vsel %vm2442, %v2435, %v2439
    %v2444 = vand.u32 2147483647, %v2434
    %vm2445 = vcmp.eq.f32.partialorder %v2444, 8.507059e+37
    %v2446 = vand.u32 %v2434, 2147483648
    %v2447 = vor.u32 1.1754944e-38, %v2446
    %v2448 = vsel %vm2445, %v2447, %v2443
    %v2449 = vmul.f32 1.0, %v2448
    %v2450 = vxor.u32 %v2428, 2147483648
    %v2451 = vmul.f32 %v2450, 1.442695
    %v2452 = vpow.pop %v2451
    %v2453 = vadd.f32 %v2452, 1.0
    %v2454 = vrcp.pop %v2453
    %v2455 = vmul.f32 %v2453, %v2454
    %v2456 = vsub.f32 1.0, %v2455
    %v2457 = vmul.f32 %v2454, %v2456
    %v2458 = vadd.f32 %v2454, %v2457
    %vm2459 = vweird.f32 %v2453
    %vm2460 = vweird.f32 %v2454
    %vm2461 = vmor %vm2459, %vm2460
    %v2462 = vsel %vm2461, %v2454, %v2458
    %v2463 = vand.u32 2147483647, %v2453
    %vm2464 = vcmp.eq.f32.partialorder %v2463, 8.507059e+37
    %v2465 = vand.u32 %v2453, 2147483648
    %v2466 = vor.u32 1.1754944e-38, %v2465
    %v2467 = vsel %vm2464, %v2466, %v2462
    %v2468 = vmul.f32 1.0, %v2467
    %v2469 = vtanh.pop %v2429
    %v2470 = vxor.u32 %v2430, 2147483648
    %v2471 = vmul.f32 %v2470, 1.442695
    %v2472 = vpow.pop %v2471
    %v2473 = vadd.f32 %v2472, 1.0
    %v2474 = vrcp.pop %v2473
    %v2475 = vmul.f32 %v2473, %v2474
    %v2476 = vsub.f32 1.0, %v2475
    %v2477 = vmul.f32 %v2474, %v2476
    %v2478 = vadd.f32 %v2474, %v2477
    %vm2479 = vweird.f32 %v2473
    %vm2480 = vweird.f32 %v2474
    %vm2481 = vmor %vm2479, %vm2480
    %v2482 = vsel %vm2481, %v2474, %v2478
    %v2483 = vand.u32 2147483647, %v2473
    %vm2484 = vcmp.eq.f32.partialorder %v2483, 8.507059e+37
    %v2485 = vand.u32 %v2473, 2147483648
    %v2486 = vor.u32 1.1754944e-38, %v2485
    %v2487 = vsel %vm2484, %v2486, %v2482
    %v2488 = vmul.f32 1.0, %v2487
    %v2489 = vmul.f32 %v2468, %v2336
    %v2490 = vmul.f32 %v2449, %v2469
    %v2491 = vadd.f32 %v2489, %v2490
    %v2492 = vtanh.pop %v2491
    %v2493 = vmul.f32 %v2488, %v2492
    %2494 = vst [vmem:[#allocation3 + $0x18] sm:$0xff] %v2493
    %v2495 = vld [vmem:[#allocation4 + $0x80] sm:$0xff]
    %v2496 = vld [vmem:[#allocation4 + $0x88] sm:$0xff]
    %v2497 = vld [vmem:[#allocation4 + $0x90] sm:$0xff]
    %v2498 = vld [vmem:[#allocation4 + $0x98] sm:$0xff]
    %v2500 = vsel %vm345, %v2493, 0
    %2502 = vmatpush.msra.mxu0 0.0
    %2503 = vmatpush.msra.mxu0 0.0
    %2504 = vmatpush.msra.mxu0 0.0
    %2505 = vmatpush.msra.mxu0 0.0
    %2506 = vmatpush.msra.mxu0 0.0
    %2507 = vmatpush.msra.mxu0 0.0
    %2508 = vmatpush.msra.mxu0 0.0
    %2509 = vmatpush.msra.mxu0 0.0
    %2510 = vmatpush.msra.mxu0 0.0
    %2511 = vmatpush.msra.mxu0 0.0
    %2512 = vmatpush.msra.mxu0 0.0
    %2513 = vmatpush.msra.mxu0 0.0
    %2514 = vmatpush.msra.mxu0 %v1874
    %2515 = vmatpush.msra.mxu0 %v1870
    %2516 = vmatpush.msra.mxu0 %v1866
    %2517 = vmatpush.msra.mxu0 %v1862
    %2518 = vmatmul.f32.gmra.mxu0 %v2500
    %v2519 = vpop.f32.mrf.mxu0
    %v2520 = vadd.f32 0.0, %v2519
    %2521 = vdwg.mxu0
    %2522 = vmatpush.msra.mxu0 0.0
    %2523 = vmatpush.msra.mxu0 0.0
    %2524 = vmatpush.msra.mxu0 0.0
    %2525 = vmatpush.msra.mxu0 0.0
    %2526 = vmatpush.msra.mxu0 0.0
    %2527 = vmatpush.msra.mxu0 0.0
    %2528 = vmatpush.msra.mxu0 0.0
    %2529 = vmatpush.msra.mxu0 0.0
    %2530 = vmatpush.msra.mxu0 0.0
    %2531 = vmatpush.msra.mxu0 0.0
    %2532 = vmatpush.msra.mxu0 0.0
    %2533 = vmatpush.msra.mxu0 0.0
    %2534 = vmatpush.msra.mxu0 %v1875
    %2535 = vmatpush.msra.mxu0 %v1871
    %2536 = vmatpush.msra.mxu0 %v1867
    %2537 = vmatpush.msra.mxu0 %v1863
    %2538 = vmatmul.f32.gmra.mxu0 %v2500
    %v2539 = vpop.f32.mrf.mxu0
    %v2540 = vadd.f32 0.0, %v2539
    %2541 = vdwg.mxu0
    %2542 = vmatpush.msra.mxu0 0.0
    %2543 = vmatpush.msra.mxu0 0.0
    %2544 = vmatpush.msra.mxu0 0.0
    %2545 = vmatpush.msra.mxu0 0.0
    %2546 = vmatpush.msra.mxu0 0.0
    %2547 = vmatpush.msra.mxu0 0.0
    %2548 = vmatpush.msra.mxu0 0.0
    %2549 = vmatpush.msra.mxu0 0.0
    %2550 = vmatpush.msra.mxu0 0.0
    %2551 = vmatpush.msra.mxu0 0.0
    %2552 = vmatpush.msra.mxu0 0.0
    %2553 = vmatpush.msra.mxu0 0.0
    %2554 = vmatpush.msra.mxu0 %v1876
    %2555 = vmatpush.msra.mxu0 %v1872
    %2556 = vmatpush.msra.mxu0 %v1868
    %2557 = vmatpush.msra.mxu0 %v1864
    %2558 = vmatmul.f32.gmra.mxu0 %v2500
    %v2559 = vpop.f32.mrf.mxu0
    %v2560 = vadd.f32 0.0, %v2559
    %2561 = vdwg.mxu0
    %2562 = vmatpush.msra.mxu0 0.0
    %2563 = vmatpush.msra.mxu0 0.0
    %2564 = vmatpush.msra.mxu0 0.0
    %2565 = vmatpush.msra.mxu0 0.0
    %2566 = vmatpush.msra.mxu0 0.0
    %2567 = vmatpush.msra.mxu0 0.0
    %2568 = vmatpush.msra.mxu0 0.0
    %2569 = vmatpush.msra.mxu0 0.0
    %2570 = vmatpush.msra.mxu0 0.0
    %2571 = vmatpush.msra.mxu0 0.0
    %2572 = vmatpush.msra.mxu0 0.0
    %2573 = vmatpush.msra.mxu0 0.0
    %2574 = vmatpush.msra.mxu0 %v1877
    %2575 = vmatpush.msra.mxu0 %v1873
    %2576 = vmatpush.msra.mxu0 %v1869
    %2577 = vmatpush.msra.mxu0 %v1865
    %2578 = vmatmul.f32.gmra.mxu0 %v2500
    %v2579 = vpop.f32.mrf.mxu0
    %v2580 = vadd.f32 0.0, %v2579
    %2581 = vdwg.mxu0
    %v2582 = vadd.f32 %v2495, %v2520
    %v2583 = vadd.f32 %v2496, %v2540
    %v2584 = vadd.f32 %v2497, %v2560
    %v2585 = vadd.f32 %v2498, %v2580
    %v2586 = vxor.u32 %v2582, 2147483648
    %v2587 = vmul.f32 %v2586, 1.442695
    %v2588 = vpow.pop %v2587
    %v2589 = vadd.f32 %v2588, 1.0
    %v2590 = vrcp.pop %v2589
    %v2591 = vmul.f32 %v2589, %v2590
    %v2592 = vsub.f32 1.0, %v2591
    %v2593 = vmul.f32 %v2590, %v2592
    %v2594 = vadd.f32 %v2590, %v2593
    %vm2595 = vweird.f32 %v2589
    %vm2596 = vweird.f32 %v2590
    %vm2597 = vmor %vm2595, %vm2596
    %v2598 = vsel %vm2597, %v2590, %v2594
    %v2599 = vand.u32 2147483647, %v2589
    %vm2600 = vcmp.eq.f32.partialorder %v2599, 8.507059e+37
    %v2601 = vand.u32 %v2589, 2147483648
    %v2602 = vor.u32 1.1754944e-38, %v2601
    %v2603 = vsel %vm2600, %v2602, %v2598
    %v2604 = vmul.f32 1.0, %v2603
    %v2605 = vxor.u32 %v2583, 2147483648
    %v2606 = vmul.f32 %v2605, 1.442695
    %v2607 = vpow.pop %v2606
    %v2608 = vadd.f32 %v2607, 1.0
    %v2609 = vrcp.pop %v2608
    %v2610 = vmul.f32 %v2608, %v2609
    %v2611 = vsub.f32 1.0, %v2610
    %v2612 = vmul.f32 %v2609, %v2611
    %v2613 = vadd.f32 %v2609, %v2612
    %vm2614 = vweird.f32 %v2608
    %vm2615 = vweird.f32 %v2609
    %vm2616 = vmor %vm2614, %vm2615
    %v2617 = vsel %vm2616, %v2609, %v2613
    %v2618 = vand.u32 2147483647, %v2608
    %vm2619 = vcmp.eq.f32.partialorder %v2618, 8.507059e+37
    %v2620 = vand.u32 %v2608, 2147483648
    %v2621 = vor.u32 1.1754944e-38, %v2620
    %v2622 = vsel %vm2619, %v2621, %v2617
    %v2623 = vmul.f32 1.0, %v2622
    %v2624 = vtanh.pop %v2584
    %v2625 = vxor.u32 %v2585, 2147483648
    %v2626 = vmul.f32 %v2625, 1.442695
    %v2627 = vpow.pop %v2626
    %v2628 = vadd.f32 %v2627, 1.0
    %v2629 = vrcp.pop %v2628
    %v2630 = vmul.f32 %v2628, %v2629
    %v2631 = vsub.f32 1.0, %v2630
    %v2632 = vmul.f32 %v2629, %v2631
    %v2633 = vadd.f32 %v2629, %v2632
    %vm2634 = vweird.f32 %v2628
    %vm2635 = vweird.f32 %v2629
    %vm2636 = vmor %vm2634, %vm2635
    %v2637 = vsel %vm2636, %v2629, %v2633
    %v2638 = vand.u32 2147483647, %v2628
    %vm2639 = vcmp.eq.f32.partialorder %v2638, 8.507059e+37
    %v2640 = vand.u32 %v2628, 2147483648
    %v2641 = vor.u32 1.1754944e-38, %v2640
    %v2642 = vsel %vm2639, %v2641, %v2637
    %v2643 = vmul.f32 1.0, %v2642
    %v2644 = vmul.f32 %v2623, %v2491
    %v2645 = vmul.f32 %v2604, %v2624
    %v2646 = vadd.f32 %v2644, %v2645
    %v2647 = vtanh.pop %v2646
    %v2648 = vmul.f32 %v2643, %v2647
    %2649 = vst [vmem:[#allocation3 + $0x20] sm:$0xff] %v2648
    %v2650 = vld [vmem:[#allocation4 + $0xa0] sm:$0xff]
    %v2651 = vld [vmem:[#allocation4 + $0xa8] sm:$0xff]
    %v2652 = vld [vmem:[#allocation4 + $0xb0] sm:$0xff]
    %v2653 = vld [vmem:[#allocation4 + $0xb8] sm:$0xff]
    %v2655 = vsel %vm345, %v2648, 0
    %2657 = vmatpush.msra.mxu0 0.0
    %2658 = vmatpush.msra.mxu0 0.0
    %2659 = vmatpush.msra.mxu0 0.0
    %2660 = vmatpush.msra.mxu0 0.0
    %2661 = vmatpush.msra.mxu0 0.0
    %2662 = vmatpush.msra.mxu0 0.0
    %2663 = vmatpush.msra.mxu0 0.0
    %2664 = vmatpush.msra.mxu0 0.0
    %2665 = vmatpush.msra.mxu0 0.0
    %2666 = vmatpush.msra.mxu0 0.0
    %2667 = vmatpush.msra.mxu0 0.0
    %2668 = vmatpush.msra.mxu0 0.0
    %2669 = vmatpush.msra.mxu0 %v1874
    %2670 = vmatpush.msra.mxu0 %v1870
    %2671 = vmatpush.msra.mxu0 %v1866
    %2672 = vmatpush.msra.mxu0 %v1862
    %2673 = vmatmul.f32.gmra.mxu0 %v2655
    %v2674 = vpop.f32.mrf.mxu0
    %v2675 = vadd.f32 0.0, %v2674
    %2676 = vdwg.mxu0
    %2677 = vmatpush.msra.mxu0 0.0
    %2678 = vmatpush.msra.mxu0 0.0
    %2679 = vmatpush.msra.mxu0 0.0
    %2680 = vmatpush.msra.mxu0 0.0
    %2681 = vmatpush.msra.mxu0 0.0
    %2682 = vmatpush.msra.mxu0 0.0
    %2683 = vmatpush.msra.mxu0 0.0
    %2684 = vmatpush.msra.mxu0 0.0
    %2685 = vmatpush.msra.mxu0 0.0
    %2686 = vmatpush.msra.mxu0 0.0
    %2687 = vmatpush.msra.mxu0 0.0
    %2688 = vmatpush.msra.mxu0 0.0
    %2689 = vmatpush.msra.mxu0 %v1875
    %2690 = vmatpush.msra.mxu0 %v1871
    %2691 = vmatpush.msra.mxu0 %v1867
    %2692 = vmatpush.msra.mxu0 %v1863
    %2693 = vmatmul.f32.gmra.mxu0 %v2655
    %v2694 = vpop.f32.mrf.mxu0
    %v2695 = vadd.f32 0.0, %v2694
    %2696 = vdwg.mxu0
    %2697 = vmatpush.msra.mxu0 0.0
    %2698 = vmatpush.msra.mxu0 0.0
    %2699 = vmatpush.msra.mxu0 0.0
    %2700 = vmatpush.msra.mxu0 0.0
    %2701 = vmatpush.msra.mxu0 0.0
    %2702 = vmatpush.msra.mxu0 0.0
    %2703 = vmatpush.msra.mxu0 0.0
    %2704 = vmatpush.msra.mxu0 0.0
    %2705 = vmatpush.msra.mxu0 0.0
    %2706 = vmatpush.msra.mxu0 0.0
    %2707 = vmatpush.msra.mxu0 0.0
    %2708 = vmatpush.msra.mxu0 0.0
    %2709 = vmatpush.msra.mxu0 %v1876
    %2710 = vmatpush.msra.mxu0 %v1872
    %2711 = vmatpush.msra.mxu0 %v1868
    %2712 = vmatpush.msra.mxu0 %v1864
    %2713 = vmatmul.f32.gmra.mxu0 %v2655
    %v2714 = vpop.f32.mrf.mxu0
    %v2715 = vadd.f32 0.0, %v2714
    %2716 = vdwg.mxu0
    %2717 = vmatpush.msra.mxu0 0.0
    %2718 = vmatpush.msra.mxu0 0.0
    %2719 = vmatpush.msra.mxu0 0.0
    %2720 = vmatpush.msra.mxu0 0.0
    %2721 = vmatpush.msra.mxu0 0.0
    %2722 = vmatpush.msra.mxu0 0.0
    %2723 = vmatpush.msra.mxu0 0.0
    %2724 = vmatpush.msra.mxu0 0.0
    %2725 = vmatpush.msra.mxu0 0.0
    %2726 = vmatpush.msra.mxu0 0.0
    %2727 = vmatpush.msra.mxu0 0.0
    %2728 = vmatpush.msra.mxu0 0.0
    %2729 = vmatpush.msra.mxu0 %v1877
    %2730 = vmatpush.msra.mxu0 %v1873
    %2731 = vmatpush.msra.mxu0 %v1869
    %2732 = vmatpush.msra.mxu0 %v1865
    %2733 = vmatmul.f32.gmra.mxu0 %v2655
    %v2734 = vpop.f32.mrf.mxu0
    %v2735 = vadd.f32 0.0, %v2734
    %2736 = vdwg.mxu0
    %v2737 = vadd.f32 %v2650, %v2675
    %v2738 = vadd.f32 %v2651, %v2695
    %v2739 = vadd.f32 %v2652, %v2715
    %v2740 = vadd.f32 %v2653, %v2735
    %v2741 = vxor.u32 %v2737, 2147483648
    %v2742 = vmul.f32 %v2741, 1.442695
    %v2743 = vpow.pop %v2742
    %v2744 = vadd.f32 %v2743, 1.0
    %v2745 = vrcp.pop %v2744
    %v2746 = vmul.f32 %v2744, %v2745
    %v2747 = vsub.f32 1.0, %v2746
    %v2748 = vmul.f32 %v2745, %v2747
    %v2749 = vadd.f32 %v2745, %v2748
    %vm2750 = vweird.f32 %v2744
    %vm2751 = vweird.f32 %v2745
    %vm2752 = vmor %vm2750, %vm2751
    %v2753 = vsel %vm2752, %v2745, %v2749
    %v2754 = vand.u32 2147483647, %v2744
    %vm2755 = vcmp.eq.f32.partialorder %v2754, 8.507059e+37
    %v2756 = vand.u32 %v2744, 2147483648
    %v2757 = vor.u32 1.1754944e-38, %v2756
    %v2758 = vsel %vm2755, %v2757, %v2753
    %v2759 = vmul.f32 1.0, %v2758
    %v2760 = vxor.u32 %v2738, 2147483648
    %v2761 = vmul.f32 %v2760, 1.442695
    %v2762 = vpow.pop %v2761
    %v2763 = vadd.f32 %v2762, 1.0
    %v2764 = vrcp.pop %v2763
    %v2765 = vmul.f32 %v2763, %v2764
    %v2766 = vsub.f32 1.0, %v2765
    %v2767 = vmul.f32 %v2764, %v2766
    %v2768 = vadd.f32 %v2764, %v2767
    %vm2769 = vweird.f32 %v2763
    %vm2770 = vweird.f32 %v2764
    %vm2771 = vmor %vm2769, %vm2770
    %v2772 = vsel %vm2771, %v2764, %v2768
    %v2773 = vand.u32 2147483647, %v2763
    %vm2774 = vcmp.eq.f32.partialorder %v2773, 8.507059e+37
    %v2775 = vand.u32 %v2763, 2147483648
    %v2776 = vor.u32 1.1754944e-38, %v2775
    %v2777 = vsel %vm2774, %v2776, %v2772
    %v2778 = vmul.f32 1.0, %v2777
    %v2779 = vtanh.pop %v2739
    %v2780 = vxor.u32 %v2740, 2147483648
    %v2781 = vmul.f32 %v2780, 1.442695
    %v2782 = vpow.pop %v2781
    %v2783 = vadd.f32 %v2782, 1.0
    %v2784 = vrcp.pop %v2783
    %v2785 = vmul.f32 %v2783, %v2784
    %v2786 = vsub.f32 1.0, %v2785
    %v2787 = vmul.f32 %v2784, %v2786
    %v2788 = vadd.f32 %v2784, %v2787
    %vm2789 = vweird.f32 %v2783
    %vm2790 = vweird.f32 %v2784
    %vm2791 = vmor %vm2789, %vm2790
    %v2792 = vsel %vm2791, %v2784, %v2788
    %v2793 = vand.u32 2147483647, %v2783
    %vm2794 = vcmp.eq.f32.partialorder %v2793, 8.507059e+37
    %v2795 = vand.u32 %v2783, 2147483648
    %v2796 = vor.u32 1.1754944e-38, %v2795
    %v2797 = vsel %vm2794, %v2796, %v2792
    %v2798 = vmul.f32 1.0, %v2797
    %v2799 = vmul.f32 %v2778, %v2646
    %v2800 = vmul.f32 %v2759, %v2779
    %v2801 = vadd.f32 %v2799, %v2800
    %v2802 = vtanh.pop %v2801
    %v2803 = vmul.f32 %v2798, %v2802
    %2804 = vst [vmem:[#allocation3 + $0x28] sm:$0xff] %v2803
    %v2805 = vld [vmem:[#allocation4 + $0xc0] sm:$0xff]
    %v2806 = vld [vmem:[#allocation4 + $0xc8] sm:$0xff]
    %v2807 = vld [vmem:[#allocation4 + $0xd0] sm:$0xff]
    %v2808 = vld [vmem:[#allocation4 + $0xd8] sm:$0xff]
    %v2810 = vsel %vm345, %v2803, 0
    %2812 = vmatpush.msra.mxu0 0.0
    %2813 = vmatpush.msra.mxu0 0.0
    %2814 = vmatpush.msra.mxu0 0.0
    %2815 = vmatpush.msra.mxu0 0.0
    %2816 = vmatpush.msra.mxu0 0.0
    %2817 = vmatpush.msra.mxu0 0.0
    %2818 = vmatpush.msra.mxu0 0.0
    %2819 = vmatpush.msra.mxu0 0.0
    %2820 = vmatpush.msra.mxu0 0.0
    %2821 = vmatpush.msra.mxu0 0.0
    %2822 = vmatpush.msra.mxu0 0.0
    %2823 = vmatpush.msra.mxu0 0.0
    %2824 = vmatpush.msra.mxu0 %v1874
    %2825 = vmatpush.msra.mxu0 %v1870
    %2826 = vmatpush.msra.mxu0 %v1866
    %2827 = vmatpush.msra.mxu0 %v1862
    %2828 = vmatmul.f32.gmra.mxu0 %v2810
    %v2829 = vpop.f32.mrf.mxu0
    %v2830 = vadd.f32 0.0, %v2829
    %2831 = vdwg.mxu0
    %2832 = vmatpush.msra.mxu0 0.0
    %2833 = vmatpush.msra.mxu0 0.0
    %2834 = vmatpush.msra.mxu0 0.0
    %2835 = vmatpush.msra.mxu0 0.0
    %2836 = vmatpush.msra.mxu0 0.0
    %2837 = vmatpush.msra.mxu0 0.0
    %2838 = vmatpush.msra.mxu0 0.0
    %2839 = vmatpush.msra.mxu0 0.0
    %2840 = vmatpush.msra.mxu0 0.0
    %2841 = vmatpush.msra.mxu0 0.0
    %2842 = vmatpush.msra.mxu0 0.0
    %2843 = vmatpush.msra.mxu0 0.0
    %2844 = vmatpush.msra.mxu0 %v1875
    %2845 = vmatpush.msra.mxu0 %v1871
    %2846 = vmatpush.msra.mxu0 %v1867
    %2847 = vmatpush.msra.mxu0 %v1863
    %2848 = vmatmul.f32.gmra.mxu0 %v2810
    %v2849 = vpop.f32.mrf.mxu0
    %v2850 = vadd.f32 0.0, %v2849
    %2851 = vdwg.mxu0
    %2852 = vmatpush.msra.mxu0 0.0
    %2853 = vmatpush.msra.mxu0 0.0
    %2854 = vmatpush.msra.mxu0 0.0
    %2855 = vmatpush.msra.mxu0 0.0
    %2856 = vmatpush.msra.mxu0 0.0
    %2857 = vmatpush.msra.mxu0 0.0
    %2858 = vmatpush.msra.mxu0 0.0
    %2859 = vmatpush.msra.mxu0 0.0
    %2860 = vmatpush.msra.mxu0 0.0
    %2861 = vmatpush.msra.mxu0 0.0
    %2862 = vmatpush.msra.mxu0 0.0
    %2863 = vmatpush.msra.mxu0 0.0
    %2864 = vmatpush.msra.mxu0 %v1876
    %2865 = vmatpush.msra.mxu0 %v1872
    %2866 = vmatpush.msra.mxu0 %v1868
    %2867 = vmatpush.msra.mxu0 %v1864
    %2868 = vmatmul.f32.gmra.mxu0 %v2810
    %v2869 = vpop.f32.mrf.mxu0
    %v2870 = vadd.f32 0.0, %v2869
    %2871 = vdwg.mxu0
    %2872 = vmatpush.msra.mxu0 0.0
    %2873 = vmatpush.msra.mxu0 0.0
    %2874 = vmatpush.msra.mxu0 0.0
    %2875 = vmatpush.msra.mxu0 0.0
    %2876 = vmatpush.msra.mxu0 0.0
    %2877 = vmatpush.msra.mxu0 0.0
    %2878 = vmatpush.msra.mxu0 0.0
    %2879 = vmatpush.msra.mxu0 0.0
    %2880 = vmatpush.msra.mxu0 0.0
    %2881 = vmatpush.msra.mxu0 0.0
    %2882 = vmatpush.msra.mxu0 0.0
    %2883 = vmatpush.msra.mxu0 0.0
    %2884 = vmatpush.msra.mxu0 %v1877
    %2885 = vmatpush.msra.mxu0 %v1873
    %2886 = vmatpush.msra.mxu0 %v1869
    %2887 = vmatpush.msra.mxu0 %v1865
    %2888 = vmatmul.f32.gmra.mxu0 %v2810
    %v2889 = vpop.f32.mrf.mxu0
    %v2890 = vadd.f32 0.0, %v2889
    %2891 = vdwg.mxu0
    %v2892 = vadd.f32 %v2805, %v2830
    %v2893 = vadd.f32 %v2806, %v2850
    %v2894 = vadd.f32 %v2807, %v2870
    %v2895 = vadd.f32 %v2808, %v2890
    %v2896 = vxor.u32 %v2892, 2147483648
    %v2897 = vmul.f32 %v2896, 1.442695
    %v2898 = vpow.pop %v2897
    %v2899 = vadd.f32 %v2898, 1.0
    %v2900 = vrcp.pop %v2899
    %v2901 = vmul.f32 %v2899, %v2900
    %v2902 = vsub.f32 1.0, %v2901
    %v2903 = vmul.f32 %v2900, %v2902
    %v2904 = vadd.f32 %v2900, %v2903
    %vm2905 = vweird.f32 %v2899
    %vm2906 = vweird.f32 %v2900
    %vm2907 = vmor %vm2905, %vm2906
    %v2908 = vsel %vm2907, %v2900, %v2904
    %v2909 = vand.u32 2147483647, %v2899
    %vm2910 = vcmp.eq.f32.partialorder %v2909, 8.507059e+37
    %v2911 = vand.u32 %v2899, 2147483648
    %v2912 = vor.u32 1.1754944e-38, %v2911
    %v2913 = vsel %vm2910, %v2912, %v2908
    %v2914 = vmul.f32 1.0, %v2913
    %v2915 = vxor.u32 %v2893, 2147483648
    %v2916 = vmul.f32 %v2915, 1.442695
    %v2917 = vpow.pop %v2916
    %v2918 = vadd.f32 %v2917, 1.0
    %v2919 = vrcp.pop %v2918
    %v2920 = vmul.f32 %v2918, %v2919
    %v2921 = vsub.f32 1.0, %v2920
    %v2922 = vmul.f32 %v2919, %v2921
    %v2923 = vadd.f32 %v2919, %v2922
    %vm2924 = vweird.f32 %v2918
    %vm2925 = vweird.f32 %v2919
    %vm2926 = vmor %vm2924, %vm2925
    %v2927 = vsel %vm2926, %v2919, %v2923
    %v2928 = vand.u32 2147483647, %v2918
    %vm2929 = vcmp.eq.f32.partialorder %v2928, 8.507059e+37
    %v2930 = vand.u32 %v2918, 2147483648
    %v2931 = vor.u32 1.1754944e-38, %v2930
    %v2932 = vsel %vm2929, %v2931, %v2927
    %v2933 = vmul.f32 1.0, %v2932
    %v2934 = vtanh.pop %v2894
    %v2935 = vxor.u32 %v2895, 2147483648
    %v2936 = vmul.f32 %v2935, 1.442695
    %v2937 = vpow.pop %v2936
    %v2938 = vadd.f32 %v2937, 1.0
    %v2939 = vrcp.pop %v2938
    %v2940 = vmul.f32 %v2938, %v2939
    %v2941 = vsub.f32 1.0, %v2940
    %v2942 = vmul.f32 %v2939, %v2941
    %v2943 = vadd.f32 %v2939, %v2942
    %vm2944 = vweird.f32 %v2938
    %vm2945 = vweird.f32 %v2939
    %vm2946 = vmor %vm2944, %vm2945
    %v2947 = vsel %vm2946, %v2939, %v2943
    %v2948 = vand.u32 2147483647, %v2938
    %vm2949 = vcmp.eq.f32.partialorder %v2948, 8.507059e+37
    %v2950 = vand.u32 %v2938, 2147483648
    %v2951 = vor.u32 1.1754944e-38, %v2950
    %v2952 = vsel %vm2949, %v2951, %v2947
    %v2953 = vmul.f32 1.0, %v2952
    %v2954 = vmul.f32 %v2933, %v2801
    %v2955 = vmul.f32 %v2914, %v2934
    %v2956 = vadd.f32 %v2954, %v2955
    %v2957 = vtanh.pop %v2956
    %v2958 = vmul.f32 %v2953, %v2957
    %2959 = vst [vmem:[#allocation3 + $0x30] sm:$0xff] %v2958
    %v2960 = vld [vmem:[#allocation4 + $0xe0] sm:$0xff]
    %v2961 = vld [vmem:[#allocation4 + $0xe8] sm:$0xff]
    %v2962 = vld [vmem:[#allocation4 + $0xf0] sm:$0xff]
    %v2963 = vld [vmem:[#allocation4 + $0xf8] sm:$0xff]
    %v2965 = vsel %vm345, %v2958, 0
    %2967 = vmatpush.msra.mxu0 0.0
    %2968 = vmatpush.msra.mxu0 0.0
    %2969 = vmatpush.msra.mxu0 0.0
    %2970 = vmatpush.msra.mxu0 0.0
    %2971 = vmatpush.msra.mxu0 0.0
    %2972 = vmatpush.msra.mxu0 0.0
    %2973 = vmatpush.msra.mxu0 0.0
    %2974 = vmatpush.msra.mxu0 0.0
    %2975 = vmatpush.msra.mxu0 0.0
    %2976 = vmatpush.msra.mxu0 0.0
    %2977 = vmatpush.msra.mxu0 0.0
    %2978 = vmatpush.msra.mxu0 0.0
    %2979 = vmatpush.msra.mxu0 %v1874
    %2980 = vmatpush.msra.mxu0 %v1870
    %2981 = vmatpush.msra.mxu0 %v1866
    %2982 = vmatpush.msra.mxu0 %v1862
    %2983 = vmatmul.f32.gmra.mxu0 %v2965
    %v2984 = vpop.f32.mrf.mxu0
    %v2985 = vadd.f32 0.0, %v2984
    %2986 = vdwg.mxu0
    %2987 = vmatpush.msra.mxu0 0.0
    %2988 = vmatpush.msra.mxu0 0.0
    %2989 = vmatpush.msra.mxu0 0.0
    %2990 = vmatpush.msra.mxu0 0.0
    %2991 = vmatpush.msra.mxu0 0.0
    %2992 = vmatpush.msra.mxu0 0.0
    %2993 = vmatpush.msra.mxu0 0.0
    %2994 = vmatpush.msra.mxu0 0.0
    %2995 = vmatpush.msra.mxu0 0.0
    %2996 = vmatpush.msra.mxu0 0.0
    %2997 = vmatpush.msra.mxu0 0.0
    %2998 = vmatpush.msra.mxu0 0.0
    %2999 = vmatpush.msra.mxu0 %v1875
    %3000 = vmatpush.msra.mxu0 %v1871
    %3001 = vmatpush.msra.mxu0 %v1867
    %3002 = vmatpush.msra.mxu0 %v1863
    %3003 = vmatmul.f32.gmra.mxu0 %v2965
    %v3004 = vpop.f32.mrf.mxu0
    %v3005 = vadd.f32 0.0, %v3004
    %3006 = vdwg.mxu0
    %3007 = vmatpush.msra.mxu0 0.0
    %3008 = vmatpush.msra.mxu0 0.0
    %3009 = vmatpush.msra.mxu0 0.0
    %3010 = vmatpush.msra.mxu0 0.0
    %3011 = vmatpush.msra.mxu0 0.0
    %3012 = vmatpush.msra.mxu0 0.0
    %3013 = vmatpush.msra.mxu0 0.0
    %3014 = vmatpush.msra.mxu0 0.0
    %3015 = vmatpush.msra.mxu0 0.0
    %3016 = vmatpush.msra.mxu0 0.0
    %3017 = vmatpush.msra.mxu0 0.0
    %3018 = vmatpush.msra.mxu0 0.0
    %3019 = vmatpush.msra.mxu0 %v1876
    %3020 = vmatpush.msra.mxu0 %v1872
    %3021 = vmatpush.msra.mxu0 %v1868
    %3022 = vmatpush.msra.mxu0 %v1864
    %3023 = vmatmul.f32.gmra.mxu0 %v2965
    %v3024 = vpop.f32.mrf.mxu0
    %v3025 = vadd.f32 0.0, %v3024
    %3026 = vdwg.mxu0
    %3027 = vmatpush.msra.mxu0 0.0
    %3028 = vmatpush.msra.mxu0 0.0
    %3029 = vmatpush.msra.mxu0 0.0
    %3030 = vmatpush.msra.mxu0 0.0
    %3031 = vmatpush.msra.mxu0 0.0
    %3032 = vmatpush.msra.mxu0 0.0
    %3033 = vmatpush.msra.mxu0 0.0
    %3034 = vmatpush.msra.mxu0 0.0
    %3035 = vmatpush.msra.mxu0 0.0
    %3036 = vmatpush.msra.mxu0 0.0
    %3037 = vmatpush.msra.mxu0 0.0
    %3038 = vmatpush.msra.mxu0 0.0
    %3039 = vmatpush.msra.mxu0 %v1877
    %3040 = vmatpush.msra.mxu0 %v1873
    %3041 = vmatpush.msra.mxu0 %v1869
    %3042 = vmatpush.msra.mxu0 %v1865
    %3043 = vmatmul.f32.gmra.mxu0 %v2965
    %v3044 = vpop.f32.mrf.mxu0
    %v3045 = vadd.f32 0.0, %v3044
    %3046 = vdwg.mxu0
    %v3047 = vadd.f32 %v2960, %v2985
    %v3048 = vadd.f32 %v2961, %v3005
    %v3049 = vadd.f32 %v2962, %v3025
    %v3050 = vadd.f32 %v2963, %v3045
    %v3051 = vxor.u32 %v3047, 2147483648
    %v3052 = vmul.f32 %v3051, 1.442695
    %v3053 = vpow.pop %v3052
    %v3054 = vadd.f32 %v3053, 1.0
    %v3055 = vrcp.pop %v3054
    %v3056 = vmul.f32 %v3054, %v3055
    %v3057 = vsub.f32 1.0, %v3056
    %v3058 = vmul.f32 %v3055, %v3057
    %v3059 = vadd.f32 %v3055, %v3058
    %vm3060 = vweird.f32 %v3054
    %vm3061 = vweird.f32 %v3055
    %vm3062 = vmor %vm3060, %vm3061
    %v3063 = vsel %vm3062, %v3055, %v3059
    %v3064 = vand.u32 2147483647, %v3054
    %vm3065 = vcmp.eq.f32.partialorder %v3064, 8.507059e+37
    %v3066 = vand.u32 %v3054, 2147483648
    %v3067 = vor.u32 1.1754944e-38, %v3066
    %v3068 = vsel %vm3065, %v3067, %v3063
    %v3069 = vmul.f32 1.0, %v3068
    %v3070 = vxor.u32 %v3048, 2147483648
    %v3071 = vmul.f32 %v3070, 1.442695
    %v3072 = vpow.pop %v3071
    %v3073 = vadd.f32 %v3072, 1.0
    %v3074 = vrcp.pop %v3073
    %v3075 = vmul.f32 %v3073, %v3074
    %v3076 = vsub.f32 1.0, %v3075
    %v3077 = vmul.f32 %v3074, %v3076
    %v3078 = vadd.f32 %v3074, %v3077
    %vm3079 = vweird.f32 %v3073
    %vm3080 = vweird.f32 %v3074
    %vm3081 = vmor %vm3079, %vm3080
    %v3082 = vsel %vm3081, %v3074, %v3078
    %v3083 = vand.u32 2147483647, %v3073
    %vm3084 = vcmp.eq.f32.partialorder %v3083, 8.507059e+37
    %v3085 = vand.u32 %v3073, 2147483648
    %v3086 = vor.u32 1.1754944e-38, %v3085
    %v3087 = vsel %vm3084, %v3086, %v3082
    %v3088 = vmul.f32 1.0, %v3087
    %v3089 = vtanh.pop %v3049
    %v3090 = vxor.u32 %v3050, 2147483648
    %v3091 = vmul.f32 %v3090, 1.442695
    %v3092 = vpow.pop %v3091
    %v3093 = vadd.f32 %v3092, 1.0
    %v3094 = vrcp.pop %v3093
    %v3095 = vmul.f32 %v3093, %v3094
    %v3096 = vsub.f32 1.0, %v3095
    %v3097 = vmul.f32 %v3094, %v3096
    %v3098 = vadd.f32 %v3094, %v3097
    %vm3099 = vweird.f32 %v3093
    %vm3100 = vweird.f32 %v3094
    %vm3101 = vmor %vm3099, %vm3100
    %v3102 = vsel %vm3101, %v3094, %v3098
    %v3103 = vand.u32 2147483647, %v3093
    %vm3104 = vcmp.eq.f32.partialorder %v3103, 8.507059e+37
    %v3105 = vand.u32 %v3093, 2147483648
    %v3106 = vor.u32 1.1754944e-38, %v3105
    %v3107 = vsel %vm3104, %v3106, %v3102
    %v3108 = vmul.f32 1.0, %v3107
    %v3109 = vmul.f32 %v3088, %v2956
    %v3110 = vmul.f32 %v3069, %v3089
    %v3111 = vadd.f32 %v3109, %v3110
    %v3112 = vtanh.pop %v3111
    %v3113 = vmul.f32 %v3108, %v3112
    %3114 = vst [vmem:[#allocation3 + $0x38] sm:$0xff] %v3113
    %v3115 = vld [vmem:[#allocation3] sm:$0xff]
    %v3116 = vld [vmem:[#allocation3 + $0x8] sm:$0xff]
    %v3117 = vld [vmem:[#allocation3 + $0x10] sm:$0xff]
    %v3118 = vld [vmem:[#allocation3 + $0x18] sm:$0xff]
    %v3119 = vld [vmem:[#allocation3 + $0x20] sm:$0xff]
    %v3120 = vld [vmem:[#allocation3 + $0x28] sm:$0xff]
    %v3121 = vld [vmem:[#allocation3 + $0x30] sm:$0xff]
    %v3122 = vld [vmem:[#allocation3 + $0x38] sm:$0xff]
    %v3123 = vld [vmem:[#allocation7] sm:$0xff]
    %v3124 = vld [vmem:[#allocation7 + $0x8] sm:$0xff]
    %v3125 = vld [vmem:[#allocation7 + $0x10] sm:$0xff]
    %v3126 = vld [vmem:[#allocation7 + $0x18] sm:$0xff]
    %v3127 = vld [vmem:[#allocation7 + $0x20] sm:$0xff]
    %v3128 = vld [vmem:[#allocation7 + $0x28] sm:$0xff]
    %v3129 = vld [vmem:[#allocation7 + $0x30] sm:$0xff]
    %v3130 = vld [vmem:[#allocation7 + $0x38] sm:$0xff]
    %v3131 = vld [vmem:[#allocation7 + $0x40] sm:$0xff]
    %v3132 = vld [vmem:[#allocation7 + $0x48] sm:$0xff]
    %v3133 = vld [vmem:[#allocation7 + $0x50] sm:$0xff]
    %v3134 = vld [vmem:[#allocation7 + $0x58] sm:$0xff]
    %v3135 = vld [vmem:[#allocation7 + $0x60] sm:$0xff]
    %v3136 = vld [vmem:[#allocation7 + $0x68] sm:$0xff]
    %v3137 = vld [vmem:[#allocation7 + $0x70] sm:$0xff]
    %v3138 = vld [vmem:[#allocation7 + $0x78] sm:$0xff]
    %v3139 = vld [vmem:[#allocation7 + $0x80] sm:$0x1]
    %v3140 = vperm.slane %v3139, 0
    %3141 = vmatpush.msra.mxu0 %v3138
    %3142 = vmatpush.msra.mxu0 %v3137
    %3143 = vmatpush.msra.mxu0 %v3136
    %3144 = vmatpush.msra.mxu0 %v3135
    %3145 = vmatpush.msra.mxu0 %v3134
    %3146 = vmatpush.msra.mxu0 %v3133
    %3147 = vmatpush.msra.mxu0 %v3132
    %3148 = vmatpush.msra.mxu0 %v3131
    %3149 = vmatpush.msra.mxu0 %v3130
    %3150 = vmatpush.msra.mxu0 %v3129
    %3151 = vmatpush.msra.mxu0 %v3128
    %3152 = vmatpush.msra.mxu0 %v3127
    %3153 = vmatpush.msra.mxu0 %v3126
    %3154 = vmatpush.msra.mxu0 %v3125
    %3155 = vmatpush.msra.mxu0 %v3124
    %3156 = vmatpush.msra.mxu0 %v3123
    %3157 = vmatmul.f32.gmra.mxu0 %v3115
    %v3158 = vpop.f32.mrf.mxu0
    %v3159 = vadd.f32 %v3140, %v3158
    %3160 = vmatmul.f32.gmra.mxu0 %v3116
    %v3161 = vpop.f32.mrf.mxu0
    %v3162 = vadd.f32 %v3140, %v3161
    %3163 = vmatmul.f32.gmra.mxu0 %v3117
    %v3164 = vpop.f32.mrf.mxu0
    %v3165 = vadd.f32 %v3140, %v3164
    %3166 = vmatmul.f32.gmra.mxu0 %v3118
    %v3167 = vpop.f32.mrf.mxu0
    %v3168 = vadd.f32 %v3140, %v3167
    %3169 = vmatmul.f32.gmra.mxu0 %v3119
    %v3170 = vpop.f32.mrf.mxu0
    %v3171 = vadd.f32 %v3140, %v3170
    %3172 = vmatmul.f32.gmra.mxu0 %v3120
    %v3173 = vpop.f32.mrf.mxu0
    %v3174 = vadd.f32 %v3140, %v3173
    %3175 = vmatmul.f32.gmra.mxu0 %v3121
    %v3176 = vpop.f32.mrf.mxu0
    %v3177 = vadd.f32 %v3140, %v3176
    %3178 = vmatmul.f32.gmra.mxu0 %v3122
    %v3179 = vpop.f32.mrf.mxu0
    %v3180 = vadd.f32 %v3140, %v3179
    %3181 = vdwg.mxu0
    %3182 = vst [vmem:[%s3] sm:$0xff] %v3159
    %3183 = vst [vmem:[%s3 + $0x8] sm:$0xff] %v3162
    %3184 = vst [vmem:[%s3 + $0x10] sm:$0xff] %v3165
    %3185 = vst [vmem:[%s3 + $0x18] sm:$0xff] %v3168
    %3186 = vst [vmem:[%s3 + $0x20] sm:$0xff] %v3171
    %3187 = vst [vmem:[%s3 + $0x28] sm:$0xff] %v3174
    %3188 = vst [vmem:[%s3 + $0x30] sm:$0xff] %v3177
    %3189 = vst [vmem:[%s3 + $0x38] sm:$0xff] %v3180
    // Predicated region
    $region22: #{deep_regression_lstm_forward.1} parent=1 // pred_check
      _
    $region23: #{deep_regression_lstm_forward.1} parent=1 // pred_check_branch
      %3191 = sbr.rel (0) target = $region25
    $region24: #{deep_regression_lstm_forward.1} parent=1 // pred_region
      _
    $region25: #{deep_regression_lstm_forward.1} parent=1 // pred_fallthru
      _
    // Predicated region
    $region26: #{deep_regression_lstm_forward.1} parent=1 // pred_check
      _
    $region27: #{deep_regression_lstm_forward.1} parent=1 // pred_check_branch
      %3193 = sbr.rel (0) target = $region29
    $region28: #{deep_regression_lstm_forward.1} parent=1 // pred_region
      _
    $region29: #{deep_regression_lstm_forward.1} parent=1 // pred_fallthru
      _
    %3194 = vsyncpa [#allocation6], 1
    %3195 = vsyncpa [#allocation8], 1

</llo_original>
